<compile_context>
chip_gen: v5e
topology: v5e:2x2
jax: 0.10.0
libtpu: 0.0.40
codegen_flags: <defaults>
</compile_context>

<pallas_src>
import math
import numpy as np
import jax
import jax.numpy as jnp
from jax.experimental import pallas as pl
from jax.experimental.pallas import tpu as pltpu

_HIGHEST = jax.lax.Precision.HIGHEST


def _dot_nt(a, b):
    """a @ b.T on the MXU without materializing a transpose (contract last dims)."""
    return jax.lax.dot_general(a, b, (((1,), (1,)), ((), ())),
                               preferred_element_type=jnp.float32)


# --------------------------------------------------------------------------------------
# Kernel 1: fused behavior-aware Wasserstein attention.
# Grid = (B,) ; one step handles one batch row with all H heads folded in.
# --------------------------------------------------------------------------------------
def fused_behavior_attention(A_m, B_m, Aq2, Bk2, v1, v2,
                             cdiff, bbcq, bbck, oh, oht,
                             *, num_heads, d_k, n_b):
    B, N, D = A_m.shape
    H, dk, nb = num_heads, d_k, n_b
    assert H * dk == D

    def kernel(a_ref, bm_ref, aq_ref, bk_ref, v1_ref, v2_ref,
               cd_ref, cq_ref, ck_ref, oh_ref, oht_ref,
               mean_ref, cov_ref, probs_ref):
        f32 = jnp.float32
        ohm = oh_ref[...]                       # (N, nb)  one-hot(b_seq) as rows
        ohT = oht_ref[...]                      # (nb, N)  one-hot(b_seq) as columns
        A_all = a_ref[...]
        Bm_all = bm_ref[...]
        Aq_all = aq_ref[...]
        Bk_all = bk_ref[...]
        v1_all = v1_ref[...]
        v2_all = v2_ref[...]
        cd_all = cd_ref[...]                    # (H, nb, nb*dk)
        cq_all = cq_ref[...]
        ck_all = ck_ref[...]

        ones_col = jnp.ones((N, 1), f32)
        neg_inv_sqrt_dk = -1.0 / math.sqrt(dk)

        def select_rows(table):
            # (nb, C) -> (N, C): row b_seq[i] for each query/key position i.
            out = ohm[:, 0:1] * table[0:1, :]
            for a in range(1, nb):
                out = out + ohm[:, a:a + 1] * table[a:a + 1, :]
            return out

        mean_parts = []
        cov_parts = []
        for hh in range(H):
            sl = slice(hh * dk, (hh + 1) * dk)
            A_h = A_all[:, sl]                  # q1 + Wq2(p_m)            (N, dk)
            B_h = Bm_all[:, sl]                 # k1 + Wk2(p_m)            (N, dk)
            Aq_h = Aq_all[:, sl]                # q2 + p_c                 (N, dk)
            Bk_h = Bk_all[:, sl]                # k2 + p_c                 (N, dk)
            v1_h = v1_all[:, sl]
            v2_h = v2_all[:, sl]

            # In-kernel behavior-pair gather (only n_b^2 distinct rows exist).
            cg = select_rows(cd_all[hh])        # (Wq1-Wk1)(bb_m)[b_seq[i], b, :]   (N, nb*dk)
            cq = select_rows(cq_all[hh])        # bb_c[b_seq[i], b, :]              (N, nb*dk)
            ck = select_rows(ck_all[hh])        # bb_c[a, b_seq[j], :]              (N, nb*dk)

            # Mean part:  d_mean[i,j] = || (A[i] + Cdiff[bi,bj]) - B[j] ||^2
            b2_col = jnp.sum(B_h * B_h, axis=-1, keepdims=True)                 # (N, 1)
            Ym = jnp.concatenate([-2.0 * B_h, b2_col], axis=-1)                 # (N, dk+1)

            # Cov part, key side: fKc[i,j] = Bk2[j] + bb_c[bi, bj]  (per query-behavior a).
            Yc = []
            for a in range(nb):
                Kc_a = Bk_h + ck[:, a * dk:(a + 1) * dk]
                sqK_a = jnp.sqrt(jnp.maximum(Kc_a, 1e-24))
                sumK_a = jnp.sum(Kc_a, axis=-1, keepdims=True)
                Yc.append((jnp.concatenate([-2.0 * sqK_a, sumK_a], axis=-1),    # (N, dk+1)
                           ohm[:, a:a + 1]))                                    # row mask (N, 1)

            dist = jnp.zeros((N, N), f32)
            for b in range(nb):
                colmask = ohT[b:b + 1, :]                                       # (1, N)
                G_b = A_h + cg[:, b * dk:(b + 1) * dk]
                Qc_b = Aq_h + cq[:, b * dk:(b + 1) * dk]
                sqQ_b = jnp.sqrt(jnp.maximum(Qc_b, 1e-24))
                qvec = jnp.sum(G_b * G_b + Qc_b, axis=-1, keepdims=True)        # (N, 1)
                Xm = jnp.concatenate([G_b, ones_col], axis=-1)                  # (N, dk+1)
                Xc = jnp.concatenate([sqQ_b, ones_col], axis=-1)                # (N, dk+1)
                # |G|^2 + sum(Qc) - 2 G.B + |B|^2
                acc_b = qvec + _dot_nt(Xm, Ym)
                for a in range(nb):
                    Yc_a, rowmask = Yc[a]
                    # sum(Kc) - 2 sqrt(Qc).sqrt(Kc), valid only where b_seq[i] == a
                    acc_b = acc_b + rowmask * _dot_nt(Xc, Yc_a)
                dist = dist + colmask * acc_b

            scores = dist * neg_inv_sqrt_dk
            m = jnp.max(scores, axis=-1, keepdims=True)
            e = jnp.exp(scores - m)
            s = jnp.sum(e, axis=-1, keepdims=True)
            r = pl.reciprocal(s, approx=True)           # EUP reciprocal (free slot)
            r = r * (2.0 - s * r)                       # one Newton step -> full precision
            probs = e * r

            probs_ref[hh, :, :] = probs
            mean_parts.append(jnp.dot(probs, v1_h, preferred_element_type=f32))
            cov_parts.append(jnp.dot(probs * probs, v2_h, preferred_element_type=f32))

        # Lane-dense (N, D) stores, already in the fused (B, N, H*dk) layout.
        mean_ref[...] = jnp.concatenate(mean_parts, axis=-1)
        cov_ref[...] = jnp.concatenate(cov_parts, axis=-1)

    seq_spec = pl.BlockSpec((None, N, D), lambda b: (b, 0, 0))
    tbl_spec = pl.BlockSpec((None, H, nb, nb * dk), lambda b: (b, 0, 0, 0))
    oh_spec = pl.BlockSpec((None, N, nb), lambda b: (b, 0, 0))
    oht_spec = pl.BlockSpec((None, nb, N), lambda b: (b, 0, 0))
    probs_spec = pl.BlockSpec((None, H, N, N), lambda b: (b, 0, 0, 0))

    grid_spec = pltpu.PrefetchScalarGridSpec(
        num_scalar_prefetch=0,
        grid=(B,),
        in_specs=[seq_spec] * 6 + [tbl_spec] * 3 + [oh_spec, oht_spec],
        out_specs=[seq_spec, seq_spec, probs_spec],
    )
    out_shape = (jax.ShapeDtypeStruct((B, N, D), jnp.float32),
                 jax.ShapeDtypeStruct((B, N, D), jnp.float32),
                 jax.ShapeDtypeStruct((B, H, N, N), jnp.float32))
    return pl.pallas_call(
        kernel,
        out_shape=out_shape,
        grid_spec=grid_spec,
        compiler_params=pltpu.CompilerParams(
            dimension_semantics=("parallel",),
            vmem_limit_bytes=48 * 1024 * 1024),
    )(A_m, B_m, Aq2, Bk2, v1, v2, cdiff, bbcq, bbck, oh, oht)


# --------------------------------------------------------------------------------------
# Kernel 2: output dense (pre-transposed weights) + residual + LayerNorm, N-tiled.
# --------------------------------------------------------------------------------------
def _out_kernel(ctx_ref, res_ref, wt_ref, b_ref, g_ref, beta_ref, o_ref):
    hdn = jnp.dot(ctx_ref[...], wt_ref[...], preferred_element_type=jnp.float32) + b_ref[...]
    hdn = hdn + res_ref[...]
    mu = jnp.mean(hdn, axis=-1, keepdims=True)
    var = jnp.mean((hdn - mu) ** 2, axis=-1, keepdims=True)
    o_ref[...] = (hdn - mu) * jax.lax.rsqrt(var + 1e-12) * g_ref[...] + beta_ref[...]


def _pick_tile(n, cap=256):
    if n <= cap:
        return n
    for t in range(cap, 7, -8):
        if n % t == 0:
            return t
    return n


def dense_residual_layernorm(ctx, res, wt, b, gamma, beta):
    B, N, D = ctx.shape
    tn = _pick_tile(N)
    seq_spec = pl.BlockSpec((None, tn, D), lambda bi, ni: (bi, ni, 0))
    w_spec = pl.BlockSpec((D, D), lambda bi, ni: (0, 0))
    v_spec = pl.BlockSpec((1, D), lambda bi, ni: (0, 0))
    return pl.pallas_call(
        _out_kernel,
        out_shape=jax.ShapeDtypeStruct((B, N, D), jnp.float32),
        grid_spec=pltpu.PrefetchScalarGridSpec(
            num_scalar_prefetch=0,
            grid=(B, N // tn),
            in_specs=[seq_spec, seq_spec, w_spec, v_spec, v_spec, v_spec],
            out_specs=seq_spec),
        compiler_params=pltpu.CompilerParams(
            dimension_semantics=("parallel", "parallel")),
    )(ctx, res, wt, b.reshape(1, D), gamma.reshape(1, D), beta.reshape(1, D))


# --------------------------------------------------------------------------------------
# Module wrapper (parameters + glue in plain JAX).
# --------------------------------------------------------------------------------------
class MultiHeadedAttentionPallas:
    def __init__(self, h, n_b, d_model, key):
        assert d_model % h == 0
        self.h = h
        self.n_b = n_b
        self.d_model = d_model
        self.d_k = d_model // h
        ks = jax.random.split(key, 10)
        std = 0.02
        shape_proj = (3, d_model, h, self.d_k)
        self.W_xm = std * jax.random.normal(ks[0], shape_proj, jnp.float32)
        self.W_xc = std * jax.random.normal(ks[1], shape_proj, jnp.float32)
        self.W_bm = std * jax.random.normal(ks[2], shape_proj, jnp.float32)
        self.W_bc = std * jax.random.normal(ks[3], shape_proj, jnp.float32)
        self.mean_w = std * jax.random.normal(ks[4], (d_model, d_model), jnp.float32)
        self.mean_b = jnp.zeros((d_model,), jnp.float32)
        self.cov_w = std * jax.random.normal(ks[5], (d_model, d_model), jnp.float32)
        self.cov_b = jnp.zeros((d_model,), jnp.float32)
        self.ln_g = jnp.ones((d_model,), jnp.float32)
        self.ln_b = jnp.zeros((d_model,), jnp.float32)
        self.Wq1_w = std * jax.random.normal(ks[6], (self.d_k, self.d_k), jnp.float32)
        self.Wq1_b = jnp.zeros((self.d_k,), jnp.float32)
        self.Wq2_w = std * jax.random.normal(ks[7], (self.d_k, self.d_k), jnp.float32)
        self.Wq2_b = jnp.zeros((self.d_k,), jnp.float32)
        self.Wk1_w = std * jax.random.normal(ks[8], (self.d_k, self.d_k), jnp.float32)
        self.Wk1_b = jnp.zeros((self.d_k,), jnp.float32)
        self.Wk2_w = std * jax.random.normal(ks[9], (self.d_k, self.d_k), jnp.float32)
        self.Wk2_b = jnp.zeros((self.d_k,), jnp.float32)
        # Host-side pre-transposed output-dense weights (kernel does ctx @ W.T directly).
        self.mean_wt = self.mean_w.T
        self.cov_wt = self.cov_w.T

    # -------- shared per-head projections (kept in (B, N, H, dk) so (B,N,D) is a view) --
    def _head_projections(self, x_m, x_c, b_m, b_c, bb_m, bb_c, p_m, p_c):
        B, N, _ = x_m.shape
        h, dk, nb = self.h, self.d_k, self.n_b

        def proj(x, W):
            return [jnp.einsum('bnd,dhk->bnhk', x, W[l]) for l in range(3)]

        qx1, kx1, vx1 = proj(x_m, self.W_xm)
        qx2, kx2, vx2 = proj(x_c, self.W_xc)
        qb1, kb1, vb1 = proj(b_m, self.W_bm)
        qb2, kb2, vb2 = proj(b_c, self.W_bc)

        q1, k1, v1 = qx1 + qb1, kx1 + kb1, vx1 + vb1
        q2 = jax.nn.elu(qx2 + qb2) + 1.0
        k2 = jax.nn.elu(kx2 + kb2) + 1.0
        v2 = jax.nn.elu(vx2 + vb2) + 1.0

        p_m1 = p_m.reshape(B, N, h, dk)
        p_c1 = p_c.reshape(B, N, h, dk)
        bb_m1 = bb_m.reshape(B, nb, nb, h, dk)
        bb_c1 = bb_c.reshape(B, nb, nb, h, dk)
        return q1, k1, v1, q2, k2, v2, p_m1, p_c1, bb_m1, bb_c1

    # -------- Pallas forward --------
    def forward(self, x_m, x_c, b_seq, b_m, b_c, bb_m, bb_c, p_m, p_c, mask=None):
        # TODO(synk): optional `mask` and dropout are identity in this deterministic eval kernel.
        B, N, D = x_m.shape
        h, dk, nb = self.h, self.d_k, self.n_b
        (q1, k1, v1, q2, k2, v2,
         p_m1, p_c1, bb_m1, bb_c1) = self._head_projections(x_m, x_c, b_m, b_c,
                                                            bb_m, bb_c, p_m, p_c)

        # Position projections (Wq2/Wk2) on the N rows only, host-side.
        pq = jnp.einsum('bnhk,ek->bnhe', p_m1, self.Wq2_w, precision=_HIGHEST) + self.Wq2_b
        pk = jnp.einsum('bnhk,ek->bnhe', p_m1, self.Wk2_w, precision=_HIGHEST) + self.Wk2_b

        # Fused per-query / per-key streams, already in the (B, N, H*dk) layout.
        A_m = (q1 + pq).reshape(B, N, D)          # query mean stream
        B_m = (k1 + pk).reshape(B, N, D)          # key   mean stream
        Aq2 = (q2 + p_c1).reshape(B, N, D)        # query cov  stream
        Bk2 = (k2 + p_c1).reshape(B, N, D)        # key   cov  stream
        v1f = v1.reshape(B, N, D)
        v2f = v2.reshape(B, N, D)

        # Behavior-pair tables: project the nb^2 distinct pairs (not N^2 gathered rows).
        cdiff = (jnp.einsum('bxyhk,ek->bxyhe', bb_m1, self.Wq1_w - self.Wk1_w,
                            precision=_HIGHEST) + (self.Wq1_b - self.Wk1_b))
        cdiff = cdiff.transpose(0, 3, 1, 2, 4).reshape(B, h, nb, nb * dk)  # rows = query behavior
        bbcq = bb_c1.transpose(0, 3, 1, 2, 4).reshape(B, h, nb, nb * dk)   # rows = query behavior
        bbck = bb_c1.transpose(0, 3, 2, 1, 4).reshape(B, h, nb, nb * dk)   # rows = key behavior

        oh = jax.nn.one_hot(b_seq, nb, dtype=jnp.float32)                  # (B, N, nb)
        oht = jnp.swapaxes(oh, 1, 2)                                       # (B, nb, N)

        mean_ctx, cov_ctx, probs = fused_behavior_attention(
            A_m, B_m, Aq2, Bk2, v1f, v2f, cdiff, bbcq, bbck, oh, oht,
            num_heads=h, d_k=dk, n_b=nb)

        mean_out = dense_residual_layernorm(mean_ctx, x_m, self.mean_wt, self.mean_b,
                                            self.ln_g, self.ln_b)
        cov_out = dense_residual_layernorm(cov_ctx, x_c, self.cov_wt, self.cov_b,
                                           self.ln_g, self.ln_b)
        return mean_out, cov_out, probs

    # -------- pure-JAX reference (direct formulation, for correctness check) --------
    def forward_reference(self, x_m, x_c, b_seq, b_m, b_c, bb_m, bb_c, p_m, p_c):
        B, N, D = x_m.shape
        dk = self.d_k
        (q1, k1, v1, q2, k2, v2,
         p_m1, p_c1, bb_m1, bb_c1) = self._head_projections(x_m, x_c, b_m, b_c,
                                                            bb_m, bb_c, p_m, p_c)
        tr = lambda t: t.transpose(0, 2, 1, 3)                      # (B,N,H,dk)->(B,H,N,dk)
        q1, k1, v1, q2, k2, v2 = map(tr, (q1, k1, v1, q2, k2, v2))
        p_m1 = tr(p_m1)
        p_c1 = tr(p_c1)
        bb_m_h = bb_m1.transpose(0, 3, 1, 2, 4)                     # (B,H,nb,nb,dk)
        bb_c_h = bb_c1.transpose(0, 3, 1, 2, 4)

        def gather(bb_h, seq):                                      # (H,nb,nb,dk),(N,)
            return bb_h[:, seq[:, None], seq[None, :], :]           # -> (H,N,N,dk)

        bb_m_g = jax.vmap(gather)(bb_m_h, b_seq)
        bb_c_g = jax.vmap(gather)(bb_c_h, b_seq)

        lin = lambda x, w, b: jnp.einsum('...d,ed->...e', x, w, precision=_HIGHEST) + b
        bbm_q = lin(bb_m_g, self.Wq1_w, self.Wq1_b)
        bbm_k = lin(bb_m_g, self.Wk1_w, self.Wk1_b)
        pq = lin(p_m1, self.Wq2_w, self.Wq2_b)
        pk = lin(p_m1, self.Wk2_w, self.Wk2_b)

        # TODO(synk): TriSAGP not defined in source; additive tri-source fusion used.
        fQm = q1[:, :, :, None, :] + bbm_q + pq[:, :, :, None, :]
        fQc = q2[:, :, :, None, :] + bb_c_g + p_c1[:, :, :, None, :]
        fKm = k1[:, :, None, :, :] + bbm_k + pk[:, :, None, :, :]
        fKc = k2[:, :, None, :, :] + bb_c_g + p_c1[:, :, None, :, :]

        d_mean = jnp.sum((fQm - fKm) ** 2, axis=-1)
        d_cov = jnp.sum(fQc + fKc - 2.0 * jnp.sqrt(jnp.maximum(fQc, 1e-24))
                        * jnp.sqrt(jnp.maximum(fKc, 1e-24)), axis=-1)
        scores = -(d_mean + d_cov) / math.sqrt(dk)
        probs = jax.nn.softmax(scores, axis=-1)

        mean_ctx = jnp.einsum('bhij,bhjk->bhik', probs, v1, precision=_HIGHEST)
        cov_ctx = jnp.einsum('bhij,bhjk->bhik', probs ** 2, v2, precision=_HIGHEST)
        mean_ctx = mean_ctx.transpose(0, 2, 1, 3).reshape(B, N, D)
        cov_ctx = cov_ctx.transpose(0, 2, 1, 3).reshape(B, N, D)

        def out_block(ctx, res, w, b):
            hdn = jnp.einsum('bnd,ed->bne', ctx, w, precision=_HIGHEST) + b + res
            mu = hdn.mean(-1, keepdims=True)
            var = ((hdn - mu) ** 2).mean(-1, keepdims=True)
            return (hdn - mu) / jnp.sqrt(var + 1e-12) * self.ln_g + self.ln_b

        return (out_block(mean_ctx, x_m, self.mean_w, self.mean_b),
                out_block(cov_ctx, x_c, self.cov_w, self.cov_b),
                probs)


if __name__ == "__main__":
    B, N, D, H, NB = 2, 8, 32, 4, 3   # batch, seq, d_model, heads, num behaviors
    key = jax.random.PRNGKey(0)
    kp, k1, k2, k3, k4, k5, k6, k7, k8, k9 = jax.random.split(key, 10)

    x_m = jax.random.normal(k1, (B, N, D), jnp.float32)
    x_c = jax.random.normal(k2, (B, N, D), jnp.float32)
    b_m = jax.random.normal(k3, (B, N, D), jnp.float32)
    b_c = jax.random.normal(k4, (B, N, D), jnp.float32)
    bb_m = jax.random.normal(k5, (B, NB, NB, D), jnp.float32)
    bb_c = jax.random.normal(k6, (B, NB, NB, D), jnp.float32)
    p_m = jax.random.normal(k7, (B, N, D), jnp.float32)
    p_c = jax.random.normal(k8, (B, N, D), jnp.float32)
    b_seq = jax.random.randint(k9, (B, N), 0, NB)

    module = MultiHeadedAttentionPallas(H, NB, D, kp)

    mean_out, cov_out, probs = module.forward(x_m, x_c, b_seq, b_m, b_c,
                                              bb_m, bb_c, p_m, p_c)
    jax.block_until_ready((mean_out, cov_out, probs))

    r_mean, r_cov, r_probs = module.forward_reference(x_m, x_c, b_seq, b_m, b_c,
                                                      bb_m, bb_c, p_m, p_c)
    assert np.allclose(np.asarray(probs), np.asarray(r_probs), rtol=2e-3, atol=2e-3), \
        float(np.max(np.abs(np.asarray(probs) - np.asarray(r_probs))))
    assert np.allclose(np.asarray(mean_out), np.asarray(r_mean), rtol=2e-3, atol=2e-3), \
        float(np.max(np.abs(np.asarray(mean_out) - np.asarray(r_mean))))
    assert np.allclose(np.asarray(cov_out), np.asarray(r_cov), rtol=2e-3, atol=2e-3), \
        float(np.max(np.abs(np.asarray(cov_out) - np.asarray(r_cov))))

    print("KERNEL_OK")
</pallas_src>

<mosaic_0001>
module attributes {stable_mosaic.version = 11 : i64} {
  func.func @kernel(%arg0: i32, %arg1: memref<1x8x32xf32, #tpu.memory_space<vmem>>, %arg2: memref<1x8x32xf32, #tpu.memory_space<vmem>>, %arg3: memref<1x8x32xf32, #tpu.memory_space<vmem>>, %arg4: memref<1x8x32xf32, #tpu.memory_space<vmem>>, %arg5: memref<1x8x32xf32, #tpu.memory_space<vmem>>, %arg6: memref<1x8x32xf32, #tpu.memory_space<vmem>>, %arg7: memref<1x4x3x24xf32, #tpu.memory_space<vmem>>, %arg8: memref<1x4x3x24xf32, #tpu.memory_space<vmem>>, %arg9: memref<1x4x3x24xf32, #tpu.memory_space<vmem>>, %arg10: memref<1x8x3xf32, #tpu.memory_space<vmem>>, %arg11: memref<1x3x8xf32, #tpu.memory_space<vmem>>, %arg12: memref<1x8x32xf32, #tpu.memory_space<vmem>>, %arg13: memref<1x8x32xf32, #tpu.memory_space<vmem>>, %arg14: memref<1x4x8x8xf32, #tpu.memory_space<vmem>>) attributes {dimension_semantics = [#tpu.dimension_semantics<parallel>], iteration_bounds = array<i64: 2>, scalar_prefetch = 0 : i64, scratch_operands = 0 : i64, tpu.core_type = #tpu.core_type<tc>, window_params = [{transform_indices = @transform_0, window_bounds = array<i64: 1, 8, 32>}, {transform_indices = @transform_1, window_bounds = array<i64: 1, 8, 32>}, {transform_indices = @transform_2, window_bounds = array<i64: 1, 8, 32>}, {transform_indices = @transform_3, window_bounds = array<i64: 1, 8, 32>}, {transform_indices = @transform_4, window_bounds = array<i64: 1, 8, 32>}, {transform_indices = @transform_5, window_bounds = array<i64: 1, 8, 32>}, {transform_indices = @transform_6, window_bounds = array<i64: 1, 4, 3, 24>}, {transform_indices = @transform_7, window_bounds = array<i64: 1, 4, 3, 24>}, {transform_indices = @transform_8, window_bounds = array<i64: 1, 4, 3, 24>}, {transform_indices = @transform_9, window_bounds = array<i64: 1, 8, 3>}, {transform_indices = @transform_10, window_bounds = array<i64: 1, 3, 8>}, {transform_indices = @transform_11, window_bounds = array<i64: 1, 8, 32>}, {transform_indices = @transform_12, window_bounds = array<i64: 1, 8, 32>}, {transform_indices = @transform_13, window_bounds = array<i64: 1, 4, 8, 8>}]} {
    %c0 = arith.constant 0 : index
    %c0_0 = arith.constant 0 : index
    %c0_1 = arith.constant 0 : index
    %0 = vector.load %arg10[%c0, %c0_0, %c0_1] : memref<1x8x3xf32, #tpu.memory_space<vmem>>, vector<1x8x3xf32>
    %1 = vector.shape_cast %0 : vector<1x8x3xf32> to vector<8x3xf32>
    %c0_2 = arith.constant 0 : index
    %c0_3 = arith.constant 0 : index
    %c0_4 = arith.constant 0 : index
    %2 = vector.load %arg11[%c0_2, %c0_3, %c0_4] : memref<1x3x8xf32, #tpu.memory_space<vmem>>, vector<1x3x8xf32>
    %3 = vector.shape_cast %2 : vector<1x3x8xf32> to vector<3x8xf32>
    %c0_5 = arith.constant 0 : index
    %c0_6 = arith.constant 0 : index
    %c0_7 = arith.constant 0 : index
    %4 = vector.load %arg1[%c0_5, %c0_6, %c0_7] : memref<1x8x32xf32, #tpu.memory_space<vmem>>, vector<1x8x32xf32>
    %5 = vector.shape_cast %4 : vector<1x8x32xf32> to vector<8x32xf32>
    %c0_8 = arith.constant 0 : index
    %c0_9 = arith.constant 0 : index
    %c0_10 = arith.constant 0 : index
    %6 = vector.load %arg2[%c0_8, %c0_9, %c0_10] : memref<1x8x32xf32, #tpu.memory_space<vmem>>, vector<1x8x32xf32>
    %7 = vector.shape_cast %6 : vector<1x8x32xf32> to vector<8x32xf32>
    %c0_11 = arith.constant 0 : index
    %c0_12 = arith.constant 0 : index
    %c0_13 = arith.constant 0 : index
    %8 = vector.load %arg3[%c0_11, %c0_12, %c0_13] : memref<1x8x32xf32, #tpu.memory_space<vmem>>, vector<1x8x32xf32>
    %9 = vector.shape_cast %8 : vector<1x8x32xf32> to vector<8x32xf32>
    %c0_14 = arith.constant 0 : index
    %c0_15 = arith.constant 0 : index
    %c0_16 = arith.constant 0 : index
    %10 = vector.load %arg4[%c0_14, %c0_15, %c0_16] : memref<1x8x32xf32, #tpu.memory_space<vmem>>, vector<1x8x32xf32>
    %11 = vector.shape_cast %10 : vector<1x8x32xf32> to vector<8x32xf32>
    %c0_17 = arith.constant 0 : index
    %c0_18 = arith.constant 0 : index
    %c0_19 = arith.constant 0 : index
    %12 = vector.load %arg5[%c0_17, %c0_18, %c0_19] : memref<1x8x32xf32, #tpu.memory_space<vmem>>, vector<1x8x32xf32>
    %13 = vector.shape_cast %12 : vector<1x8x32xf32> to vector<8x32xf32>
    %c0_20 = arith.constant 0 : index
    %c0_21 = arith.constant 0 : index
    %c0_22 = arith.constant 0 : index
    %14 = vector.load %arg6[%c0_20, %c0_21, %c0_22] : memref<1x8x32xf32, #tpu.memory_space<vmem>>, vector<1x8x32xf32>
    %15 = vector.shape_cast %14 : vector<1x8x32xf32> to vector<8x32xf32>
    %c0_23 = arith.constant 0 : index
    %c0_24 = arith.constant 0 : index
    %c0_25 = arith.constant 0 : index
    %c0_26 = arith.constant 0 : index
    %16 = vector.load %arg7[%c0_23, %c0_24, %c0_25, %c0_26] : memref<1x4x3x24xf32, #tpu.memory_space<vmem>>, vector<1x4x3x24xf32>
    %17 = vector.shape_cast %16 : vector<1x4x3x24xf32> to vector<4x3x24xf32>
    %c0_27 = arith.constant 0 : index
    %c0_28 = arith.constant 0 : index
    %c0_29 = arith.constant 0 : index
    %c0_30 = arith.constant 0 : index
    %18 = vector.load %arg8[%c0_27, %c0_28, %c0_29, %c0_30] : memref<1x4x3x24xf32, #tpu.memory_space<vmem>>, vector<1x4x3x24xf32>
    %19 = vector.shape_cast %18 : vector<1x4x3x24xf32> to vector<4x3x24xf32>
    %c0_31 = arith.constant 0 : index
    %c0_32 = arith.constant 0 : index
    %c0_33 = arith.constant 0 : index
    %c0_34 = arith.constant 0 : index
    %20 = vector.load %arg9[%c0_31, %c0_32, %c0_33, %c0_34] : memref<1x4x3x24xf32, #tpu.memory_space<vmem>>, vector<1x4x3x24xf32>
    %21 = vector.shape_cast %20 : vector<1x4x3x24xf32> to vector<4x3x24xf32>
    %cst = arith.constant 1.000000e+00 : f32
    %22 = vector.broadcast %cst : f32 to vector<8x1xf32>
    %23 = vector.extract_strided_slice %5 {offsets = [0, 0], sizes = [8, 8], strides = [1, 1]} : vector<8x32xf32> to vector<8x8xf32>
    %24 = vector.extract_strided_slice %7 {offsets = [0, 0], sizes = [8, 8], strides = [1, 1]} : vector<8x32xf32> to vector<8x8xf32>
    %25 = vector.extract_strided_slice %9 {offsets = [0, 0], sizes = [8, 8], strides = [1, 1]} : vector<8x32xf32> to vector<8x8xf32>
    %26 = vector.extract_strided_slice %11 {offsets = [0, 0], sizes = [8, 8], strides = [1, 1]} : vector<8x32xf32> to vector<8x8xf32>
    %27 = vector.extract_strided_slice %13 {offsets = [0, 0], sizes = [8, 8], strides = [1, 1]} : vector<8x32xf32> to vector<8x8xf32>
    %28 = vector.extract_strided_slice %15 {offsets = [0, 0], sizes = [8, 8], strides = [1, 1]} : vector<8x32xf32> to vector<8x8xf32>
    %29 = vector.extract_strided_slice %17 {offsets = [0, 0, 0], sizes = [1, 3, 24], strides = [1, 1, 1]} : vector<4x3x24xf32> to vector<1x3x24xf32>
    %30 = vector.shape_cast %29 : vector<1x3x24xf32> to vector<3x24xf32>
    %31 = vector.extract_strided_slice %1 {offsets = [0, 0], sizes = [8, 1], strides = [1, 1]} : vector<8x3xf32> to vector<8x1xf32>
    %32 = vector.extract_strided_slice %30 {offsets = [0, 0], sizes = [1, 24], strides = [1, 1]} : vector<3x24xf32> to vector<1x24xf32>
    %33 = vector.broadcast %31 : vector<8x1xf32> to vector<8x24xf32>
    %34 = vector.broadcast %32 : vector<1x24xf32> to vector<8x24xf32>
    %35 = arith.mulf %33, %34 : vector<8x24xf32>
    %36 = vector.extract_strided_slice %1 {offsets = [0, 1], sizes = [8, 1], strides = [1, 1]} : vector<8x3xf32> to vector<8x1xf32>
    %37 = vector.extract_strided_slice %30 {offsets = [1, 0], sizes = [1, 24], strides = [1, 1]} : vector<3x24xf32> to vector<1x24xf32>
    %38 = vector.broadcast %36 : vector<8x1xf32> to vector<8x24xf32>
    %39 = vector.broadcast %37 : vector<1x24xf32> to vector<8x24xf32>
    %40 = arith.mulf %38, %39 : vector<8x24xf32>
    %41 = arith.addf %35, %40 : vector<8x24xf32>
    %42 = vector.extract_strided_slice %1 {offsets = [0, 2], sizes = [8, 1], strides = [1, 1]} : vector<8x3xf32> to vector<8x1xf32>
    %43 = vector.extract_strided_slice %30 {offsets = [2, 0], sizes = [1, 24], strides = [1, 1]} : vector<3x24xf32> to vector<1x24xf32>
    %44 = vector.broadcast %42 : vector<8x1xf32> to vector<8x24xf32>
    %45 = vector.broadcast %43 : vector<1x24xf32> to vector<8x24xf32>
    %46 = arith.mulf %44, %45 : vector<8x24xf32>
    %47 = arith.addf %41, %46 : vector<8x24xf32>
    %48 = vector.extract_strided_slice %19 {offsets = [0, 0, 0], sizes = [1, 3, 24], strides = [1, 1, 1]} : vector<4x3x24xf32> to vector<1x3x24xf32>
    %49 = vector.shape_cast %48 : vector<1x3x24xf32> to vector<3x24xf32>
    %50 = vector.extract_strided_slice %1 {offsets = [0, 0], sizes = [8, 1], strides = [1, 1]} : vector<8x3xf32> to vector<8x1xf32>
    %51 = vector.extract_strided_slice %49 {offsets = [0, 0], sizes = [1, 24], strides = [1, 1]} : vector<3x24xf32> to vector<1x24xf32>
    %52 = vector.broadcast %50 : vector<8x1xf32> to vector<8x24xf32>
    %53 = vector.broadcast %51 : vector<1x24xf32> to vector<8x24xf32>
    %54 = arith.mulf %52, %53 : vector<8x24xf32>
    %55 = vector.extract_strided_slice %1 {offsets = [0, 1], sizes = [8, 1], strides = [1, 1]} : vector<8x3xf32> to vector<8x1xf32>
    %56 = vector.extract_strided_slice %49 {offsets = [1, 0], sizes = [1, 24], strides = [1, 1]} : vector<3x24xf32> to vector<1x24xf32>
    %57 = vector.broadcast %55 : vector<8x1xf32> to vector<8x24xf32>
    %58 = vector.broadcast %56 : vector<1x24xf32> to vector<8x24xf32>
    %59 = arith.mulf %57, %58 : vector<8x24xf32>
    %60 = arith.addf %54, %59 : vector<8x24xf32>
    %61 = vector.extract_strided_slice %1 {offsets = [0, 2], sizes = [8, 1], strides = [1, 1]} : vector<8x3xf32> to vector<8x1xf32>
    %62 = vector.extract_strided_slice %49 {offsets = [2, 0], sizes = [1, 24], strides = [1, 1]} : vector<3x24xf32> to vector<1x24xf32>
    %63 = vector.broadcast %61 : vector<8x1xf32> to vector<8x24xf32>
    %64 = vector.broadcast %62 : vector<1x24xf32> to vector<8x24xf32>
    %65 = arith.mulf %63, %64 : vector<8x24xf32>
    %66 = arith.addf %60, %65 : vector<8x24xf32>
    %67 = vector.extract_strided_slice %21 {offsets = [0, 0, 0], sizes = [1, 3, 24], strides = [1, 1, 1]} : vector<4x3x24xf32> to vector<1x3x24xf32>
    %68 = vector.shape_cast %67 : vector<1x3x24xf32> to vector<3x24xf32>
    %69 = vector.extract_strided_slice %1 {offsets = [0, 0], sizes = [8, 1], strides = [1, 1]} : vector<8x3xf32> to vector<8x1xf32>
    %70 = vector.extract_strided_slice %68 {offsets = [0, 0], sizes = [1, 24], strides = [1, 1]} : vector<3x24xf32> to vector<1x24xf32>
    %71 = vector.broadcast %69 : vector<8x1xf32> to vector<8x24xf32>
    %72 = vector.broadcast %70 : vector<1x24xf32> to vector<8x24xf32>
    %73 = arith.mulf %71, %72 : vector<8x24xf32>
    %74 = vector.extract_strided_slice %1 {offsets = [0, 1], sizes = [8, 1], strides = [1, 1]} : vector<8x3xf32> to vector<8x1xf32>
    %75 = vector.extract_strided_slice %68 {offsets = [1, 0], sizes = [1, 24], strides = [1, 1]} : vector<3x24xf32> to vector<1x24xf32>
    %76 = vector.broadcast %74 : vector<8x1xf32> to vector<8x24xf32>
    %77 = vector.broadcast %75 : vector<1x24xf32> to vector<8x24xf32>
    %78 = arith.mulf %76, %77 : vector<8x24xf32>
    %79 = arith.addf %73, %78 : vector<8x24xf32>
    %80 = vector.extract_strided_slice %1 {offsets = [0, 2], sizes = [8, 1], strides = [1, 1]} : vector<8x3xf32> to vector<8x1xf32>
    %81 = vector.extract_strided_slice %68 {offsets = [2, 0], sizes = [1, 24], strides = [1, 1]} : vector<3x24xf32> to vector<1x24xf32>
    %82 = vector.broadcast %80 : vector<8x1xf32> to vector<8x24xf32>
    %83 = vector.broadcast %81 : vector<1x24xf32> to vector<8x24xf32>
    %84 = arith.mulf %82, %83 : vector<8x24xf32>
    %85 = arith.addf %79, %84 : vector<8x24xf32>
    %86 = arith.mulf %24, %24 : vector<8x8xf32>
    %cst_35 = arith.constant dense<0.000000e+00> : vector<8xf32>
    %87 = vector.multi_reduction <add>, %86, %cst_35 [1] : vector<8x8xf32> to vector<8xf32>
    %88 = vector.shape_cast %87 : vector<8xf32> to vector<8x1xf32>
    %cst_36 = arith.constant -2.000000e+00 : f32
    %89 = vector.broadcast %cst_36 : f32 to vector<8x8xf32>
    %90 = arith.mulf %89, %24 : vector<8x8xf32>
    %91 = tpu.concatenate %90, %88 in 1 : vector<8x8xf32>, vector<8x1xf32> -> vector<8x9xf32>
    %92 = vector.extract_strided_slice %85 {offsets = [0, 0], sizes = [8, 8], strides = [1, 1]} : vector<8x24xf32> to vector<8x8xf32>
    %93 = arith.addf %26, %92 : vector<8x8xf32>
    %cst_37 = arith.constant 1.000000e-24 : f32
    %94 = vector.broadcast %cst_37 : f32 to vector<8x8xf32>
    %95 = arith.maximumf %93, %94 : vector<8x8xf32>
    %96 = math.sqrt %95 : vector<8x8xf32>
    %cst_38 = arith.constant dense<0.000000e+00> : vector<8xf32>
    %97 = vector.multi_reduction <add>, %93, %cst_38 [1] : vector<8x8xf32> to vector<8xf32>
    %98 = vector.shape_cast %97 : vector<8xf32> to vector<8x1xf32>
    %cst_39 = arith.constant -2.000000e+00 : f32
    %99 = vector.broadcast %cst_39 : f32 to vector<8x8xf32>
    %100 = arith.mulf %99, %96 : vector<8x8xf32>
    %101 = tpu.concatenate %100, %98 in 1 : vector<8x8xf32>, vector<8x1xf32> -> vector<8x9xf32>
    %102 = vector.extract_strided_slice %1 {offsets = [0, 0], sizes = [8, 1], strides = [1, 1]} : vector<8x3xf32> to vector<8x1xf32>
    %103 = vector.extract_strided_slice %85 {offsets = [0, 8], sizes = [8, 8], strides = [1, 1]} : vector<8x24xf32> to vector<8x8xf32>
    %104 = arith.addf %26, %103 : vector<8x8xf32>
    %cst_40 = arith.constant 1.000000e-24 : f32
    %105 = vector.broadcast %cst_40 : f32 to vector<8x8xf32>
    %106 = arith.maximumf %104, %105 : vector<8x8xf32>
    %107 = math.sqrt %106 : vector<8x8xf32>
    %cst_41 = arith.constant dense<0.000000e+00> : vector<8xf32>
    %108 = vector.multi_reduction <add>, %104, %cst_41 [1] : vector<8x8xf32> to vector<8xf32>
    %109 = vector.shape_cast %108 : vector<8xf32> to vector<8x1xf32>
    %cst_42 = arith.constant -2.000000e+00 : f32
    %110 = vector.broadcast %cst_42 : f32 to vector<8x8xf32>
    %111 = arith.mulf %110, %107 : vector<8x8xf32>
    %112 = tpu.concatenate %111, %109 in 1 : vector<8x8xf32>, vector<8x1xf32> -> vector<8x9xf32>
    %113 = vector.extract_strided_slice %1 {offsets = [0, 1], sizes = [8, 1], strides = [1, 1]} : vector<8x3xf32> to vector<8x1xf32>
    %114 = vector.extract_strided_slice %85 {offsets = [0, 16], sizes = [8, 8], strides = [1, 1]} : vector<8x24xf32> to vector<8x8xf32>
    %115 = arith.addf %26, %114 : vector<8x8xf32>
    %cst_43 = arith.constant 1.000000e-24 : f32
    %116 = vector.broadcast %cst_43 : f32 to vector<8x8xf32>
    %117 = arith.maximumf %115, %116 : vector<8x8xf32>
    %118 = math.sqrt %117 : vector<8x8xf32>
    %cst_44 = arith.constant dense<0.000000e+00> : vector<8xf32>
    %119 = vector.multi_reduction <add>, %115, %cst_44 [1] : vector<8x8xf32> to vector<8xf32>
    %120 = vector.shape_cast %119 : vector<8xf32> to vector<8x1xf32>
    %cst_45 = arith.constant -2.000000e+00 : f32
    %121 = vector.broadcast %cst_45 : f32 to vector<8x8xf32>
    %122 = arith.mulf %121, %118 : vector<8x8xf32>
    %123 = tpu.concatenate %122, %120 in 1 : vector<8x8xf32>, vector<8x1xf32> -> vector<8x9xf32>
    %124 = vector.extract_strided_slice %1 {offsets = [0, 2], sizes = [8, 1], strides = [1, 1]} : vector<8x3xf32> to vector<8x1xf32>
    %cst_46 = arith.constant 0.000000e+00 : f32
    %125 = vector.broadcast %cst_46 : f32 to vector<8x8xf32>
    %126 = vector.extract_strided_slice %3 {offsets = [0, 0], sizes = [1, 8], strides = [1, 1]} : vector<3x8xf32> to vector<1x8xf32>
    %127 = vector.extract_strided_slice %47 {offsets = [0, 0], sizes = [8, 8], strides = [1, 1]} : vector<8x24xf32> to vector<8x8xf32>
    %128 = arith.addf %23, %127 : vector<8x8xf32>
    %129 = vector.extract_strided_slice %66 {offsets = [0, 0], sizes = [8, 8], strides = [1, 1]} : vector<8x24xf32> to vector<8x8xf32>
    %130 = arith.addf %25, %129 : vector<8x8xf32>
    %cst_47 = arith.constant 1.000000e-24 : f32
    %131 = vector.broadcast %cst_47 : f32 to vector<8x8xf32>
    %132 = arith.maximumf %130, %131 : vector<8x8xf32>
    %133 = math.sqrt %132 : vector<8x8xf32>
    %134 = arith.mulf %128, %128 : vector<8x8xf32>
    %135 = arith.addf %134, %130 : vector<8x8xf32>
    %cst_48 = arith.constant dense<0.000000e+00> : vector<8xf32>
    %136 = vector.multi_reduction <add>, %135, %cst_48 [1] : vector<8x8xf32> to vector<8xf32>
    %137 = vector.shape_cast %136 : vector<8xf32> to vector<8x1xf32>
    %138 = tpu.concatenate %128, %22 in 1 : vector<8x8xf32>, vector<8x1xf32> -> vector<8x9xf32>
    %139 = tpu.concatenate %133, %22 in 1 : vector<8x8xf32>, vector<8x1xf32> -> vector<8x9xf32>
    %cst_49 = arith.constant dense<0.000000e+00> : vector<8x8xf32>
    %140 = tpu.matmul %138, %91, %cst_49 {dimension_numbers = #tpu.dot_dimension_numbers<[1], [1], [0], [0], [0, 0, 1, 0], [], []>} : vector<8x9xf32>, vector<8x9xf32>, vector<8x8xf32> -> vector<8x8xf32>
    %141 = vector.broadcast %137 : vector<8x1xf32> to vector<8x8xf32>
    %142 = arith.addf %141, %140 : vector<8x8xf32>
    %cst_50 = arith.constant dense<0.000000e+00> : vector<8x8xf32>
    %143 = tpu.matmul %139, %101, %cst_50 {dimension_numbers = #tpu.dot_dimension_numbers<[1], [1], [0], [0], [0, 0, 1, 0], [], []>} : vector<8x9xf32>, vector<8x9xf32>, vector<8x8xf32> -> vector<8x8xf32>
    %144 = vector.broadcast %102 : vector<8x1xf32> to vector<8x8xf32>
    %145 = arith.mulf %144, %143 : vector<8x8xf32>
    %146 = arith.addf %142, %145 : vector<8x8xf32>
    %cst_51 = arith.constant dense<0.000000e+00> : vector<8x8xf32>
    %147 = tpu.matmul %139, %112, %cst_51 {dimension_numbers = #tpu.dot_dimension_numbers<[1], [1], [0], [0], [0, 0, 1, 0], [], []>} : vector<8x9xf32>, vector<8x9xf32>, vector<8x8xf32> -> vector<8x8xf32>
    %148 = vector.broadcast %113 : vector<8x1xf32> to vector<8x8xf32>
    %149 = arith.mulf %148, %147 : vector<8x8xf32>
    %150 = arith.addf %146, %149 : vector<8x8xf32>
    %cst_52 = arith.constant dense<0.000000e+00> : vector<8x8xf32>
    %151 = tpu.matmul %139, %123, %cst_52 {dimension_numbers = #tpu.dot_dimension_numbers<[1], [1], [0], [0], [0, 0, 1, 0], [], []>} : vector<8x9xf32>, vector<8x9xf32>, vector<8x8xf32> -> vector<8x8xf32>
    %152 = vector.broadcast %124 : vector<8x1xf32> to vector<8x8xf32>
    %153 = arith.mulf %152, %151 : vector<8x8xf32>
    %154 = arith.addf %150, %153 : vector<8x8xf32>
    %155 = vector.broadcast %126 : vector<1x8xf32> to vector<8x8xf32>
    %156 = arith.mulf %155, %154 : vector<8x8xf32>
    %157 = arith.addf %125, %156 : vector<8x8xf32>
    %158 = vector.extract_strided_slice %3 {offsets = [1, 0], sizes = [1, 8], strides = [1, 1]} : vector<3x8xf32> to vector<1x8xf32>
    %159 = vector.extract_strided_slice %47 {offsets = [0, 8], sizes = [8, 8], strides = [1, 1]} : vector<8x24xf32> to vector<8x8xf32>
    %160 = arith.addf %23, %159 : vector<8x8xf32>
    %161 = vector.extract_strided_slice %66 {offsets = [0, 8], sizes = [8, 8], strides = [1, 1]} : vector<8x24xf32> to vector<8x8xf32>
    %162 = arith.addf %25, %161 : vector<8x8xf32>
    %cst_53 = arith.constant 1.000000e-24 : f32
    %163 = vector.broadcast %cst_53 : f32 to vector<8x8xf32>
    %164 = arith.maximumf %162, %163 : vector<8x8xf32>
    %165 = math.sqrt %164 : vector<8x8xf32>
    %166 = arith.mulf %160, %160 : vector<8x8xf32>
    %167 = arith.addf %166, %162 : vector<8x8xf32>
    %cst_54 = arith.constant dense<0.000000e+00> : vector<8xf32>
    %168 = vector.multi_reduction <add>, %167, %cst_54 [1] : vector<8x8xf32> to vector<8xf32>
    %169 = vector.shape_cast %168 : vector<8xf32> to vector<8x1xf32>
    %170 = tpu.concatenate %160, %22 in 1 : vector<8x8xf32>, vector<8x1xf32> -> vector<8x9xf32>
    %171 = tpu.concatenate %165, %22 in 1 : vector<8x8xf32>, vector<8x1xf32> -> vector<8x9xf32>
    %cst_55 = arith.constant dense<0.000000e+00> : vector<8x8xf32>
    %172 = tpu.matmul %170, %91, %cst_55 {dimension_numbers = #tpu.dot_dimension_numbers<[1], [1], [0], [0], [0, 0, 1, 0], [], []>} : vector<8x9xf32>, vector<8x9xf32>, vector<8x8xf32> -> vector<8x8xf32>
    %173 = vector.broadcast %169 : vector<8x1xf32> to vector<8x8xf32>
    %174 = arith.addf %173, %172 : vector<8x8xf32>
    %cst_56 = arith.constant dense<0.000000e+00> : vector<8x8xf32>
    %175 = tpu.matmul %171, %101, %cst_56 {dimension_numbers = #tpu.dot_dimension_numbers<[1], [1], [0], [0], [0, 0, 1, 0], [], []>} : vector<8x9xf32>, vector<8x9xf32>, vector<8x8xf32> -> vector<8x8xf32>
    %176 = vector.broadcast %102 : vector<8x1xf32> to vector<8x8xf32>
    %177 = arith.mulf %176, %175 : vector<8x8xf32>
    %178 = arith.addf %174, %177 : vector<8x8xf32>
    %cst_57 = arith.constant dense<0.000000e+00> : vector<8x8xf32>
    %179 = tpu.matmul %171, %112, %cst_57 {dimension_numbers = #tpu.dot_dimension_numbers<[1], [1], [0], [0], [0, 0, 1, 0], [], []>} : vector<8x9xf32>, vector<8x9xf32>, vector<8x8xf32> -> vector<8x8xf32>
    %180 = vector.broadcast %113 : vector<8x1xf32> to vector<8x8xf32>
    %181 = arith.mulf %180, %179 : vector<8x8xf32>
    %182 = arith.addf %178, %181 : vector<8x8xf32>
    %cst_58 = arith.constant dense<0.000000e+00> : vector<8x8xf32>
    %183 = tpu.matmul %171, %123, %cst_58 {dimension_numbers = #tpu.dot_dimension_numbers<[1], [1], [0], [0], [0, 0, 1, 0], [], []>} : vector<8x9xf32>, vector<8x9xf32>, vector<8x8xf32> -> vector<8x8xf32>
    %184 = vector.broadcast %124 : vector<8x1xf32> to vector<8x8xf32>
    %185 = arith.mulf %184, %183 : vector<8x8xf32>
    %186 = arith.addf %182, %185 : vector<8x8xf32>
    %187 = vector.broadcast %158 : vector<1x8xf32> to vector<8x8xf32>
    %188 = arith.mulf %187, %186 : vector<8x8xf32>
    %189 = arith.addf %157, %188 : vector<8x8xf32>
    %190 = vector.extract_strided_slice %3 {offsets = [2, 0], sizes = [1, 8], strides = [1, 1]} : vector<3x8xf32> to vector<1x8xf32>
    %191 = vector.extract_strided_slice %47 {offsets = [0, 16], sizes = [8, 8], strides = [1, 1]} : vector<8x24xf32> to vector<8x8xf32>
    %192 = arith.addf %23, %191 : vector<8x8xf32>
    %193 = vector.extract_strided_slice %66 {offsets = [0, 16], sizes = [8, 8], strides = [1, 1]} : vector<8x24xf32> to vector<8x8xf32>
    %194 = arith.addf %25, %193 : vector<8x8xf32>
    %cst_59 = arith.constant 1.000000e-24 : f32
    %195 = vector.broadcast %cst_59 : f32 to vector<8x8xf32>
    %196 = arith.maximumf %194, %195 : vector<8x8xf32>
    %197 = math.sqrt %196 : vector<8x8xf32>
    %198 = arith.mulf %192, %192 : vector<8x8xf32>
    %199 = arith.addf %198, %194 : vector<8x8xf32>
    %cst_60 = arith.constant dense<0.000000e+00> : vector<8xf32>
    %200 = vector.multi_reduction <add>, %199, %cst_60 [1] : vector<8x8xf32> to vector<8xf32>
    %201 = vector.shape_cast %200 : vector<8xf32> to vector<8x1xf32>
    %202 = tpu.concatenate %192, %22 in 1 : vector<8x8xf32>, vector<8x1xf32> -> vector<8x9xf32>
    %203 = tpu.concatenate %197, %22 in 1 : vector<8x8xf32>, vector<8x1xf32> -> vector<8x9xf32>
    %cst_61 = arith.constant dense<0.000000e+00> : vector<8x8xf32>
    %204 = tpu.matmul %202, %91, %cst_61 {dimension_numbers = #tpu.dot_dimension_numbers<[1], [1], [0], [0], [0, 0, 1, 0], [], []>} : vector<8x9xf32>, vector<8x9xf32>, vector<8x8xf32> -> vector<8x8xf32>
    %205 = vector.broadcast %201 : vector<8x1xf32> to vector<8x8xf32>
    %206 = arith.addf %205, %204 : vector<8x8xf32>
    %cst_62 = arith.constant dense<0.000000e+00> : vector<8x8xf32>
    %207 = tpu.matmul %203, %101, %cst_62 {dimension_numbers = #tpu.dot_dimension_numbers<[1], [1], [0], [0], [0, 0, 1, 0], [], []>} : vector<8x9xf32>, vector<8x9xf32>, vector<8x8xf32> -> vector<8x8xf32>
    %208 = vector.broadcast %102 : vector<8x1xf32> to vector<8x8xf32>
    %209 = arith.mulf %208, %207 : vector<8x8xf32>
    %210 = arith.addf %206, %209 : vector<8x8xf32>
    %cst_63 = arith.constant dense<0.000000e+00> : vector<8x8xf32>
    %211 = tpu.matmul %203, %112, %cst_63 {dimension_numbers = #tpu.dot_dimension_numbers<[1], [1], [0], [0], [0, 0, 1, 0], [], []>} : vector<8x9xf32>, vector<8x9xf32>, vector<8x8xf32> -> vector<8x8xf32>
    %212 = vector.broadcast %113 : vector<8x1xf32> to vector<8x8xf32>
    %213 = arith.mulf %212, %211 : vector<8x8xf32>
    %214 = arith.addf %210, %213 : vector<8x8xf32>
    %cst_64 = arith.constant dense<0.000000e+00> : vector<8x8xf32>
    %215 = tpu.matmul %203, %123, %cst_64 {dimension_numbers = #tpu.dot_dimension_numbers<[1], [1], [0], [0], [0, 0, 1, 0], [], []>} : vector<8x9xf32>, vector<8x9xf32>, vector<8x8xf32> -> vector<8x8xf32>
    %216 = vector.broadcast %124 : vector<8x1xf32> to vector<8x8xf32>
    %217 = arith.mulf %216, %215 : vector<8x8xf32>
    %218 = arith.addf %214, %217 : vector<8x8xf32>
    %219 = vector.broadcast %190 : vector<1x8xf32> to vector<8x8xf32>
    %220 = arith.mulf %219, %218 : vector<8x8xf32>
    %221 = arith.addf %189, %220 : vector<8x8xf32>
    %cst_65 = arith.constant -0.353553385 : f32
    %222 = vector.broadcast %cst_65 : f32 to vector<8x8xf32>
    %223 = arith.mulf %221, %222 : vector<8x8xf32>
    %cst_66 = arith.constant dense<0xFF800000> : vector<8xf32>
    %224 = vector.multi_reduction <maximumf>, %223, %cst_66 [1] : vector<8x8xf32> to vector<8xf32>
    %225 = vector.shape_cast %224 : vector<8xf32> to vector<8x1xf32>
    %226 = vector.broadcast %225 : vector<8x1xf32> to vector<8x8xf32>
    %227 = arith.subf %223, %226 : vector<8x8xf32>
    %228 = math.exp %227 : vector<8x8xf32>
    %cst_67 = arith.constant dense<0.000000e+00> : vector<8xf32>
    %229 = vector.multi_reduction <add>, %228, %cst_67 [1] : vector<8x8xf32> to vector<8xf32>
    %230 = vector.shape_cast %229 : vector<8xf32> to vector<8x1xf32>
    %231 = tpu.reciprocal %230 {approx = true} : vector<8x1xf32> -> vector<8x1xf32>
    %232 = arith.mulf %230, %231 : vector<8x1xf32>
    %cst_68 = arith.constant 2.000000e+00 : f32
    %233 = vector.broadcast %cst_68 : f32 to vector<8x1xf32>
    %234 = arith.subf %233, %232 : vector<8x1xf32>
    %235 = arith.mulf %231, %234 : vector<8x1xf32>
    %236 = vector.broadcast %235 : vector<8x1xf32> to vector<8x8xf32>
    %237 = arith.mulf %228, %236 : vector<8x8xf32>
    %c0_69 = arith.constant 0 : index
    %c0_70 = arith.constant 0 : index
    %c0_71 = arith.constant 0 : index
    %c0_72 = arith.constant 0 : index
    %238 = vector.load %arg14[%c0_69, %c0_70, %c0_71, %c0_72] : memref<1x4x8x8xf32, #tpu.memory_space<vmem>>, vector<1x1x8x8xf32>
    %239 = vector.shape_cast %238 : vector<1x1x8x8xf32> to vector<8x8xf32>
    %240 = vector.shape_cast %237 : vector<8x8xf32> to vector<1x1x8x8xf32>
    tpu.vector_store %arg14[%c0_69, %c0_70, %c0_71, %c0_72], %240 {strides = array<i32>} : memref<1x4x8x8xf32, #tpu.memory_space<vmem>>, vector<1x1x8x8xf32>,
    %cst_73 = arith.constant dense<0.000000e+00> : vector<8x8xf32>
    %241 = tpu.matmul %237, %27, %cst_73 {dimension_numbers = #tpu.dot_dimension_numbers<[1], [0], [0], [1], [0, 0, 1, 1], [], []>} : vector<8x8xf32>, vector<8x8xf32>, vector<8x8xf32> -> vector<8x8xf32>
    %242 = arith.mulf %237, %237 : vector<8x8xf32>
    %cst_74 = arith.constant dense<0.000000e+00> : vector<8x8xf32>
    %243 = tpu.matmul %242, %28, %cst_74 {dimension_numbers = #tpu.dot_dimension_numbers<[1], [0], [0], [1], [0, 0, 1, 1], [], []>} : vector<8x8xf32>, vector<8x8xf32>, vector<8x8xf32> -> vector<8x8xf32>
    %244 = vector.extract_strided_slice %5 {offsets = [0, 8], sizes = [8, 8], strides = [1, 1]} : vector<8x32xf32> to vector<8x8xf32>
    %245 = vector.extract_strided_slice %7 {offsets = [0, 8], sizes = [8, 8], strides = [1, 1]} : vector<8x32xf32> to vector<8x8xf32>
    %246 = vector.extract_strided_slice %9 {offsets = [0, 8], sizes = [8, 8], strides = [1, 1]} : vector<8x32xf32> to vector<8x8xf32>
    %247 = vector.extract_strided_slice %11 {offsets = [0, 8], sizes = [8, 8], strides = [1, 1]} : vector<8x32xf32> to vector<8x8xf32>
    %248 = vector.extract_strided_slice %13 {offsets = [0, 8], sizes = [8, 8], strides = [1, 1]} : vector<8x32xf32> to vector<8x8xf32>
    %249 = vector.extract_strided_slice %15 {offsets = [0, 8], sizes = [8, 8], strides = [1, 1]} : vector<8x32xf32> to vector<8x8xf32>
    %250 = vector.extract_strided_slice %17 {offsets = [1, 0, 0], sizes = [1, 3, 24], strides = [1, 1, 1]} : vector<4x3x24xf32> to vector<1x3x24xf32>
    %251 = vector.shape_cast %250 : vector<1x3x24xf32> to vector<3x24xf32>
    %252 = vector.extract_strided_slice %1 {offsets = [0, 0], sizes = [8, 1], strides = [1, 1]} : vector<8x3xf32> to vector<8x1xf32>
    %253 = vector.extract_strided_slice %251 {offsets = [0, 0], sizes = [1, 24], strides = [1, 1]} : vector<3x24xf32> to vector<1x24xf32>
    %254 = vector.broadcast %252 : vector<8x1xf32> to vector<8x24xf32>
    %255 = vector.broadcast %253 : vector<1x24xf32> to vector<8x24xf32>
    %256 = arith.mulf %254, %255 : vector<8x24xf32>
    %257 = vector.extract_strided_slice %1 {offsets = [0, 1], sizes = [8, 1], strides = [1, 1]} : vector<8x3xf32> to vector<8x1xf32>
    %258 = vector.extract_strided_slice %251 {offsets = [1, 0], sizes = [1, 24], strides = [1, 1]} : vector<3x24xf32> to vector<1x24xf32>
    %259 = vector.broadcast %257 : vector<8x1xf32> to vector<8x24xf32>
    %260 = vector.broadcast %258 : vector<1x24xf32> to vector<8x24xf32>
    %261 = arith.mulf %259, %260 : vector<8x24xf32>
    %262 = arith.addf %256, %261 : vector<8x24xf32>
    %263 = vector.extract_strided_slice %1 {offsets = [0, 2], sizes = [8, 1], strides = [1, 1]} : vector<8x3xf32> to vector<8x1xf32>
    %264 = vector.extract_strided_slice %251 {offsets = [2, 0], sizes = [1, 24], strides = [1, 1]} : vector<3x24xf32> to vector<1x24xf32>
    %265 = vector.broadcast %263 : vector<8x1xf32> to vector<8x24xf32>
    %266 = vector.broadcast %264 : vector<1x24xf32> to vector<8x24xf32>
    %267 = arith.mulf %265, %266 : vector<8x24xf32>
    %268 = arith.addf %262, %267 : vector<8x24xf32>
    %269 = vector.extract_strided_slice %19 {offsets = [1, 0, 0], sizes = [1, 3, 24], strides = [1, 1, 1]} : vector<4x3x24xf32> to vector<1x3x24xf32>
    %270 = vector.shape_cast %269 : vector<1x3x24xf32> to vector<3x24xf32>
    %271 = vector.extract_strided_slice %1 {offsets = [0, 0], sizes = [8, 1], strides = [1, 1]} : vector<8x3xf32> to vector<8x1xf32>
    %272 = vector.extract_strided_slice %270 {offsets = [0, 0], sizes = [1, 24], strides = [1, 1]} : vector<3x24xf32> to vector<1x24xf32>
    %273 = vector.broadcast %271 : vector<8x1xf32> to vector<8x24xf32>
    %274 = vector.broadcast %272 : vector<1x24xf32> to vector<8x24xf32>
    %275 = arith.mulf %273, %274 : vector<8x24xf32>
    %276 = vector.extract_strided_slice %1 {offsets = [0, 1], sizes = [8, 1], strides = [1, 1]} : vector<8x3xf32> to vector<8x1xf32>
    %277 = vector.extract_strided_slice %270 {offsets = [1, 0], sizes = [1, 24], strides = [1, 1]} : vector<3x24xf32> to vector<1x24xf32>
    %278 = vector.broadcast %276 : vector<8x1xf32> to vector<8x24xf32>
    %279 = vector.broadcast %277 : vector<1x24xf32> to vector<8x24xf32>
    %280 = arith.mulf %278, %279 : vector<8x24xf32>
    %281 = arith.addf %275, %280 : vector<8x24xf32>
    %282 = vector.extract_strided_slice %1 {offsets = [0, 2], sizes = [8, 1], strides = [1, 1]} : vector<8x3xf32> to vector<8x1xf32>
    %283 = vector.extract_strided_slice %270 {offsets = [2, 0], sizes = [1, 24], strides = [1, 1]} : vector<3x24xf32> to vector<1x24xf32>
    %284 = vector.broadcast %282 : vector<8x1xf32> to vector<8x24xf32>
    %285 = vector.broadcast %283 : vector<1x24xf32> to vector<8x24xf32>
    %286 = arith.mulf %284, %285 : vector<8x24xf32>
    %287 = arith.addf %281, %286 : vector<8x24xf32>
    %288 = vector.extract_strided_slice %21 {offsets = [1, 0, 0], sizes = [1, 3, 24], strides = [1, 1, 1]} : vector<4x3x24xf32> to vector<1x3x24xf32>
    %289 = vector.shape_cast %288 : vector<1x3x24xf32> to vector<3x24xf32>
    %290 = vector.extract_strided_slice %1 {offsets = [0, 0], sizes = [8, 1], strides = [1, 1]} : vector<8x3xf32> to vector<8x1xf32>
    %291 = vector.extract_strided_slice %289 {offsets = [0, 0], sizes = [1, 24], strides = [1, 1]} : vector<3x24xf32> to vector<1x24xf32>
    %292 = vector.broadcast %290 : vector<8x1xf32> to vector<8x24xf32>
    %293 = vector.broadcast %291 : vector<1x24xf32> to vector<8x24xf32>
    %294 = arith.mulf %292, %293 : vector<8x24xf32>
    %295 = vector.extract_strided_slice %1 {offsets = [0, 1], sizes = [8, 1], strides = [1, 1]} : vector<8x3xf32> to vector<8x1xf32>
    %296 = vector.extract_strided_slice %289 {offsets = [1, 0], sizes = [1, 24], strides = [1, 1]} : vector<3x24xf32> to vector<1x24xf32>
    %297 = vector.broadcast %295 : vector<8x1xf32> to vector<8x24xf32>
    %298 = vector.broadcast %296 : vector<1x24xf32> to vector<8x24xf32>
    %299 = arith.mulf %297, %298 : vector<8x24xf32>
    %300 = arith.addf %294, %299 : vector<8x24xf32>
    %301 = vector.extract_strided_slice %1 {offsets = [0, 2], sizes = [8, 1], strides = [1, 1]} : vector<8x3xf32> to vector<8x1xf32>
    %302 = vector.extract_strided_slice %289 {offsets = [2, 0], sizes = [1, 24], strides = [1, 1]} : vector<3x24xf32> to vector<1x24xf32>
    %303 = vector.broadcast %301 : vector<8x1xf32> to vector<8x24xf32>
    %304 = vector.broadcast %302 : vector<1x24xf32> to vector<8x24xf32>
    %305 = arith.mulf %303, %304 : vector<8x24xf32>
    %306 = arith.addf %300, %305 : vector<8x24xf32>
    %307 = arith.mulf %245, %245 : vector<8x8xf32>
    %cst_75 = arith.constant dense<0.000000e+00> : vector<8xf32>
    %308 = vector.multi_reduction <add>, %307, %cst_75 [1] : vector<8x8xf32> to vector<8xf32>
    %309 = vector.shape_cast %308 : vector<8xf32> to vector<8x1xf32>
    %cst_76 = arith.constant -2.000000e+00 : f32
    %310 = vector.broadcast %cst_76 : f32 to vector<8x8xf32>
    %311 = arith.mulf %310, %245 : vector<8x8xf32>
    %312 = tpu.concatenate %311, %309 in 1 : vector<8x8xf32>, vector<8x1xf32> -> vector<8x9xf32>
    %313 = vector.extract_strided_slice %306 {offsets = [0, 0], sizes = [8, 8], strides = [1, 1]} : vector<8x24xf32> to vector<8x8xf32>
    %314 = arith.addf %247, %313 : vector<8x8xf32>
    %cst_77 = arith.constant 1.000000e-24 : f32
    %315 = vector.broadcast %cst_77 : f32 to vector<8x8xf32>
    %316 = arith.maximumf %314, %315 : vector<8x8xf32>
    %317 = math.sqrt %316 : vector<8x8xf32>
    %cst_78 = arith.constant dense<0.000000e+00> : vector<8xf32>
    %318 = vector.multi_reduction <add>, %314, %cst_78 [1] : vector<8x8xf32> to vector<8xf32>
    %319 = vector.shape_cast %318 : vector<8xf32> to vector<8x1xf32>
    %cst_79 = arith.constant -2.000000e+00 : f32
    %320 = vector.broadcast %cst_79 : f32 to vector<8x8xf32>
    %321 = arith.mulf %320, %317 : vector<8x8xf32>
    %322 = tpu.concatenate %321, %319 in 1 : vector<8x8xf32>, vector<8x1xf32> -> vector<8x9xf32>
    %323 = vector.extract_strided_slice %1 {offsets = [0, 0], sizes = [8, 1], strides = [1, 1]} : vector<8x3xf32> to vector<8x1xf32>
    %324 = vector.extract_strided_slice %306 {offsets = [0, 8], sizes = [8, 8], strides = [1, 1]} : vector<8x24xf32> to vector<8x8xf32>
    %325 = arith.addf %247, %324 : vector<8x8xf32>
    %cst_80 = arith.constant 1.000000e-24 : f32
    %326 = vector.broadcast %cst_80 : f32 to vector<8x8xf32>
    %327 = arith.maximumf %325, %326 : vector<8x8xf32>
    %328 = math.sqrt %327 : vector<8x8xf32>
    %cst_81 = arith.constant dense<0.000000e+00> : vector<8xf32>
    %329 = vector.multi_reduction <add>, %325, %cst_81 [1] : vector<8x8xf32> to vector<8xf32>
    %330 = vector.shape_cast %329 : vector<8xf32> to vector<8x1xf32>
    %cst_82 = arith.constant -2.000000e+00 : f32
    %331 = vector.broadcast %cst_82 : f32 to vector<8x8xf32>
    %332 = arith.mulf %331, %328 : vector<8x8xf32>
    %333 = tpu.concatenate %332, %330 in 1 : vector<8x8xf32>, vector<8x1xf32> -> vector<8x9xf32>
    %334 = vector.extract_strided_slice %1 {offsets = [0, 1], sizes = [8, 1], strides = [1, 1]} : vector<8x3xf32> to vector<8x1xf32>
    %335 = vector.extract_strided_slice %306 {offsets = [0, 16], sizes = [8, 8], strides = [1, 1]} : vector<8x24xf32> to vector<8x8xf32>
    %336 = arith.addf %247, %335 : vector<8x8xf32>
    %cst_83 = arith.constant 1.000000e-24 : f32
    %337 = vector.broadcast %cst_83 : f32 to vector<8x8xf32>
    %338 = arith.maximumf %336, %337 : vector<8x8xf32>
    %339 = math.sqrt %338 : vector<8x8xf32>
    %cst_84 = arith.constant dense<0.000000e+00> : vector<8xf32>
    %340 = vector.multi_reduction <add>, %336, %cst_84 [1] : vector<8x8xf32> to vector<8xf32>
    %341 = vector.shape_cast %340 : vector<8xf32> to vector<8x1xf32>
    %cst_85 = arith.constant -2.000000e+00 : f32
    %342 = vector.broadcast %cst_85 : f32 to vector<8x8xf32>
    %343 = arith.mulf %342, %339 : vector<8x8xf32>
    %344 = tpu.concatenate %343, %341 in 1 : vector<8x8xf32>, vector<8x1xf32> -> vector<8x9xf32>
    %345 = vector.extract_strided_slice %1 {offsets = [0, 2], sizes = [8, 1], strides = [1, 1]} : vector<8x3xf32> to vector<8x1xf32>
    %cst_86 = arith.constant 0.000000e+00 : f32
    %346 = vector.broadcast %cst_86 : f32 to vector<8x8xf32>
    %347 = vector.extract_strided_slice %3 {offsets = [0, 0], sizes = [1, 8], strides = [1, 1]} : vector<3x8xf32> to vector<1x8xf32>
    %348 = vector.extract_strided_slice %268 {offsets = [0, 0], sizes = [8, 8], strides = [1, 1]} : vector<8x24xf32> to vector<8x8xf32>
    %349 = arith.addf %244, %348 : vector<8x8xf32>
    %350 = vector.extract_strided_slice %287 {offsets = [0, 0], sizes = [8, 8], strides = [1, 1]} : vector<8x24xf32> to vector<8x8xf32>
    %351 = arith.addf %246, %350 : vector<8x8xf32>
    %cst_87 = arith.constant 1.000000e-24 : f32
    %352 = vector.broadcast %cst_87 : f32 to vector<8x8xf32>
    %353 = arith.maximumf %351, %352 : vector<8x8xf32>
    %354 = math.sqrt %353 : vector<8x8xf32>
    %355 = arith.mulf %349, %349 : vector<8x8xf32>
    %356 = arith.addf %355, %351 : vector<8x8xf32>
    %cst_88 = arith.constant dense<0.000000e+00> : vector<8xf32>
    %357 = vector.multi_reduction <add>, %356, %cst_88 [1] : vector<8x8xf32> to vector<8xf32>
    %358 = vector.shape_cast %357 : vector<8xf32> to vector<8x1xf32>
    %359 = tpu.concatenate %349, %22 in 1 : vector<8x8xf32>, vector<8x1xf32> -> vector<8x9xf32>
    %360 = tpu.concatenate %354, %22 in 1 : vector<8x8xf32>, vector<8x1xf32> -> vector<8x9xf32>
    %cst_89 = arith.constant dense<0.000000e+00> : vector<8x8xf32>
    %361 = tpu.matmul %359, %312, %cst_89 {dimension_numbers = #tpu.dot_dimension_numbers<[1], [1], [0], [0], [0, 0, 1, 0], [], []>} : vector<8x9xf32>, vector<8x9xf32>, vector<8x8xf32> -> vector<8x8xf32>
    %362 = vector.broadcast %358 : vector<8x1xf32> to vector<8x8xf32>
    %363 = arith.addf %362, %361 : vector<8x8xf32>
    %cst_90 = arith.constant dense<0.000000e+00> : vector<8x8xf32>
    %364 = tpu.matmul %360, %322, %cst_90 {dimension_numbers = #tpu.dot_dimension_numbers<[1], [1], [0], [0], [0, 0, 1, 0], [], []>} : vector<8x9xf32>, vector<8x9xf32>, vector<8x8xf32> -> vector<8x8xf32>
    %365 = vector.broadcast %323 : vector<8x1xf32> to vector<8x8xf32>
    %366 = arith.mulf %365, %364 : vector<8x8xf32>
    %367 = arith.addf %363, %366 : vector<8x8xf32>
    %cst_91 = arith.constant dense<0.000000e+00> : vector<8x8xf32>
    %368 = tpu.matmul %360, %333, %cst_91 {dimension_numbers = #tpu.dot_dimension_numbers<[1], [1], [0], [0], [0, 0, 1, 0], [], []>} : vector<8x9xf32>, vector<8x9xf32>, vector<8x8xf32> -> vector<8x8xf32>
    %369 = vector.broadcast %334 : vector<8x1xf32> to vector<8x8xf32>
    %370 = arith.mulf %369, %368 : vector<8x8xf32>
    %371 = arith.addf %367, %370 : vector<8x8xf32>
    %cst_92 = arith.constant dense<0.000000e+00> : vector<8x8xf32>
    %372 = tpu.matmul %360, %344, %cst_92 {dimension_numbers = #tpu.dot_dimension_numbers<[1], [1], [0], [0], [0, 0, 1, 0], [], []>} : vector<8x9xf32>, vector<8x9xf32>, vector<8x8xf32> -> vector<8x8xf32>
    %373 = vector.broadcast %345 : vector<8x1xf32> to vector<8x8xf32>
    %374 = arith.mulf %373, %372 : vector<8x8xf32>
    %375 = arith.addf %371, %374 : vector<8x8xf32>
    %376 = vector.broadcast %347 : vector<1x8xf32> to vector<8x8xf32>
    %377 = arith.mulf %376, %375 : vector<8x8xf32>
    %378 = arith.addf %346, %377 : vector<8x8xf32>
    %379 = vector.extract_strided_slice %3 {offsets = [1, 0], sizes = [1, 8], strides = [1, 1]} : vector<3x8xf32> to vector<1x8xf32>
    %380 = vector.extract_strided_slice %268 {offsets = [0, 8], sizes = [8, 8], strides = [1, 1]} : vector<8x24xf32> to vector<8x8xf32>
    %381 = arith.addf %244, %380 : vector<8x8xf32>
    %382 = vector.extract_strided_slice %287 {offsets = [0, 8], sizes = [8, 8], strides = [1, 1]} : vector<8x24xf32> to vector<8x8xf32>
    %383 = arith.addf %246, %382 : vector<8x8xf32>
    %cst_93 = arith.constant 1.000000e-24 : f32
    %384 = vector.broadcast %cst_93 : f32 to vector<8x8xf32>
    %385 = arith.maximumf %383, %384 : vector<8x8xf32>
    %386 = math.sqrt %385 : vector<8x8xf32>
    %387 = arith.mulf %381, %381 : vector<8x8xf32>
    %388 = arith.addf %387, %383 : vector<8x8xf32>
    %cst_94 = arith.constant dense<0.000000e+00> : vector<8xf32>
    %389 = vector.multi_reduction <add>, %388, %cst_94 [1] : vector<8x8xf32> to vector<8xf32>
    %390 = vector.shape_cast %389 : vector<8xf32> to vector<8x1xf32>
    %391 = tpu.concatenate %381, %22 in 1 : vector<8x8xf32>, vector<8x1xf32> -> vector<8x9xf32>
    %392 = tpu.concatenate %386, %22 in 1 : vector<8x8xf32>, vector<8x1xf32> -> vector<8x9xf32>
    %cst_95 = arith.constant dense<0.000000e+00> : vector<8x8xf32>
    %393 = tpu.matmul %391, %312, %cst_95 {dimension_numbers = #tpu.dot_dimension_numbers<[1], [1], [0], [0], [0, 0, 1, 0], [], []>} : vector<8x9xf32>, vector<8x9xf32>, vector<8x8xf32> -> vector<8x8xf32>
    %394 = vector.broadcast %390 : vector<8x1xf32> to vector<8x8xf32>
    %395 = arith.addf %394, %393 : vector<8x8xf32>
    %cst_96 = arith.constant dense<0.000000e+00> : vector<8x8xf32>
    %396 = tpu.matmul %392, %322, %cst_96 {dimension_numbers = #tpu.dot_dimension_numbers<[1], [1], [0], [0], [0, 0, 1, 0], [], []>} : vector<8x9xf32>, vector<8x9xf32>, vector<8x8xf32> -> vector<8x8xf32>
    %397 = vector.broadcast %323 : vector<8x1xf32> to vector<8x8xf32>
    %398 = arith.mulf %397, %396 : vector<8x8xf32>
    %399 = arith.addf %395, %398 : vector<8x8xf32>
    %cst_97 = arith.constant dense<0.000000e+00> : vector<8x8xf32>
    %400 = tpu.matmul %392, %333, %cst_97 {dimension_numbers = #tpu.dot_dimension_numbers<[1], [1], [0], [0], [0, 0, 1, 0], [], []>} : vector<8x9xf32>, vector<8x9xf32>, vector<8x8xf32> -> vector<8x8xf32>
    %401 = vector.broadcast %334 : vector<8x1xf32> to vector<8x8xf32>
    %402 = arith.mulf %401, %400 : vector<8x8xf32>
    %403 = arith.addf %399, %402 : vector<8x8xf32>
    %cst_98 = arith.constant dense<0.000000e+00> : vector<8x8xf32>
    %404 = tpu.matmul %392, %344, %cst_98 {dimension_numbers = #tpu.dot_dimension_numbers<[1], [1], [0], [0], [0, 0, 1, 0], [], []>} : vector<8x9xf32>, vector<8x9xf32>, vector<8x8xf32> -> vector<8x8xf32>
    %405 = vector.broadcast %345 : vector<8x1xf32> to vector<8x8xf32>
    %406 = arith.mulf %405, %404 : vector<8x8xf32>
    %407 = arith.addf %403, %406 : vector<8x8xf32>
    %408 = vector.broadcast %379 : vector<1x8xf32> to vector<8x8xf32>
    %409 = arith.mulf %408, %407 : vector<8x8xf32>
    %410 = arith.addf %378, %409 : vector<8x8xf32>
    %411 = vector.extract_strided_slice %3 {offsets = [2, 0], sizes = [1, 8], strides = [1, 1]} : vector<3x8xf32> to vector<1x8xf32>
    %412 = vector.extract_strided_slice %268 {offsets = [0, 16], sizes = [8, 8], strides = [1, 1]} : vector<8x24xf32> to vector<8x8xf32>
    %413 = arith.addf %244, %412 : vector<8x8xf32>
    %414 = vector.extract_strided_slice %287 {offsets = [0, 16], sizes = [8, 8], strides = [1, 1]} : vector<8x24xf32> to vector<8x8xf32>
    %415 = arith.addf %246, %414 : vector<8x8xf32>
    %cst_99 = arith.constant 1.000000e-24 : f32
    %416 = vector.broadcast %cst_99 : f32 to vector<8x8xf32>
    %417 = arith.maximumf %415, %416 : vector<8x8xf32>
    %418 = math.sqrt %417 : vector<8x8xf32>
    %419 = arith.mulf %413, %413 : vector<8x8xf32>
    %420 = arith.addf %419, %415 : vector<8x8xf32>
    %cst_100 = arith.constant dense<0.000000e+00> : vector<8xf32>
    %421 = vector.multi_reduction <add>, %420, %cst_100 [1] : vector<8x8xf32> to vector<8xf32>
    %422 = vector.shape_cast %421 : vector<8xf32> to vector<8x1xf32>
    %423 = tpu.concatenate %413, %22 in 1 : vector<8x8xf32>, vector<8x1xf32> -> vector<8x9xf32>
    %424 = tpu.concatenate %418, %22 in 1 : vector<8x8xf32>, vector<8x1xf32> -> vector<8x9xf32>
    %cst_101 = arith.constant dense<0.000000e+00> : vector<8x8xf32>
    %425 = tpu.matmul %423, %312, %cst_101 {dimension_numbers = #tpu.dot_dimension_numbers<[1], [1], [0], [0], [0, 0, 1, 0], [], []>} : vector<8x9xf32>, vector<8x9xf32>, vector<8x8xf32> -> vector<8x8xf32>
    %426 = vector.broadcast %422 : vector<8x1xf32> to vector<8x8xf32>
    %427 = arith.addf %426, %425 : vector<8x8xf32>
    %cst_102 = arith.constant dense<0.000000e+00> : vector<8x8xf32>
    %428 = tpu.matmul %424, %322, %cst_102 {dimension_numbers = #tpu.dot_dimension_numbers<[1], [1], [0], [0], [0, 0, 1, 0], [], []>} : vector<8x9xf32>, vector<8x9xf32>, vector<8x8xf32> -> vector<8x8xf32>
    %429 = vector.broadcast %323 : vector<8x1xf32> to vector<8x8xf32>
    %430 = arith.mulf %429, %428 : vector<8x8xf32>
    %431 = arith.addf %427, %430 : vector<8x8xf32>
    %cst_103 = arith.constant dense<0.000000e+00> : vector<8x8xf32>
    %432 = tpu.matmul %424, %333, %cst_103 {dimension_numbers = #tpu.dot_dimension_numbers<[1], [1], [0], [0], [0, 0, 1, 0], [], []>} : vector<8x9xf32>, vector<8x9xf32>, vector<8x8xf32> -> vector<8x8xf32>
    %433 = vector.broadcast %334 : vector<8x1xf32> to vector<8x8xf32>
    %434 = arith.mulf %433, %432 : vector<8x8xf32>
    %435 = arith.addf %431, %434 : vector<8x8xf32>
    %cst_104 = arith.constant dense<0.000000e+00> : vector<8x8xf32>
    %436 = tpu.matmul %424, %344, %cst_104 {dimension_numbers = #tpu.dot_dimension_numbers<[1], [1], [0], [0], [0, 0, 1, 0], [], []>} : vector<8x9xf32>, vector<8x9xf32>, vector<8x8xf32> -> vector<8x8xf32>
    %437 = vector.broadcast %345 : vector<8x1xf32> to vector<8x8xf32>
    %438 = arith.mulf %437, %436 : vector<8x8xf32>
    %439 = arith.addf %435, %438 : vector<8x8xf32>
    %440 = vector.broadcast %411 : vector<1x8xf32> to vector<8x8xf32>
    %441 = arith.mulf %440, %439 : vector<8x8xf32>
    %442 = arith.addf %410, %441 : vector<8x8xf32>
    %cst_105 = arith.constant -0.353553385 : f32
    %443 = vector.broadcast %cst_105 : f32 to vector<8x8xf32>
    %444 = arith.mulf %442, %443 : vector<8x8xf32>
    %cst_106 = arith.constant dense<0xFF800000> : vector<8xf32>
    %445 = vector.multi_reduction <maximumf>, %444, %cst_106 [1] : vector<8x8xf32> to vector<8xf32>
    %446 = vector.shape_cast %445 : vector<8xf32> to vector<8x1xf32>
    %447 = vector.broadcast %446 : vector<8x1xf32> to vector<8x8xf32>
    %448 = arith.subf %444, %447 : vector<8x8xf32>
    %449 = math.exp %448 : vector<8x8xf32>
    %cst_107 = arith.constant dense<0.000000e+00> : vector<8xf32>
    %450 = vector.multi_reduction <add>, %449, %cst_107 [1] : vector<8x8xf32> to vector<8xf32>
    %451 = vector.shape_cast %450 : vector<8xf32> to vector<8x1xf32>
    %452 = tpu.reciprocal %451 {approx = true} : vector<8x1xf32> -> vector<8x1xf32>
    %453 = arith.mulf %451, %452 : vector<8x1xf32>
    %cst_108 = arith.constant 2.000000e+00 : f32
    %454 = vector.broadcast %cst_108 : f32 to vector<8x1xf32>
    %455 = arith.subf %454, %453 : vector<8x1xf32>
    %456 = arith.mulf %452, %455 : vector<8x1xf32>
    %457 = vector.broadcast %456 : vector<8x1xf32> to vector<8x8xf32>
    %458 = arith.mulf %449, %457 : vector<8x8xf32>
    %c0_109 = arith.constant 0 : index
    %c1 = arith.constant 1 : index
    %c0_110 = arith.constant 0 : index
    %c0_111 = arith.constant 0 : index
    %459 = vector.load %arg14[%c0_109, %c1, %c0_110, %c0_111] : memref<1x4x8x8xf32, #tpu.memory_space<vmem>>, vector<1x1x8x8xf32>
    %460 = vector.shape_cast %459 : vector<1x1x8x8xf32> to vector<8x8xf32>
    %461 = vector.shape_cast %458 : vector<8x8xf32> to vector<1x1x8x8xf32>
    tpu.vector_store %arg14[%c0_109, %c1, %c0_110, %c0_111], %461 {strides = array<i32>} : memref<1x4x8x8xf32, #tpu.memory_space<vmem>>, vector<1x1x8x8xf32>,
    %cst_112 = arith.constant dense<0.000000e+00> : vector<8x8xf32>
    %462 = tpu.matmul %458, %248, %cst_112 {dimension_numbers = #tpu.dot_dimension_numbers<[1], [0], [0], [1], [0, 0, 1, 1], [], []>} : vector<8x8xf32>, vector<8x8xf32>, vector<8x8xf32> -> vector<8x8xf32>
    %463 = arith.mulf %458, %458 : vector<8x8xf32>
    %cst_113 = arith.constant dense<0.000000e+00> : vector<8x8xf32>
    %464 = tpu.matmul %463, %249, %cst_113 {dimension_numbers = #tpu.dot_dimension_numbers<[1], [0], [0], [1], [0, 0, 1, 1], [], []>} : vector<8x8xf32>, vector<8x8xf32>, vector<8x8xf32> -> vector<8x8xf32>
    %465 = vector.extract_strided_slice %5 {offsets = [0, 16], sizes = [8, 8], strides = [1, 1]} : vector<8x32xf32> to vector<8x8xf32>
    %466 = vector.extract_strided_slice %7 {offsets = [0, 16], sizes = [8, 8], strides = [1, 1]} : vector<8x32xf32> to vector<8x8xf32>
    %467 = vector.extract_strided_slice %9 {offsets = [0, 16], sizes = [8, 8], strides = [1, 1]} : vector<8x32xf32> to vector<8x8xf32>
    %468 = vector.extract_strided_slice %11 {offsets = [0, 16], sizes = [8, 8], strides = [1, 1]} : vector<8x32xf32> to vector<8x8xf32>
    %469 = vector.extract_strided_slice %13 {offsets = [0, 16], sizes = [8, 8], strides = [1, 1]} : vector<8x32xf32> to vector<8x8xf32>
    %470 = vector.extract_strided_slice %15 {offsets = [0, 16], sizes = [8, 8], strides = [1, 1]} : vector<8x32xf32> to vector<8x8xf32>
    %471 = vector.extract_strided_slice %17 {offsets = [2, 0, 0], sizes = [1, 3, 24], strides = [1, 1, 1]} : vector<4x3x24xf32> to vector<1x3x24xf32>
    %472 = vector.shape_cast %471 : vector<1x3x24xf32> to vector<3x24xf32>
    %473 = vector.extract_strided_slice %1 {offsets = [0, 0], sizes = [8, 1], strides = [1, 1]} : vector<8x3xf32> to vector<8x1xf32>
    %474 = vector.extract_strided_slice %472 {offsets = [0, 0], sizes = [1, 24], strides = [1, 1]} : vector<3x24xf32> to vector<1x24xf32>
    %475 = vector.broadcast %473 : vector<8x1xf32> to vector<8x24xf32>
    %476 = vector.broadcast %474 : vector<1x24xf32> to vector<8x24xf32>
    %477 = arith.mulf %475, %476 : vector<8x24xf32>
    %478 = vector.extract_strided_slice %1 {offsets = [0, 1], sizes = [8, 1], strides = [1, 1]} : vector<8x3xf32> to vector<8x1xf32>
    %479 = vector.extract_strided_slice %472 {offsets = [1, 0], sizes = [1, 24], strides = [1, 1]} : vector<3x24xf32> to vector<1x24xf32>
    %480 = vector.broadcast %478 : vector<8x1xf32> to vector<8x24xf32>
    %481 = vector.broadcast %479 : vector<1x24xf32> to vector<8x24xf32>
    %482 = arith.mulf %480, %481 : vector<8x24xf32>
    %483 = arith.addf %477, %482 : vector<8x24xf32>
    %484 = vector.extract_strided_slice %1 {offsets = [0, 2], sizes = [8, 1], strides = [1, 1]} : vector<8x3xf32> to vector<8x1xf32>
    %485 = vector.extract_strided_slice %472 {offsets = [2, 0], sizes = [1, 24], strides = [1, 1]} : vector<3x24xf32> to vector<1x24xf32>
    %486 = vector.broadcast %484 : vector<8x1xf32> to vector<8x24xf32>
    %487 = vector.broadcast %485 : vector<1x24xf32> to vector<8x24xf32>
    %488 = arith.mulf %486, %487 : vector<8x24xf32>
    %489 = arith.addf %483, %488 : vector<8x24xf32>
    %490 = vector.extract_strided_slice %19 {offsets = [2, 0, 0], sizes = [1, 3, 24], strides = [1, 1, 1]} : vector<4x3x24xf32> to vector<1x3x24xf32>
    %491 = vector.shape_cast %490 : vector<1x3x24xf32> to vector<3x24xf32>
    %492 = vector.extract_strided_slice %1 {offsets = [0, 0], sizes = [8, 1], strides = [1, 1]} : vector<8x3xf32> to vector<8x1xf32>
    %493 = vector.extract_strided_slice %491 {offsets = [0, 0], sizes = [1, 24], strides = [1, 1]} : vector<3x24xf32> to vector<1x24xf32>
    %494 = vector.broadcast %492 : vector<8x1xf32> to vector<8x24xf32>
    %495 = vector.broadcast %493 : vector<1x24xf32> to vector<8x24xf32>
    %496 = arith.mulf %494, %495 : vector<8x24xf32>
    %497 = vector.extract_strided_slice %1 {offsets = [0, 1], sizes = [8, 1], strides = [1, 1]} : vector<8x3xf32> to vector<8x1xf32>
    %498 = vector.extract_strided_slice %491 {offsets = [1, 0], sizes = [1, 24], strides = [1, 1]} : vector<3x24xf32> to vector<1x24xf32>
    %499 = vector.broadcast %497 : vector<8x1xf32> to vector<8x24xf32>
    %500 = vector.broadcast %498 : vector<1x24xf32> to vector<8x24xf32>
    %501 = arith.mulf %499, %500 : vector<8x24xf32>
    %502 = arith.addf %496, %501 : vector<8x24xf32>
    %503 = vector.extract_strided_slice %1 {offsets = [0, 2], sizes = [8, 1], strides = [1, 1]} : vector<8x3xf32> to vector<8x1xf32>
    %504 = vector.extract_strided_slice %491 {offsets = [2, 0], sizes = [1, 24], strides = [1, 1]} : vector<3x24xf32> to vector<1x24xf32>
    %505 = vector.broadcast %503 : vector<8x1xf32> to vector<8x24xf32>
    %506 = vector.broadcast %504 : vector<1x24xf32> to vector<8x24xf32>
    %507 = arith.mulf %505, %506 : vector<8x24xf32>
    %508 = arith.addf %502, %507 : vector<8x24xf32>
    %509 = vector.extract_strided_slice %21 {offsets = [2, 0, 0], sizes = [1, 3, 24], strides = [1, 1, 1]} : vector<4x3x24xf32> to vector<1x3x24xf32>
    %510 = vector.shape_cast %509 : vector<1x3x24xf32> to vector<3x24xf32>
    %511 = vector.extract_strided_slice %1 {offsets = [0, 0], sizes = [8, 1], strides = [1, 1]} : vector<8x3xf32> to vector<8x1xf32>
    %512 = vector.extract_strided_slice %510 {offsets = [0, 0], sizes = [1, 24], strides = [1, 1]} : vector<3x24xf32> to vector<1x24xf32>
    %513 = vector.broadcast %511 : vector<8x1xf32> to vector<8x24xf32>
    %514 = vector.broadcast %512 : vector<1x24xf32> to vector<8x24xf32>
    %515 = arith.mulf %513, %514 : vector<8x24xf32>
    %516 = vector.extract_strided_slice %1 {offsets = [0, 1], sizes = [8, 1], strides = [1, 1]} : vector<8x3xf32> to vector<8x1xf32>
    %517 = vector.extract_strided_slice %510 {offsets = [1, 0], sizes = [1, 24], strides = [1, 1]} : vector<3x24xf32> to vector<1x24xf32>
    %518 = vector.broadcast %516 : vector<8x1xf32> to vector<8x24xf32>
    %519 = vector.broadcast %517 : vector<1x24xf32> to vector<8x24xf32>
    %520 = arith.mulf %518, %519 : vector<8x24xf32>
    %521 = arith.addf %515, %520 : vector<8x24xf32>
    %522 = vector.extract_strided_slice %1 {offsets = [0, 2], sizes = [8, 1], strides = [1, 1]} : vector<8x3xf32> to vector<8x1xf32>
    %523 = vector.extract_strided_slice %510 {offsets = [2, 0], sizes = [1, 24], strides = [1, 1]} : vector<3x24xf32> to vector<1x24xf32>
    %524 = vector.broadcast %522 : vector<8x1xf32> to vector<8x24xf32>
    %525 = vector.broadcast %523 : vector<1x24xf32> to vector<8x24xf32>
    %526 = arith.mulf %524, %525 : vector<8x24xf32>
    %527 = arith.addf %521, %526 : vector<8x24xf32>
    %528 = arith.mulf %466, %466 : vector<8x8xf32>
    %cst_114 = arith.constant dense<0.000000e+00> : vector<8xf32>
    %529 = vector.multi_reduction <add>, %528, %cst_114 [1] : vector<8x8xf32> to vector<8xf32>
    %530 = vector.shape_cast %529 : vector<8xf32> to vector<8x1xf32>
    %cst_115 = arith.constant -2.000000e+00 : f32
    %531 = vector.broadcast %cst_115 : f32 to vector<8x8xf32>
    %532 = arith.mulf %531, %466 : vector<8x8xf32>
    %533 = tpu.concatenate %532, %530 in 1 : vector<8x8xf32>, vector<8x1xf32> -> vector<8x9xf32>
    %534 = vector.extract_strided_slice %527 {offsets = [0, 0], sizes = [8, 8], strides = [1, 1]} : vector<8x24xf32> to vector<8x8xf32>
    %535 = arith.addf %468, %534 : vector<8x8xf32>
    %cst_116 = arith.constant 1.000000e-24 : f32
    %536 = vector.broadcast %cst_116 : f32 to vector<8x8xf32>
    %537 = arith.maximumf %535, %536 : vector<8x8xf32>
    %538 = math.sqrt %537 : vector<8x8xf32>
    %cst_117 = arith.constant dense<0.000000e+00> : vector<8xf32>
    %539 = vector.multi_reduction <add>, %535, %cst_117 [1] : vector<8x8xf32> to vector<8xf32>
    %540 = vector.shape_cast %539 : vector<8xf32> to vector<8x1xf32>
    %cst_118 = arith.constant -2.000000e+00 : f32
    %541 = vector.broadcast %cst_118 : f32 to vector<8x8xf32>
    %542 = arith.mulf %541, %538 : vector<8x8xf32>
    %543 = tpu.concatenate %542, %540 in 1 : vector<8x8xf32>, vector<8x1xf32> -> vector<8x9xf32>
    %544 = vector.extract_strided_slice %1 {offsets = [0, 0], sizes = [8, 1], strides = [1, 1]} : vector<8x3xf32> to vector<8x1xf32>
    %545 = vector.extract_strided_slice %527 {offsets = [0, 8], sizes = [8, 8], strides = [1, 1]} : vector<8x24xf32> to vector<8x8xf32>
    %546 = arith.addf %468, %545 : vector<8x8xf32>
    %cst_119 = arith.constant 1.000000e-24 : f32
    %547 = vector.broadcast %cst_119 : f32 to vector<8x8xf32>
    %548 = arith.maximumf %546, %547 : vector<8x8xf32>
    %549 = math.sqrt %548 : vector<8x8xf32>
    %cst_120 = arith.constant dense<0.000000e+00> : vector<8xf32>
    %550 = vector.multi_reduction <add>, %546, %cst_120 [1] : vector<8x8xf32> to vector<8xf32>
    %551 = vector.shape_cast %550 : vector<8xf32> to vector<8x1xf32>
    %cst_121 = arith.constant -2.000000e+00 : f32
    %552 = vector.broadcast %cst_121 : f32 to vector<8x8xf32>
    %553 = arith.mulf %552, %549 : vector<8x8xf32>
    %554 = tpu.concatenate %553, %551 in 1 : vector<8x8xf32>, vector<8x1xf32> -> vector<8x9xf32>
    %555 = vector.extract_strided_slice %1 {offsets = [0, 1], sizes = [8, 1], strides = [1, 1]} : vector<8x3xf32> to vector<8x1xf32>
    %556 = vector.extract_strided_slice %527 {offsets = [0, 16], sizes = [8, 8], strides = [1, 1]} : vector<8x24xf32> to vector<8x8xf32>
    %557 = arith.addf %468, %556 : vector<8x8xf32>
    %cst_122 = arith.constant 1.000000e-24 : f32
    %558 = vector.broadcast %cst_122 : f32 to vector<8x8xf32>
    %559 = arith.maximumf %557, %558 : vector<8x8xf32>
    %560 = math.sqrt %559 : vector<8x8xf32>
    %cst_123 = arith.constant dense<0.000000e+00> : vector<8xf32>
    %561 = vector.multi_reduction <add>, %557, %cst_123 [1] : vector<8x8xf32> to vector<8xf32>
    %562 = vector.shape_cast %561 : vector<8xf32> to vector<8x1xf32>
    %cst_124 = arith.constant -2.000000e+00 : f32
    %563 = vector.broadcast %cst_124 : f32 to vector<8x8xf32>
    %564 = arith.mulf %563, %560 : vector<8x8xf32>
    %565 = tpu.concatenate %564, %562 in 1 : vector<8x8xf32>, vector<8x1xf32> -> vector<8x9xf32>
    %566 = vector.extract_strided_slice %1 {offsets = [0, 2], sizes = [8, 1], strides = [1, 1]} : vector<8x3xf32> to vector<8x1xf32>
    %cst_125 = arith.constant 0.000000e+00 : f32
    %567 = vector.broadcast %cst_125 : f32 to vector<8x8xf32>
    %568 = vector.extract_strided_slice %3 {offsets = [0, 0], sizes = [1, 8], strides = [1, 1]} : vector<3x8xf32> to vector<1x8xf32>
    %569 = vector.extract_strided_slice %489 {offsets = [0, 0], sizes = [8, 8], strides = [1, 1]} : vector<8x24xf32> to vector<8x8xf32>
    %570 = arith.addf %465, %569 : vector<8x8xf32>
    %571 = vector.extract_strided_slice %508 {offsets = [0, 0], sizes = [8, 8], strides = [1, 1]} : vector<8x24xf32> to vector<8x8xf32>
    %572 = arith.addf %467, %571 : vector<8x8xf32>
    %cst_126 = arith.constant 1.000000e-24 : f32
    %573 = vector.broadcast %cst_126 : f32 to vector<8x8xf32>
    %574 = arith.maximumf %572, %573 : vector<8x8xf32>
    %575 = math.sqrt %574 : vector<8x8xf32>
    %576 = arith.mulf %570, %570 : vector<8x8xf32>
    %577 = arith.addf %576, %572 : vector<8x8xf32>
    %cst_127 = arith.constant dense<0.000000e+00> : vector<8xf32>
    %578 = vector.multi_reduction <add>, %577, %cst_127 [1] : vector<8x8xf32> to vector<8xf32>
    %579 = vector.shape_cast %578 : vector<8xf32> to vector<8x1xf32>
    %580 = tpu.concatenate %570, %22 in 1 : vector<8x8xf32>, vector<8x1xf32> -> vector<8x9xf32>
    %581 = tpu.concatenate %575, %22 in 1 : vector<8x8xf32>, vector<8x1xf32> -> vector<8x9xf32>
    %cst_128 = arith.constant dense<0.000000e+00> : vector<8x8xf32>
    %582 = tpu.matmul %580, %533, %cst_128 {dimension_numbers = #tpu.dot_dimension_numbers<[1], [1], [0], [0], [0, 0, 1, 0], [], []>} : vector<8x9xf32>, vector<8x9xf32>, vector<8x8xf32> -> vector<8x8xf32>
    %583 = vector.broadcast %579 : vector<8x1xf32> to vector<8x8xf32>
    %584 = arith.addf %583, %582 : vector<8x8xf32>
    %cst_129 = arith.constant dense<0.000000e+00> : vector<8x8xf32>
    %585 = tpu.matmul %581, %543, %cst_129 {dimension_numbers = #tpu.dot_dimension_numbers<[1], [1], [0], [0], [0, 0, 1, 0], [], []>} : vector<8x9xf32>, vector<8x9xf32>, vector<8x8xf32> -> vector<8x8xf32>
    %586 = vector.broadcast %544 : vector<8x1xf32> to vector<8x8xf32>
    %587 = arith.mulf %586, %585 : vector<8x8xf32>
    %588 = arith.addf %584, %587 : vector<8x8xf32>
    %cst_130 = arith.constant dense<0.000000e+00> : vector<8x8xf32>
    %589 = tpu.matmul %581, %554, %cst_130 {dimension_numbers = #tpu.dot_dimension_numbers<[1], [1], [0], [0], [0, 0, 1, 0], [], []>} : vector<8x9xf32>, vector<8x9xf32>, vector<8x8xf32> -> vector<8x8xf32>
    %590 = vector.broadcast %555 : vector<8x1xf32> to vector<8x8xf32>
    %591 = arith.mulf %590, %589 : vector<8x8xf32>
    %592 = arith.addf %588, %591 : vector<8x8xf32>
    %cst_131 = arith.constant dense<0.000000e+00> : vector<8x8xf32>
    %593 = tpu.matmul %581, %565, %cst_131 {dimension_numbers = #tpu.dot_dimension_numbers<[1], [1], [0], [0], [0, 0, 1, 0], [], []>} : vector<8x9xf32>, vector<8x9xf32>, vector<8x8xf32> -> vector<8x8xf32>
    %594 = vector.broadcast %566 : vector<8x1xf32> to vector<8x8xf32>
    %595 = arith.mulf %594, %593 : vector<8x8xf32>
    %596 = arith.addf %592, %595 : vector<8x8xf32>
    %597 = vector.broadcast %568 : vector<1x8xf32> to vector<8x8xf32>
    %598 = arith.mulf %597, %596 : vector<8x8xf32>
    %599 = arith.addf %567, %598 : vector<8x8xf32>
    %600 = vector.extract_strided_slice %3 {offsets = [1, 0], sizes = [1, 8], strides = [1, 1]} : vector<3x8xf32> to vector<1x8xf32>
    %601 = vector.extract_strided_slice %489 {offsets = [0, 8], sizes = [8, 8], strides = [1, 1]} : vector<8x24xf32> to vector<8x8xf32>
    %602 = arith.addf %465, %601 : vector<8x8xf32>
    %603 = vector.extract_strided_slice %508 {offsets = [0, 8], sizes = [8, 8], strides = [1, 1]} : vector<8x24xf32> to vector<8x8xf32>
    %604 = arith.addf %467, %603 : vector<8x8xf32>
    %cst_132 = arith.constant 1.000000e-24 : f32
    %605 = vector.broadcast %cst_132 : f32 to vector<8x8xf32>
    %606 = arith.maximumf %604, %605 : vector<8x8xf32>
    %607 = math.sqrt %606 : vector<8x8xf32>
    %608 = arith.mulf %602, %602 : vector<8x8xf32>
    %609 = arith.addf %608, %604 : vector<8x8xf32>
    %cst_133 = arith.constant dense<0.000000e+00> : vector<8xf32>
    %610 = vector.multi_reduction <add>, %609, %cst_133 [1] : vector<8x8xf32> to vector<8xf32>
    %611 = vector.shape_cast %610 : vector<8xf32> to vector<8x1xf32>
    %612 = tpu.concatenate %602, %22 in 1 : vector<8x8xf32>, vector<8x1xf32> -> vector<8x9xf32>
    %613 = tpu.concatenate %607, %22 in 1 : vector<8x8xf32>, vector<8x1xf32> -> vector<8x9xf32>
    %cst_134 = arith.constant dense<0.000000e+00> : vector<8x8xf32>
    %614 = tpu.matmul %612, %533, %cst_134 {dimension_numbers = #tpu.dot_dimension_numbers<[1], [1], [0], [0], [0, 0, 1, 0], [], []>} : vector<8x9xf32>, vector<8x9xf32>, vector<8x8xf32> -> vector<8x8xf32>
    %615 = vector.broadcast %611 : vector<8x1xf32> to vector<8x8xf32>
    %616 = arith.addf %615, %614 : vector<8x8xf32>
    %cst_135 = arith.constant dense<0.000000e+00> : vector<8x8xf32>
    %617 = tpu.matmul %613, %543, %cst_135 {dimension_numbers = #tpu.dot_dimension_numbers<[1], [1], [0], [0], [0, 0, 1, 0], [], []>} : vector<8x9xf32>, vector<8x9xf32>, vector<8x8xf32> -> vector<8x8xf32>
    %618 = vector.broadcast %544 : vector<8x1xf32> to vector<8x8xf32>
    %619 = arith.mulf %618, %617 : vector<8x8xf32>
    %620 = arith.addf %616, %619 : vector<8x8xf32>
    %cst_136 = arith.constant dense<0.000000e+00> : vector<8x8xf32>
    %621 = tpu.matmul %613, %554, %cst_136 {dimension_numbers = #tpu.dot_dimension_numbers<[1], [1], [0], [0], [0, 0, 1, 0], [], []>} : vector<8x9xf32>, vector<8x9xf32>, vector<8x8xf32> -> vector<8x8xf32>
    %622 = vector.broadcast %555 : vector<8x1xf32> to vector<8x8xf32>
    %623 = arith.mulf %622, %621 : vector<8x8xf32>
    %624 = arith.addf %620, %623 : vector<8x8xf32>
    %cst_137 = arith.constant dense<0.000000e+00> : vector<8x8xf32>
    %625 = tpu.matmul %613, %565, %cst_137 {dimension_numbers = #tpu.dot_dimension_numbers<[1], [1], [0], [0], [0, 0, 1, 0], [], []>} : vector<8x9xf32>, vector<8x9xf32>, vector<8x8xf32> -> vector<8x8xf32>
    %626 = vector.broadcast %566 : vector<8x1xf32> to vector<8x8xf32>
    %627 = arith.mulf %626, %625 : vector<8x8xf32>
    %628 = arith.addf %624, %627 : vector<8x8xf32>
    %629 = vector.broadcast %600 : vector<1x8xf32> to vector<8x8xf32>
    %630 = arith.mulf %629, %628 : vector<8x8xf32>
    %631 = arith.addf %599, %630 : vector<8x8xf32>
    %632 = vector.extract_strided_slice %3 {offsets = [2, 0], sizes = [1, 8], strides = [1, 1]} : vector<3x8xf32> to vector<1x8xf32>
    %633 = vector.extract_strided_slice %489 {offsets = [0, 16], sizes = [8, 8], strides = [1, 1]} : vector<8x24xf32> to vector<8x8xf32>
    %634 = arith.addf %465, %633 : vector<8x8xf32>
    %635 = vector.extract_strided_slice %508 {offsets = [0, 16], sizes = [8, 8], strides = [1, 1]} : vector<8x24xf32> to vector<8x8xf32>
    %636 = arith.addf %467, %635 : vector<8x8xf32>
    %cst_138 = arith.constant 1.000000e-24 : f32
    %637 = vector.broadcast %cst_138 : f32 to vector<8x8xf32>
    %638 = arith.maximumf %636, %637 : vector<8x8xf32>
    %639 = math.sqrt %638 : vector<8x8xf32>
    %640 = arith.mulf %634, %634 : vector<8x8xf32>
    %641 = arith.addf %640, %636 : vector<8x8xf32>
    %cst_139 = arith.constant dense<0.000000e+00> : vector<8xf32>
    %642 = vector.multi_reduction <add>, %641, %cst_139 [1] : vector<8x8xf32> to vector<8xf32>
    %643 = vector.shape_cast %642 : vector<8xf32> to vector<8x1xf32>
    %644 = tpu.concatenate %634, %22 in 1 : vector<8x8xf32>, vector<8x1xf32> -> vector<8x9xf32>
    %645 = tpu.concatenate %639, %22 in 1 : vector<8x8xf32>, vector<8x1xf32> -> vector<8x9xf32>
    %cst_140 = arith.constant dense<0.000000e+00> : vector<8x8xf32>
    %646 = tpu.matmul %644, %533, %cst_140 {dimension_numbers = #tpu.dot_dimension_numbers<[1], [1], [0], [0], [0, 0, 1, 0], [], []>} : vector<8x9xf32>, vector<8x9xf32>, vector<8x8xf32> -> vector<8x8xf32>
    %647 = vector.broadcast %643 : vector<8x1xf32> to vector<8x8xf32>
    %648 = arith.addf %647, %646 : vector<8x8xf32>
    %cst_141 = arith.constant dense<0.000000e+00> : vector<8x8xf32>
    %649 = tpu.matmul %645, %543, %cst_141 {dimension_numbers = #tpu.dot_dimension_numbers<[1], [1], [0], [0], [0, 0, 1, 0], [], []>} : vector<8x9xf32>, vector<8x9xf32>, vector<8x8xf32> -> vector<8x8xf32>
    %650 = vector.broadcast %544 : vector<8x1xf32> to vector<8x8xf32>
    %651 = arith.mulf %650, %649 : vector<8x8xf32>
    %652 = arith.addf %648, %651 : vector<8x8xf32>
    %cst_142 = arith.constant dense<0.000000e+00> : vector<8x8xf32>
    %653 = tpu.matmul %645, %554, %cst_142 {dimension_numbers = #tpu.dot_dimension_numbers<[1], [1], [0], [0], [0, 0, 1, 0], [], []>} : vector<8x9xf32>, vector<8x9xf32>, vector<8x8xf32> -> vector<8x8xf32>
    %654 = vector.broadcast %555 : vector<8x1xf32> to vector<8x8xf32>
    %655 = arith.mulf %654, %653 : vector<8x8xf32>
    %656 = arith.addf %652, %655 : vector<8x8xf32>
    %cst_143 = arith.constant dense<0.000000e+00> : vector<8x8xf32>
    %657 = tpu.matmul %645, %565, %cst_143 {dimension_numbers = #tpu.dot_dimension_numbers<[1], [1], [0], [0], [0, 0, 1, 0], [], []>} : vector<8x9xf32>, vector<8x9xf32>, vector<8x8xf32> -> vector<8x8xf32>
    %658 = vector.broadcast %566 : vector<8x1xf32> to vector<8x8xf32>
    %659 = arith.mulf %658, %657 : vector<8x8xf32>
    %660 = arith.addf %656, %659 : vector<8x8xf32>
    %661 = vector.broadcast %632 : vector<1x8xf32> to vector<8x8xf32>
    %662 = arith.mulf %661, %660 : vector<8x8xf32>
    %663 = arith.addf %631, %662 : vector<8x8xf32>
    %cst_144 = arith.constant -0.353553385 : f32
    %664 = vector.broadcast %cst_144 : f32 to vector<8x8xf32>
    %665 = arith.mulf %663, %664 : vector<8x8xf32>
    %cst_145 = arith.constant dense<0xFF800000> : vector<8xf32>
    %666 = vector.multi_reduction <maximumf>, %665, %cst_145 [1] : vector<8x8xf32> to vector<8xf32>
    %667 = vector.shape_cast %666 : vector<8xf32> to vector<8x1xf32>
    %668 = vector.broadcast %667 : vector<8x1xf32> to vector<8x8xf32>
    %669 = arith.subf %665, %668 : vector<8x8xf32>
    %670 = math.exp %669 : vector<8x8xf32>
    %cst_146 = arith.constant dense<0.000000e+00> : vector<8xf32>
    %671 = vector.multi_reduction <add>, %670, %cst_146 [1] : vector<8x8xf32> to vector<8xf32>
    %672 = vector.shape_cast %671 : vector<8xf32> to vector<8x1xf32>
    %673 = tpu.reciprocal %672 {approx = true} : vector<8x1xf32> -> vector<8x1xf32>
    %674 = arith.mulf %672, %673 : vector<8x1xf32>
    %cst_147 = arith.constant 2.000000e+00 : f32
    %675 = vector.broadcast %cst_147 : f32 to vector<8x1xf32>
    %676 = arith.subf %675, %674 : vector<8x1xf32>
    %677 = arith.mulf %673, %676 : vector<8x1xf32>
    %678 = vector.broadcast %677 : vector<8x1xf32> to vector<8x8xf32>
    %679 = arith.mulf %670, %678 : vector<8x8xf32>
    %c0_148 = arith.constant 0 : index
    %c2 = arith.constant 2 : index
    %c0_149 = arith.constant 0 : index
    %c0_150 = arith.constant 0 : index
    %680 = vector.load %arg14[%c0_148, %c2, %c0_149, %c0_150] : memref<1x4x8x8xf32, #tpu.memory_space<vmem>>, vector<1x1x8x8xf32>
    %681 = vector.shape_cast %680 : vector<1x1x8x8xf32> to vector<8x8xf32>
    %682 = vector.shape_cast %679 : vector<8x8xf32> to vector<1x1x8x8xf32>
    tpu.vector_store %arg14[%c0_148, %c2, %c0_149, %c0_150], %682 {strides = array<i32>} : memref<1x4x8x8xf32, #tpu.memory_space<vmem>>, vector<1x1x8x8xf32>,
    %cst_151 = arith.constant dense<0.000000e+00> : vector<8x8xf32>
    %683 = tpu.matmul %679, %469, %cst_151 {dimension_numbers = #tpu.dot_dimension_numbers<[1], [0], [0], [1], [0, 0, 1, 1], [], []>} : vector<8x8xf32>, vector<8x8xf32>, vector<8x8xf32> -> vector<8x8xf32>
    %684 = arith.mulf %679, %679 : vector<8x8xf32>
    %cst_152 = arith.constant dense<0.000000e+00> : vector<8x8xf32>
    %685 = tpu.matmul %684, %470, %cst_152 {dimension_numbers = #tpu.dot_dimension_numbers<[1], [0], [0], [1], [0, 0, 1, 1], [], []>} : vector<8x8xf32>, vector<8x8xf32>, vector<8x8xf32> -> vector<8x8xf32>
    %686 = vector.extract_strided_slice %5 {offsets = [0, 24], sizes = [8, 8], strides = [1, 1]} : vector<8x32xf32> to vector<8x8xf32>
    %687 = vector.extract_strided_slice %7 {offsets = [0, 24], sizes = [8, 8], strides = [1, 1]} : vector<8x32xf32> to vector<8x8xf32>
    %688 = vector.extract_strided_slice %9 {offsets = [0, 24], sizes = [8, 8], strides = [1, 1]} : vector<8x32xf32> to vector<8x8xf32>
    %689 = vector.extract_strided_slice %11 {offsets = [0, 24], sizes = [8, 8], strides = [1, 1]} : vector<8x32xf32> to vector<8x8xf32>
    %690 = vector.extract_strided_slice %13 {offsets = [0, 24], sizes = [8, 8], strides = [1, 1]} : vector<8x32xf32> to vector<8x8xf32>
    %691 = vector.extract_strided_slice %15 {offsets = [0, 24], sizes = [8, 8], strides = [1, 1]} : vector<8x32xf32> to vector<8x8xf32>
    %692 = vector.extract_strided_slice %17 {offsets = [3, 0, 0], sizes = [1, 3, 24], strides = [1, 1, 1]} : vector<4x3x24xf32> to vector<1x3x24xf32>
    %693 = vector.shape_cast %692 : vector<1x3x24xf32> to vector<3x24xf32>
    %694 = vector.extract_strided_slice %1 {offsets = [0, 0], sizes = [8, 1], strides = [1, 1]} : vector<8x3xf32> to vector<8x1xf32>
    %695 = vector.extract_strided_slice %693 {offsets = [0, 0], sizes = [1, 24], strides = [1, 1]} : vector<3x24xf32> to vector<1x24xf32>
    %696 = vector.broadcast %694 : vector<8x1xf32> to vector<8x24xf32>
    %697 = vector.broadcast %695 : vector<1x24xf32> to vector<8x24xf32>
    %698 = arith.mulf %696, %697 : vector<8x24xf32>
    %699 = vector.extract_strided_slice %1 {offsets = [0, 1], sizes = [8, 1], strides = [1, 1]} : vector<8x3xf32> to vector<8x1xf32>
    %700 = vector.extract_strided_slice %693 {offsets = [1, 0], sizes = [1, 24], strides = [1, 1]} : vector<3x24xf32> to vector<1x24xf32>
    %701 = vector.broadcast %699 : vector<8x1xf32> to vector<8x24xf32>
    %702 = vector.broadcast %700 : vector<1x24xf32> to vector<8x24xf32>
    %703 = arith.mulf %701, %702 : vector<8x24xf32>
    %704 = arith.addf %698, %703 : vector<8x24xf32>
    %705 = vector.extract_strided_slice %1 {offsets = [0, 2], sizes = [8, 1], strides = [1, 1]} : vector<8x3xf32> to vector<8x1xf32>
    %706 = vector.extract_strided_slice %693 {offsets = [2, 0], sizes = [1, 24], strides = [1, 1]} : vector<3x24xf32> to vector<1x24xf32>
    %707 = vector.broadcast %705 : vector<8x1xf32> to vector<8x24xf32>
    %708 = vector.broadcast %706 : vector<1x24xf32> to vector<8x24xf32>
    %709 = arith.mulf %707, %708 : vector<8x24xf32>
    %710 = arith.addf %704, %709 : vector<8x24xf32>
    %711 = vector.extract_strided_slice %19 {offsets = [3, 0, 0], sizes = [1, 3, 24], strides = [1, 1, 1]} : vector<4x3x24xf32> to vector<1x3x24xf32>
    %712 = vector.shape_cast %711 : vector<1x3x24xf32> to vector<3x24xf32>
    %713 = vector.extract_strided_slice %1 {offsets = [0, 0], sizes = [8, 1], strides = [1, 1]} : vector<8x3xf32> to vector<8x1xf32>
    %714 = vector.extract_strided_slice %712 {offsets = [0, 0], sizes = [1, 24], strides = [1, 1]} : vector<3x24xf32> to vector<1x24xf32>
    %715 = vector.broadcast %713 : vector<8x1xf32> to vector<8x24xf32>
    %716 = vector.broadcast %714 : vector<1x24xf32> to vector<8x24xf32>
    %717 = arith.mulf %715, %716 : vector<8x24xf32>
    %718 = vector.extract_strided_slice %1 {offsets = [0, 1], sizes = [8, 1], strides = [1, 1]} : vector<8x3xf32> to vector<8x1xf32>
    %719 = vector.extract_strided_slice %712 {offsets = [1, 0], sizes = [1, 24], strides = [1, 1]} : vector<3x24xf32> to vector<1x24xf32>
    %720 = vector.broadcast %718 : vector<8x1xf32> to vector<8x24xf32>
    %721 = vector.broadcast %719 : vector<1x24xf32> to vector<8x24xf32>
    %722 = arith.mulf %720, %721 : vector<8x24xf32>
    %723 = arith.addf %717, %722 : vector<8x24xf32>
    %724 = vector.extract_strided_slice %1 {offsets = [0, 2], sizes = [8, 1], strides = [1, 1]} : vector<8x3xf32> to vector<8x1xf32>
    %725 = vector.extract_strided_slice %712 {offsets = [2, 0], sizes = [1, 24], strides = [1, 1]} : vector<3x24xf32> to vector<1x24xf32>
    %726 = vector.broadcast %724 : vector<8x1xf32> to vector<8x24xf32>
    %727 = vector.broadcast %725 : vector<1x24xf32> to vector<8x24xf32>
    %728 = arith.mulf %726, %727 : vector<8x24xf32>
    %729 = arith.addf %723, %728 : vector<8x24xf32>
    %730 = vector.extract_strided_slice %21 {offsets = [3, 0, 0], sizes = [1, 3, 24], strides = [1, 1, 1]} : vector<4x3x24xf32> to vector<1x3x24xf32>
    %731 = vector.shape_cast %730 : vector<1x3x24xf32> to vector<3x24xf32>
    %732 = vector.extract_strided_slice %1 {offsets = [0, 0], sizes = [8, 1], strides = [1, 1]} : vector<8x3xf32> to vector<8x1xf32>
    %733 = vector.extract_strided_slice %731 {offsets = [0, 0], sizes = [1, 24], strides = [1, 1]} : vector<3x24xf32> to vector<1x24xf32>
    %734 = vector.broadcast %732 : vector<8x1xf32> to vector<8x24xf32>
    %735 = vector.broadcast %733 : vector<1x24xf32> to vector<8x24xf32>
    %736 = arith.mulf %734, %735 : vector<8x24xf32>
    %737 = vector.extract_strided_slice %1 {offsets = [0, 1], sizes = [8, 1], strides = [1, 1]} : vector<8x3xf32> to vector<8x1xf32>
    %738 = vector.extract_strided_slice %731 {offsets = [1, 0], sizes = [1, 24], strides = [1, 1]} : vector<3x24xf32> to vector<1x24xf32>
    %739 = vector.broadcast %737 : vector<8x1xf32> to vector<8x24xf32>
    %740 = vector.broadcast %738 : vector<1x24xf32> to vector<8x24xf32>
    %741 = arith.mulf %739, %740 : vector<8x24xf32>
    %742 = arith.addf %736, %741 : vector<8x24xf32>
    %743 = vector.extract_strided_slice %1 {offsets = [0, 2], sizes = [8, 1], strides = [1, 1]} : vector<8x3xf32> to vector<8x1xf32>
    %744 = vector.extract_strided_slice %731 {offsets = [2, 0], sizes = [1, 24], strides = [1, 1]} : vector<3x24xf32> to vector<1x24xf32>
    %745 = vector.broadcast %743 : vector<8x1xf32> to vector<8x24xf32>
    %746 = vector.broadcast %744 : vector<1x24xf32> to vector<8x24xf32>
    %747 = arith.mulf %745, %746 : vector<8x24xf32>
    %748 = arith.addf %742, %747 : vector<8x24xf32>
    %749 = arith.mulf %687, %687 : vector<8x8xf32>
    %cst_153 = arith.constant dense<0.000000e+00> : vector<8xf32>
    %750 = vector.multi_reduction <add>, %749, %cst_153 [1] : vector<8x8xf32> to vector<8xf32>
    %751 = vector.shape_cast %750 : vector<8xf32> to vector<8x1xf32>
    %cst_154 = arith.constant -2.000000e+00 : f32
    %752 = vector.broadcast %cst_154 : f32 to vector<8x8xf32>
    %753 = arith.mulf %752, %687 : vector<8x8xf32>
    %754 = tpu.concatenate %753, %751 in 1 : vector<8x8xf32>, vector<8x1xf32> -> vector<8x9xf32>
    %755 = vector.extract_strided_slice %748 {offsets = [0, 0], sizes = [8, 8], strides = [1, 1]} : vector<8x24xf32> to vector<8x8xf32>
    %756 = arith.addf %689, %755 : vector<8x8xf32>
    %cst_155 = arith.constant 1.000000e-24 : f32
    %757 = vector.broadcast %cst_155 : f32 to vector<8x8xf32>
    %758 = arith.maximumf %756, %757 : vector<8x8xf32>
    %759 = math.sqrt %758 : vector<8x8xf32>
    %cst_156 = arith.constant dense<0.000000e+00> : vector<8xf32>
    %760 = vector.multi_reduction <add>, %756, %cst_156 [1] : vector<8x8xf32> to vector<8xf32>
    %761 = vector.shape_cast %760 : vector<8xf32> to vector<8x1xf32>
    %cst_157 = arith.constant -2.000000e+00 : f32
    %762 = vector.broadcast %cst_157 : f32 to vector<8x8xf32>
    %763 = arith.mulf %762, %759 : vector<8x8xf32>
    %764 = tpu.concatenate %763, %761 in 1 : vector<8x8xf32>, vector<8x1xf32> -> vector<8x9xf32>
    %765 = vector.extract_strided_slice %1 {offsets = [0, 0], sizes = [8, 1], strides = [1, 1]} : vector<8x3xf32> to vector<8x1xf32>
    %766 = vector.extract_strided_slice %748 {offsets = [0, 8], sizes = [8, 8], strides = [1, 1]} : vector<8x24xf32> to vector<8x8xf32>
    %767 = arith.addf %689, %766 : vector<8x8xf32>
    %cst_158 = arith.constant 1.000000e-24 : f32
    %768 = vector.broadcast %cst_158 : f32 to vector<8x8xf32>
    %769 = arith.maximumf %767, %768 : vector<8x8xf32>
    %770 = math.sqrt %769 : vector<8x8xf32>
    %cst_159 = arith.constant dense<0.000000e+00> : vector<8xf32>
    %771 = vector.multi_reduction <add>, %767, %cst_159 [1] : vector<8x8xf32> to vector<8xf32>
    %772 = vector.shape_cast %771 : vector<8xf32> to vector<8x1xf32>
    %cst_160 = arith.constant -2.000000e+00 : f32
    %773 = vector.broadcast %cst_160 : f32 to vector<8x8xf32>
    %774 = arith.mulf %773, %770 : vector<8x8xf32>
    %775 = tpu.concatenate %774, %772 in 1 : vector<8x8xf32>, vector<8x1xf32> -> vector<8x9xf32>
    %776 = vector.extract_strided_slice %1 {offsets = [0, 1], sizes = [8, 1], strides = [1, 1]} : vector<8x3xf32> to vector<8x1xf32>
    %777 = vector.extract_strided_slice %748 {offsets = [0, 16], sizes = [8, 8], strides = [1, 1]} : vector<8x24xf32> to vector<8x8xf32>
    %778 = arith.addf %689, %777 : vector<8x8xf32>
    %cst_161 = arith.constant 1.000000e-24 : f32
    %779 = vector.broadcast %cst_161 : f32 to vector<8x8xf32>
    %780 = arith.maximumf %778, %779 : vector<8x8xf32>
    %781 = math.sqrt %780 : vector<8x8xf32>
    %cst_162 = arith.constant dense<0.000000e+00> : vector<8xf32>
    %782 = vector.multi_reduction <add>, %778, %cst_162 [1] : vector<8x8xf32> to vector<8xf32>
    %783 = vector.shape_cast %782 : vector<8xf32> to vector<8x1xf32>
    %cst_163 = arith.constant -2.000000e+00 : f32
    %784 = vector.broadcast %cst_163 : f32 to vector<8x8xf32>
    %785 = arith.mulf %784, %781 : vector<8x8xf32>
    %786 = tpu.concatenate %785, %783 in 1 : vector<8x8xf32>, vector<8x1xf32> -> vector<8x9xf32>
    %787 = vector.extract_strided_slice %1 {offsets = [0, 2], sizes = [8, 1], strides = [1, 1]} : vector<8x3xf32> to vector<8x1xf32>
    %cst_164 = arith.constant 0.000000e+00 : f32
    %788 = vector.broadcast %cst_164 : f32 to vector<8x8xf32>
    %789 = vector.extract_strided_slice %3 {offsets = [0, 0], sizes = [1, 8], strides = [1, 1]} : vector<3x8xf32> to vector<1x8xf32>
    %790 = vector.extract_strided_slice %710 {offsets = [0, 0], sizes = [8, 8], strides = [1, 1]} : vector<8x24xf32> to vector<8x8xf32>
    %791 = arith.addf %686, %790 : vector<8x8xf32>
    %792 = vector.extract_strided_slice %729 {offsets = [0, 0], sizes = [8, 8], strides = [1, 1]} : vector<8x24xf32> to vector<8x8xf32>
    %793 = arith.addf %688, %792 : vector<8x8xf32>
    %cst_165 = arith.constant 1.000000e-24 : f32
    %794 = vector.broadcast %cst_165 : f32 to vector<8x8xf32>
    %795 = arith.maximumf %793, %794 : vector<8x8xf32>
    %796 = math.sqrt %795 : vector<8x8xf32>
    %797 = arith.mulf %791, %791 : vector<8x8xf32>
    %798 = arith.addf %797, %793 : vector<8x8xf32>
    %cst_166 = arith.constant dense<0.000000e+00> : vector<8xf32>
    %799 = vector.multi_reduction <add>, %798, %cst_166 [1] : vector<8x8xf32> to vector<8xf32>
    %800 = vector.shape_cast %799 : vector<8xf32> to vector<8x1xf32>
    %801 = tpu.concatenate %791, %22 in 1 : vector<8x8xf32>, vector<8x1xf32> -> vector<8x9xf32>
    %802 = tpu.concatenate %796, %22 in 1 : vector<8x8xf32>, vector<8x1xf32> -> vector<8x9xf32>
    %cst_167 = arith.constant dense<0.000000e+00> : vector<8x8xf32>
    %803 = tpu.matmul %801, %754, %cst_167 {dimension_numbers = #tpu.dot_dimension_numbers<[1], [1], [0], [0], [0, 0, 1, 0], [], []>} : vector<8x9xf32>, vector<8x9xf32>, vector<8x8xf32> -> vector<8x8xf32>
    %804 = vector.broadcast %800 : vector<8x1xf32> to vector<8x8xf32>
    %805 = arith.addf %804, %803 : vector<8x8xf32>
    %cst_168 = arith.constant dense<0.000000e+00> : vector<8x8xf32>
    %806 = tpu.matmul %802, %764, %cst_168 {dimension_numbers = #tpu.dot_dimension_numbers<[1], [1], [0], [0], [0, 0, 1, 0], [], []>} : vector<8x9xf32>, vector<8x9xf32>, vector<8x8xf32> -> vector<8x8xf32>
    %807 = vector.broadcast %765 : vector<8x1xf32> to vector<8x8xf32>
    %808 = arith.mulf %807, %806 : vector<8x8xf32>
    %809 = arith.addf %805, %808 : vector<8x8xf32>
    %cst_169 = arith.constant dense<0.000000e+00> : vector<8x8xf32>
    %810 = tpu.matmul %802, %775, %cst_169 {dimension_numbers = #tpu.dot_dimension_numbers<[1], [1], [0], [0], [0, 0, 1, 0], [], []>} : vector<8x9xf32>, vector<8x9xf32>, vector<8x8xf32> -> vector<8x8xf32>
    %811 = vector.broadcast %776 : vector<8x1xf32> to vector<8x8xf32>
    %812 = arith.mulf %811, %810 : vector<8x8xf32>
    %813 = arith.addf %809, %812 : vector<8x8xf32>
    %cst_170 = arith.constant dense<0.000000e+00> : vector<8x8xf32>
    %814 = tpu.matmul %802, %786, %cst_170 {dimension_numbers = #tpu.dot_dimension_numbers<[1], [1], [0], [0], [0, 0, 1, 0], [], []>} : vector<8x9xf32>, vector<8x9xf32>, vector<8x8xf32> -> vector<8x8xf32>
    %815 = vector.broadcast %787 : vector<8x1xf32> to vector<8x8xf32>
    %816 = arith.mulf %815, %814 : vector<8x8xf32>
    %817 = arith.addf %813, %816 : vector<8x8xf32>
    %818 = vector.broadcast %789 : vector<1x8xf32> to vector<8x8xf32>
    %819 = arith.mulf %818, %817 : vector<8x8xf32>
    %820 = arith.addf %788, %819 : vector<8x8xf32>
    %821 = vector.extract_strided_slice %3 {offsets = [1, 0], sizes = [1, 8], strides = [1, 1]} : vector<3x8xf32> to vector<1x8xf32>
    %822 = vector.extract_strided_slice %710 {offsets = [0, 8], sizes = [8, 8], strides = [1, 1]} : vector<8x24xf32> to vector<8x8xf32>
    %823 = arith.addf %686, %822 : vector<8x8xf32>
    %824 = vector.extract_strided_slice %729 {offsets = [0, 8], sizes = [8, 8], strides = [1, 1]} : vector<8x24xf32> to vector<8x8xf32>
    %825 = arith.addf %688, %824 : vector<8x8xf32>
    %cst_171 = arith.constant 1.000000e-24 : f32
    %826 = vector.broadcast %cst_171 : f32 to vector<8x8xf32>
    %827 = arith.maximumf %825, %826 : vector<8x8xf32>
    %828 = math.sqrt %827 : vector<8x8xf32>
    %829 = arith.mulf %823, %823 : vector<8x8xf32>
    %830 = arith.addf %829, %825 : vector<8x8xf32>
    %cst_172 = arith.constant dense<0.000000e+00> : vector<8xf32>
    %831 = vector.multi_reduction <add>, %830, %cst_172 [1] : vector<8x8xf32> to vector<8xf32>
    %832 = vector.shape_cast %831 : vector<8xf32> to vector<8x1xf32>
    %833 = tpu.concatenate %823, %22 in 1 : vector<8x8xf32>, vector<8x1xf32> -> vector<8x9xf32>
    %834 = tpu.concatenate %828, %22 in 1 : vector<8x8xf32>, vector<8x1xf32> -> vector<8x9xf32>
    %cst_173 = arith.constant dense<0.000000e+00> : vector<8x8xf32>
    %835 = tpu.matmul %833, %754, %cst_173 {dimension_numbers = #tpu.dot_dimension_numbers<[1], [1], [0], [0], [0, 0, 1, 0], [], []>} : vector<8x9xf32>, vector<8x9xf32>, vector<8x8xf32> -> vector<8x8xf32>
    %836 = vector.broadcast %832 : vector<8x1xf32> to vector<8x8xf32>
    %837 = arith.addf %836, %835 : vector<8x8xf32>
    %cst_174 = arith.constant dense<0.000000e+00> : vector<8x8xf32>
    %838 = tpu.matmul %834, %764, %cst_174 {dimension_numbers = #tpu.dot_dimension_numbers<[1], [1], [0], [0], [0, 0, 1, 0], [], []>} : vector<8x9xf32>, vector<8x9xf32>, vector<8x8xf32> -> vector<8x8xf32>
    %839 = vector.broadcast %765 : vector<8x1xf32> to vector<8x8xf32>
    %840 = arith.mulf %839, %838 : vector<8x8xf32>
    %841 = arith.addf %837, %840 : vector<8x8xf32>
    %cst_175 = arith.constant dense<0.000000e+00> : vector<8x8xf32>
    %842 = tpu.matmul %834, %775, %cst_175 {dimension_numbers = #tpu.dot_dimension_numbers<[1], [1], [0], [0], [0, 0, 1, 0], [], []>} : vector<8x9xf32>, vector<8x9xf32>, vector<8x8xf32> -> vector<8x8xf32>
    %843 = vector.broadcast %776 : vector<8x1xf32> to vector<8x8xf32>
    %844 = arith.mulf %843, %842 : vector<8x8xf32>
    %845 = arith.addf %841, %844 : vector<8x8xf32>
    %cst_176 = arith.constant dense<0.000000e+00> : vector<8x8xf32>
    %846 = tpu.matmul %834, %786, %cst_176 {dimension_numbers = #tpu.dot_dimension_numbers<[1], [1], [0], [0], [0, 0, 1, 0], [], []>} : vector<8x9xf32>, vector<8x9xf32>, vector<8x8xf32> -> vector<8x8xf32>
    %847 = vector.broadcast %787 : vector<8x1xf32> to vector<8x8xf32>
    %848 = arith.mulf %847, %846 : vector<8x8xf32>
    %849 = arith.addf %845, %848 : vector<8x8xf32>
    %850 = vector.broadcast %821 : vector<1x8xf32> to vector<8x8xf32>
    %851 = arith.mulf %850, %849 : vector<8x8xf32>
    %852 = arith.addf %820, %851 : vector<8x8xf32>
    %853 = vector.extract_strided_slice %3 {offsets = [2, 0], sizes = [1, 8], strides = [1, 1]} : vector<3x8xf32> to vector<1x8xf32>
    %854 = vector.extract_strided_slice %710 {offsets = [0, 16], sizes = [8, 8], strides = [1, 1]} : vector<8x24xf32> to vector<8x8xf32>
    %855 = arith.addf %686, %854 : vector<8x8xf32>
    %856 = vector.extract_strided_slice %729 {offsets = [0, 16], sizes = [8, 8], strides = [1, 1]} : vector<8x24xf32> to vector<8x8xf32>
    %857 = arith.addf %688, %856 : vector<8x8xf32>
    %cst_177 = arith.constant 1.000000e-24 : f32
    %858 = vector.broadcast %cst_177 : f32 to vector<8x8xf32>
    %859 = arith.maximumf %857, %858 : vector<8x8xf32>
    %860 = math.sqrt %859 : vector<8x8xf32>
    %861 = arith.mulf %855, %855 : vector<8x8xf32>
    %862 = arith.addf %861, %857 : vector<8x8xf32>
    %cst_178 = arith.constant dense<0.000000e+00> : vector<8xf32>
    %863 = vector.multi_reduction <add>, %862, %cst_178 [1] : vector<8x8xf32> to vector<8xf32>
    %864 = vector.shape_cast %863 : vector<8xf32> to vector<8x1xf32>
    %865 = tpu.concatenate %855, %22 in 1 : vector<8x8xf32>, vector<8x1xf32> -> vector<8x9xf32>
    %866 = tpu.concatenate %860, %22 in 1 : vector<8x8xf32>, vector<8x1xf32> -> vector<8x9xf32>
    %cst_179 = arith.constant dense<0.000000e+00> : vector<8x8xf32>
    %867 = tpu.matmul %865, %754, %cst_179 {dimension_numbers = #tpu.dot_dimension_numbers<[1], [1], [0], [0], [0, 0, 1, 0], [], []>} : vector<8x9xf32>, vector<8x9xf32>, vector<8x8xf32> -> vector<8x8xf32>
    %868 = vector.broadcast %864 : vector<8x1xf32> to vector<8x8xf32>
    %869 = arith.addf %868, %867 : vector<8x8xf32>
    %cst_180 = arith.constant dense<0.000000e+00> : vector<8x8xf32>
    %870 = tpu.matmul %866, %764, %cst_180 {dimension_numbers = #tpu.dot_dimension_numbers<[1], [1], [0], [0], [0, 0, 1, 0], [], []>} : vector<8x9xf32>, vector<8x9xf32>, vector<8x8xf32> -> vector<8x8xf32>
    %871 = vector.broadcast %765 : vector<8x1xf32> to vector<8x8xf32>
    %872 = arith.mulf %871, %870 : vector<8x8xf32>
    %873 = arith.addf %869, %872 : vector<8x8xf32>
    %cst_181 = arith.constant dense<0.000000e+00> : vector<8x8xf32>
    %874 = tpu.matmul %866, %775, %cst_181 {dimension_numbers = #tpu.dot_dimension_numbers<[1], [1], [0], [0], [0, 0, 1, 0], [], []>} : vector<8x9xf32>, vector<8x9xf32>, vector<8x8xf32> -> vector<8x8xf32>
    %875 = vector.broadcast %776 : vector<8x1xf32> to vector<8x8xf32>
    %876 = arith.mulf %875, %874 : vector<8x8xf32>
    %877 = arith.addf %873, %876 : vector<8x8xf32>
    %cst_182 = arith.constant dense<0.000000e+00> : vector<8x8xf32>
    %878 = tpu.matmul %866, %786, %cst_182 {dimension_numbers = #tpu.dot_dimension_numbers<[1], [1], [0], [0], [0, 0, 1, 0], [], []>} : vector<8x9xf32>, vector<8x9xf32>, vector<8x8xf32> -> vector<8x8xf32>
    %879 = vector.broadcast %787 : vector<8x1xf32> to vector<8x8xf32>
    %880 = arith.mulf %879, %878 : vector<8x8xf32>
    %881 = arith.addf %877, %880 : vector<8x8xf32>
    %882 = vector.broadcast %853 : vector<1x8xf32> to vector<8x8xf32>
    %883 = arith.mulf %882, %881 : vector<8x8xf32>
    %884 = arith.addf %852, %883 : vector<8x8xf32>
    %cst_183 = arith.constant -0.353553385 : f32
    %885 = vector.broadcast %cst_183 : f32 to vector<8x8xf32>
    %886 = arith.mulf %884, %885 : vector<8x8xf32>
    %cst_184 = arith.constant dense<0xFF800000> : vector<8xf32>
    %887 = vector.multi_reduction <maximumf>, %886, %cst_184 [1] : vector<8x8xf32> to vector<8xf32>
    %888 = vector.shape_cast %887 : vector<8xf32> to vector<8x1xf32>
    %889 = vector.broadcast %888 : vector<8x1xf32> to vector<8x8xf32>
    %890 = arith.subf %886, %889 : vector<8x8xf32>
    %891 = math.exp %890 : vector<8x8xf32>
    %cst_185 = arith.constant dense<0.000000e+00> : vector<8xf32>
    %892 = vector.multi_reduction <add>, %891, %cst_185 [1] : vector<8x8xf32> to vector<8xf32>
    %893 = vector.shape_cast %892 : vector<8xf32> to vector<8x1xf32>
    %894 = tpu.reciprocal %893 {approx = true} : vector<8x1xf32> -> vector<8x1xf32>
    %895 = arith.mulf %893, %894 : vector<8x1xf32>
    %cst_186 = arith.constant 2.000000e+00 : f32
    %896 = vector.broadcast %cst_186 : f32 to vector<8x1xf32>
    %897 = arith.subf %896, %895 : vector<8x1xf32>
    %898 = arith.mulf %894, %897 : vector<8x1xf32>
    %899 = vector.broadcast %898 : vector<8x1xf32> to vector<8x8xf32>
    %900 = arith.mulf %891, %899 : vector<8x8xf32>
    %c0_187 = arith.constant 0 : index
    %c3 = arith.constant 3 : index
    %c0_188 = arith.constant 0 : index
    %c0_189 = arith.constant 0 : index
    %901 = vector.load %arg14[%c0_187, %c3, %c0_188, %c0_189] : memref<1x4x8x8xf32, #tpu.memory_space<vmem>>, vector<1x1x8x8xf32>
    %902 = vector.shape_cast %901 : vector<1x1x8x8xf32> to vector<8x8xf32>
    %903 = vector.shape_cast %900 : vector<8x8xf32> to vector<1x1x8x8xf32>
    tpu.vector_store %arg14[%c0_187, %c3, %c0_188, %c0_189], %903 {strides = array<i32>} : memref<1x4x8x8xf32, #tpu.memory_space<vmem>>, vector<1x1x8x8xf32>,
    %cst_190 = arith.constant dense<0.000000e+00> : vector<8x8xf32>
    %904 = tpu.matmul %900, %690, %cst_190 {dimension_numbers = #tpu.dot_dimension_numbers<[1], [0], [0], [1], [0, 0, 1, 1], [], []>} : vector<8x8xf32>, vector<8x8xf32>, vector<8x8xf32> -> vector<8x8xf32>
    %905 = arith.mulf %900, %900 : vector<8x8xf32>
    %cst_191 = arith.constant dense<0.000000e+00> : vector<8x8xf32>
    %906 = tpu.matmul %905, %691, %cst_191 {dimension_numbers = #tpu.dot_dimension_numbers<[1], [0], [0], [1], [0, 0, 1, 1], [], []>} : vector<8x8xf32>, vector<8x8xf32>, vector<8x8xf32> -> vector<8x8xf32>
    %907 = tpu.concatenate %241, %462, %683, %904 in 1 : vector<8x8xf32>, vector<8x8xf32>, vector<8x8xf32>, vector<8x8xf32> -> vector<8x32xf32>
    %c0_192 = arith.constant 0 : index
    %c0_193 = arith.constant 0 : index
    %c0_194 = arith.constant 0 : index
    %908 = vector.load %arg12[%c0_192, %c0_193, %c0_194] : memref<1x8x32xf32, #tpu.memory_space<vmem>>, vector<1x8x32xf32>
    %909 = vector.shape_cast %908 : vector<1x8x32xf32> to vector<8x32xf32>
    %910 = vector.shape_cast %907 : vector<8x32xf32> to vector<1x8x32xf32>
    tpu.vector_store %arg12[%c0_192, %c0_193, %c0_194], %910 {strides = array<i32>} : memref<1x8x32xf32, #tpu.memory_space<vmem>>, vector<1x8x32xf32>,
    %911 = tpu.concatenate %243, %464, %685, %906 in 1 : vector<8x8xf32>, vector<8x8xf32>, vector<8x8xf32>, vector<8x8xf32> -> vector<8x32xf32>
    %c0_195 = arith.constant 0 : index
    %c0_196 = arith.constant 0 : index
    %c0_197 = arith.constant 0 : index
    %912 = vector.load %arg13[%c0_195, %c0_196, %c0_197] : memref<1x8x32xf32, #tpu.memory_space<vmem>>, vector<1x8x32xf32>
    %913 = vector.shape_cast %912 : vector<1x8x32xf32> to vector<8x32xf32>
    %914 = vector.shape_cast %911 : vector<8x32xf32> to vector<1x8x32xf32>
    tpu.vector_store %arg13[%c0_195, %c0_196, %c0_197], %914 {strides = array<i32>} : memref<1x8x32xf32, #tpu.memory_space<vmem>>, vector<1x8x32xf32>,
    return
  }
  func.func @transform_0(%arg0: i32) -> (i32, i32, i32) {
    %c0_i32 = arith.constant 0 : i32
    %c0_i32_0 = arith.constant 0 : i32
    %c0_i32_1 = arith.constant 0 : i32
    return %arg0, %c0_i32, %c0_i32_0 : i32, i32, i32
  }
  func.func @transform_1(%arg0: i32) -> (i32, i32, i32) {
    %c0_i32 = arith.constant 0 : i32
    %c0_i32_0 = arith.constant 0 : i32
    %c0_i32_1 = arith.constant 0 : i32
    return %arg0, %c0_i32, %c0_i32_0 : i32, i32, i32
  }
  func.func @transform_2(%arg0: i32) -> (i32, i32, i32) {
    %c0_i32 = arith.constant 0 : i32
    %c0_i32_0 = arith.constant 0 : i32
    %c0_i32_1 = arith.constant 0 : i32
    return %arg0, %c0_i32, %c0_i32_0 : i32, i32, i32
  }
  func.func @transform_3(%arg0: i32) -> (i32, i32, i32) {
    %c0_i32 = arith.constant 0 : i32
    %c0_i32_0 = arith.constant 0 : i32
    %c0_i32_1 = arith.constant 0 : i32
    return %arg0, %c0_i32, %c0_i32_0 : i32, i32, i32
  }
  func.func @transform_4(%arg0: i32) -> (i32, i32, i32) {
    %c0_i32 = arith.constant 0 : i32
    %c0_i32_0 = arith.constant 0 : i32
    %c0_i32_1 = arith.constant 0 : i32
    return %arg0, %c0_i32, %c0_i32_0 : i32, i32, i32
  }
  func.func @transform_5(%arg0: i32) -> (i32, i32, i32) {
    %c0_i32 = arith.constant 0 : i32
    %c0_i32_0 = arith.constant 0 : i32
    %c0_i32_1 = arith.constant 0 : i32
    return %arg0, %c0_i32, %c0_i32_0 : i32, i32, i32
  }
  func.func @transform_6(%arg0: i32) -> (i32, i32, i32, i32) {
    %c0_i32 = arith.constant 0 : i32
    %c0_i32_0 = arith.constant 0 : i32
    %c0_i32_1 = arith.constant 0 : i32
    %c0_i32_2 = arith.constant 0 : i32
    return %arg0, %c0_i32, %c0_i32_0, %c0_i32_1 : i32, i32, i32, i32
  }
  func.func @transform_7(%arg0: i32) -> (i32, i32, i32, i32) {
    %c0_i32 = arith.constant 0 : i32
    %c0_i32_0 = arith.constant 0 : i32
    %c0_i32_1 = arith.constant 0 : i32
    %c0_i32_2 = arith.constant 0 : i32
    return %arg0, %c0_i32, %c0_i32_0, %c0_i32_1 : i32, i32, i32, i32
  }
  func.func @transform_8(%arg0: i32) -> (i32, i32, i32, i32) {
    %c0_i32 = arith.constant 0 : i32
    %c0_i32_0 = arith.constant 0 : i32
    %c0_i32_1 = arith.constant 0 : i32
    %c0_i32_2 = arith.constant 0 : i32
    return %arg0, %c0_i32, %c0_i32_0, %c0_i32_1 : i32, i32, i32, i32
  }
  func.func @transform_9(%arg0: i32) -> (i32, i32, i32) {
    %c0_i32 = arith.constant 0 : i32
    %c0_i32_0 = arith.constant 0 : i32
    %c0_i32_1 = arith.constant 0 : i32
    return %arg0, %c0_i32, %c0_i32_0 : i32, i32, i32
  }
  func.func @transform_10(%arg0: i32) -> (i32, i32, i32) {
    %c0_i32 = arith.constant 0 : i32
    %c0_i32_0 = arith.constant 0 : i32
    %c0_i32_1 = arith.constant 0 : i32
    return %arg0, %c0_i32, %c0_i32_0 : i32, i32, i32
  }
  func.func @transform_11(%arg0: i32) -> (i32, i32, i32) {
    %c0_i32 = arith.constant 0 : i32
    %c0_i32_0 = arith.constant 0 : i32
    %c0_i32_1 = arith.constant 0 : i32
    return %arg0, %c0_i32, %c0_i32_0 : i32, i32, i32
  }
  func.func @transform_12(%arg0: i32) -> (i32, i32, i32) {
    %c0_i32 = arith.constant 0 : i32
    %c0_i32_0 = arith.constant 0 : i32
    %c0_i32_1 = arith.constant 0 : i32
    return %arg0, %c0_i32, %c0_i32_0 : i32, i32, i32
  }
  func.func @transform_13(%arg0: i32) -> (i32, i32, i32, i32) {
    %c0_i32 = arith.constant 0 : i32
    %c0_i32_0 = arith.constant 0 : i32
    %c0_i32_1 = arith.constant 0 : i32
    %c0_i32_2 = arith.constant 0 : i32
    return %arg0, %c0_i32, %c0_i32_0, %c0_i32_1 : i32, i32, i32, i32
  }
}

</mosaic_0001>

<llo_original>
// kernel: tpu_custom_call.1
$region0: #{tpu_custom_call.1}
  #allocation0 [shape = 'u32[]', space=smem, size = 0x4, offset = 0x4, fixed_abs, tag = 'smem constant byte address 0x4 - core index']
  #allocation1 [shape = 'u32[72,128]{1,0:T(1,128)}', space=vmem, size = 0x9000, scoped, tag = 'internal scratch']
  %s0 = inlined_call_operand.vmem [shape: f32[2,8,32], index: 0, kind: input, shape index: {}]
  %s1 = inlined_call_operand.vmem [shape: f32[2,8,32], index: 1, kind: input, shape index: {}]
  %s2 = inlined_call_operand.vmem [shape: f32[2,8,32], index: 2, kind: input, shape index: {}]
  %s3 = inlined_call_operand.vmem [shape: f32[2,8,32], index: 3, kind: input, shape index: {}]
  %s4 = inlined_call_operand.vmem [shape: f32[2,8,32], index: 4, kind: input, shape index: {}]
  %s5 = inlined_call_operand.vmem [shape: f32[2,8,32], index: 5, kind: input, shape index: {}]
  %s6 = inlined_call_operand.vmem [shape: f32[2,4,3,24], index: 6, kind: input, shape index: {}]
  %s7 = inlined_call_operand.vmem [shape: f32[2,4,3,24], index: 7, kind: input, shape index: {}]
  %s8 = inlined_call_operand.vmem [shape: f32[2,4,3,24], index: 8, kind: input, shape index: {}]
  %s9 = inlined_call_operand.vmem [shape: f32[2,8,3], index: 9, kind: input, shape index: {}]
  %s10 = inlined_call_operand.vmem [shape: f32[2,3,8], index: 10, kind: input, shape index: {}]
  %s11 = inlined_call_operand.hbm [shape: f32[2,8,32], index: 11, kind: output, shape index: {0}]
  %s12 = inlined_call_operand.hbm [shape: f32[2,8,32], index: 12, kind: output, shape index: {1}]
  %s13 = inlined_call_operand.hbm [shape: f32[2,4,8,8], index: 13, kind: output, shape index: {2}]
  %14 = xla_tuple %s11, %s12, %s13
  %s15 = sld [smem:[#allocation0]]
  $region93: #{tpu_custom_call.1} parent=0
    _
  %s17 = ssub.s32 1, %s15
  %s18 = scalar_select 0, %s17, %s15
  $region1: #{tpu_custom_call.1} parent=0
    #allocation2 [shape = 'u8[8192]{0}', space=vmem, size = 0x2000, scoped, tag = 'output window, operand 0']
    #allocation3 [shape = 's32[2]{0}', space=sflag, size = 0x8, scoped, tag = 'scoped memory for tpu_custom_call.1']
    #allocation4 [shape = 'u8[8192]{0}', space=vmem, size = 0x2000, scoped, tag = 'output window, operand 1']
    #allocation5 [shape = 's32[2]{0}', space=sflag, size = 0x8, scoped, tag = 'scoped memory for tpu_custom_call.1']
    #allocation6 [shape = 'u8[32768]{0}', space=vmem, size = 0x8000, scoped, tag = 'output window, operand 2']
    %19 = vsyncpa [#allocation3], 0
    %s20 = scalar_lea.sflag [#allocation3], 1
    %21 = vsyncpa %s20, 0
    %22 = vsyncpa [#allocation5], 0
    %s23 = scalar_lea.sflag [#allocation5], 1
    %24 = vsyncpa %s23, 0
    loop: start=0, step=1, limit=4
    $region2: #{tpu_custom_call.1} parent=1 // loop_pre_header
      _
    $region3: #{tpu_custom_call.1} parent=1 // loop_header
      %s26 = sphi 0, %s30
      %p27 = scmp.ge.s32.totalorder %s26, 4
      %s36 = sphi 0, %s38
      %s39 = sphi 0, %s36
      %s40 = sphi 0, %s39
      %s56 = sphi 0, %s40
      %s62 = sphi 0, %s64
      %s65 = sphi 0, %s62
      %s66 = sphi 0, %s65
      %s82 = sphi 0, %s66
      %s88 = sphi 0, %s90
      %s91 = sphi 0, %s88
      %s92 = sphi 0, %s91
      %s108 = sphi 0, %s92
      %s114 = sphi 0, %s116
      %s117 = sphi 0, %s114
      %s118 = sphi 0, %s117
      %s134 = sphi 0, %s118
      %s140 = sphi 0, %s142
      %s143 = sphi 0, %s140
      %s144 = sphi 0, %s143
      %s160 = sphi 0, %s144
      %s166 = sphi 0, %s168
      %s169 = sphi 0, %s166
      %s170 = sphi 0, %s169
      %s186 = sphi 0, %s170
      %s192 = sphi 0, %s194
      %s195 = sphi 0, %s192
      %s196 = sphi 0, %s195
      %s212 = sphi 0, %s196
      %s218 = sphi 0, %s220
      %s221 = sphi 0, %s218
      %s222 = sphi 0, %s221
      %s238 = sphi 0, %s222
      %s244 = sphi 0, %s246
      %s247 = sphi 0, %s244
      %s248 = sphi 0, %s247
      %s264 = sphi 0, %s248
      %s270 = sphi 0, %s272
      %s273 = sphi 0, %s270
      %s274 = sphi 0, %s273
      %s290 = sphi 0, %s274
      %s296 = sphi 0, %s298
      %s299 = sphi 0, %s296
      %s300 = sphi 0, %s299
      %s316 = sphi 0, %s300
      %s322 = sphi 0, %s324
      %s325 = sphi 0, %s322
      %s326 = sphi 0, %s325
      %s342 = sphi 0, %s326
      %s348 = sphi 0, %s350
      %s351 = sphi 0, %s348
      %s352 = sphi 0, %s351
      %s368 = sphi 0, %s352
      %s374 = sphi 0, %s376
      %s377 = sphi 0, %s374
      %s378 = sphi 0, %s377
      %s394 = sphi 0, %s378
    $region4: #{tpu_custom_call.1} parent=1 // loop_header_branch
      %29 = sbr.rel (%p27) target = $region8
    $region5: #{tpu_custom_call.1} parent=1 // loop_body
      %s31 = ssub.s32 %s26, 1
      %s32 = ssub.s32 %s26, 2
      %s33 = sadd.s32 %s26, 1
      %s34 = ssub.s32 %s26, %s33
      %p35 = scmp.eq.s32.totalorder %s34, 0
      %s37 = sadd.s32 %s36, 1
      %s38 = scalar_select %p35, %s36, %s37
      %p41 = pneg %p35
      %p42 = scmp.eq.s32.totalorder %s26, 1
      %p43 = por %p41, %p42
      %p44 = scmp.ne.s32.totalorder %s36, %s39
      %p45 = scmp.eq.s32.totalorder %s26, 0
      %p46 = por %p44, %p45
      %p47 = scmp.ne.s32.totalorder %s36, %s39
      %p48 = scmp.eq.s32.totalorder %s31, 1
      %p49 = por %p47, %p48
      %p50 = scmp.ne.s32.totalorder %s39, %s40
      %p51 = scmp.eq.s32.totalorder %s31, 0
      %p52 = por %p50, %p51
      %p53 = scmp.ne.s32.totalorder %s39, %s40
      %p54 = scmp.eq.s32.totalorder %s32, 1
      %p55 = por %p53, %p54
      %p57 = scmp.ne.s32.totalorder %s40, %s56
      %p58 = scmp.eq.s32.totalorder %s32, 0
      %p59 = por %p57, %p58
      %s60 = ssub.s32 %s26, %s33
      %p61 = scmp.eq.s32.totalorder %s60, 0
      %s63 = sadd.s32 %s62, 1
      %s64 = scalar_select %p61, %s62, %s63
      %p67 = pneg %p61
      %p68 = scmp.eq.s32.totalorder %s26, 1
      %p69 = por %p67, %p68
      %p70 = scmp.ne.s32.totalorder %s62, %s65
      %p71 = scmp.eq.s32.totalorder %s26, 0
      %p72 = por %p70, %p71
      %p73 = scmp.ne.s32.totalorder %s62, %s65
      %p74 = scmp.eq.s32.totalorder %s31, 1
      %p75 = por %p73, %p74
      %p76 = scmp.ne.s32.totalorder %s65, %s66
      %p77 = scmp.eq.s32.totalorder %s31, 0
      %p78 = por %p76, %p77
      %p79 = scmp.ne.s32.totalorder %s65, %s66
      %p80 = scmp.eq.s32.totalorder %s32, 1
      %p81 = por %p79, %p80
      %p83 = scmp.ne.s32.totalorder %s66, %s82
      %p84 = scmp.eq.s32.totalorder %s32, 0
      %p85 = por %p83, %p84
      %s86 = ssub.s32 %s26, %s33
      %p87 = scmp.eq.s32.totalorder %s86, 0
      %s89 = sadd.s32 %s88, 1
      %s90 = scalar_select %p87, %s88, %s89
      %p93 = pneg %p87
      %p94 = scmp.eq.s32.totalorder %s26, 1
      %p95 = por %p93, %p94
      %p96 = scmp.ne.s32.totalorder %s88, %s91
      %p97 = scmp.eq.s32.totalorder %s26, 0
      %p98 = por %p96, %p97
      %p99 = scmp.ne.s32.totalorder %s88, %s91
      %p100 = scmp.eq.s32.totalorder %s31, 1
      %p101 = por %p99, %p100
      %p102 = scmp.ne.s32.totalorder %s91, %s92
      %p103 = scmp.eq.s32.totalorder %s31, 0
      %p104 = por %p102, %p103
      %p105 = scmp.ne.s32.totalorder %s91, %s92
      %p106 = scmp.eq.s32.totalorder %s32, 1
      %p107 = por %p105, %p106
      %p109 = scmp.ne.s32.totalorder %s92, %s108
      %p110 = scmp.eq.s32.totalorder %s32, 0
      %p111 = por %p109, %p110
      %s112 = ssub.s32 %s26, %s33
      %p113 = scmp.eq.s32.totalorder %s112, 0
      %s115 = sadd.s32 %s114, 1
      %s116 = scalar_select %p113, %s114, %s115
      %p119 = pneg %p113
      %p120 = scmp.eq.s32.totalorder %s26, 1
      %p121 = por %p119, %p120
      %p122 = scmp.ne.s32.totalorder %s114, %s117
      %p123 = scmp.eq.s32.totalorder %s26, 0
      %p124 = por %p122, %p123
      %p125 = scmp.ne.s32.totalorder %s114, %s117
      %p126 = scmp.eq.s32.totalorder %s31, 1
      %p127 = por %p125, %p126
      %p128 = scmp.ne.s32.totalorder %s117, %s118
      %p129 = scmp.eq.s32.totalorder %s31, 0
      %p130 = por %p128, %p129
      %p131 = scmp.ne.s32.totalorder %s117, %s118
      %p132 = scmp.eq.s32.totalorder %s32, 1
      %p133 = por %p131, %p132
      %p135 = scmp.ne.s32.totalorder %s118, %s134
      %p136 = scmp.eq.s32.totalorder %s32, 0
      %p137 = por %p135, %p136
      %s138 = ssub.s32 %s26, %s33
      %p139 = scmp.eq.s32.totalorder %s138, 0
      %s141 = sadd.s32 %s140, 1
      %s142 = scalar_select %p139, %s140, %s141
      %p145 = pneg %p139
      %p146 = scmp.eq.s32.totalorder %s26, 1
      %p147 = por %p145, %p146
      %p148 = scmp.ne.s32.totalorder %s140, %s143
      %p149 = scmp.eq.s32.totalorder %s26, 0
      %p150 = por %p148, %p149
      %p151 = scmp.ne.s32.totalorder %s140, %s143
      %p152 = scmp.eq.s32.totalorder %s31, 1
      %p153 = por %p151, %p152
      %p154 = scmp.ne.s32.totalorder %s143, %s144
      %p155 = scmp.eq.s32.totalorder %s31, 0
      %p156 = por %p154, %p155
      %p157 = scmp.ne.s32.totalorder %s143, %s144
      %p158 = scmp.eq.s32.totalorder %s32, 1
      %p159 = por %p157, %p158
      %p161 = scmp.ne.s32.totalorder %s144, %s160
      %p162 = scmp.eq.s32.totalorder %s32, 0
      %p163 = por %p161, %p162
      %s164 = ssub.s32 %s26, %s33
      %p165 = scmp.eq.s32.totalorder %s164, 0
      %s167 = sadd.s32 %s166, 1
      %s168 = scalar_select %p165, %s166, %s167
      %p171 = pneg %p165
      %p172 = scmp.eq.s32.totalorder %s26, 1
      %p173 = por %p171, %p172
      %p174 = scmp.ne.s32.totalorder %s166, %s169
      %p175 = scmp.eq.s32.totalorder %s26, 0
      %p176 = por %p174, %p175
      %p177 = scmp.ne.s32.totalorder %s166, %s169
      %p178 = scmp.eq.s32.totalorder %s31, 1
      %p179 = por %p177, %p178
      %p180 = scmp.ne.s32.totalorder %s169, %s170
      %p181 = scmp.eq.s32.totalorder %s31, 0
      %p182 = por %p180, %p181
      %p183 = scmp.ne.s32.totalorder %s169, %s170
      %p184 = scmp.eq.s32.totalorder %s32, 1
      %p185 = por %p183, %p184
      %p187 = scmp.ne.s32.totalorder %s170, %s186
      %p188 = scmp.eq.s32.totalorder %s32, 0
      %p189 = por %p187, %p188
      %s190 = ssub.s32 %s26, %s33
      %p191 = scmp.eq.s32.totalorder %s190, 0
      %s193 = sadd.s32 %s192, 1
      %s194 = scalar_select %p191, %s192, %s193
      %p197 = pneg %p191
      %p198 = scmp.eq.s32.totalorder %s26, 1
      %p199 = por %p197, %p198
      %p200 = scmp.ne.s32.totalorder %s192, %s195
      %p201 = scmp.eq.s32.totalorder %s26, 0
      %p202 = por %p200, %p201
      %p203 = scmp.ne.s32.totalorder %s192, %s195
      %p204 = scmp.eq.s32.totalorder %s31, 1
      %p205 = por %p203, %p204
      %p206 = scmp.ne.s32.totalorder %s195, %s196
      %p207 = scmp.eq.s32.totalorder %s31, 0
      %p208 = por %p206, %p207
      %p209 = scmp.ne.s32.totalorder %s195, %s196
      %p210 = scmp.eq.s32.totalorder %s32, 1
      %p211 = por %p209, %p210
      %p213 = scmp.ne.s32.totalorder %s196, %s212
      %p214 = scmp.eq.s32.totalorder %s32, 0
      %p215 = por %p213, %p214
      %s216 = ssub.s32 %s26, %s33
      %p217 = scmp.eq.s32.totalorder %s216, 0
      %s219 = sadd.s32 %s218, 1
      %s220 = scalar_select %p217, %s218, %s219
      %p223 = pneg %p217
      %p224 = scmp.eq.s32.totalorder %s26, 1
      %p225 = por %p223, %p224
      %p226 = scmp.ne.s32.totalorder %s218, %s221
      %p227 = scmp.eq.s32.totalorder %s26, 0
      %p228 = por %p226, %p227
      %p229 = scmp.ne.s32.totalorder %s218, %s221
      %p230 = scmp.eq.s32.totalorder %s31, 1
      %p231 = por %p229, %p230
      %p232 = scmp.ne.s32.totalorder %s221, %s222
      %p233 = scmp.eq.s32.totalorder %s31, 0
      %p234 = por %p232, %p233
      %p235 = scmp.ne.s32.totalorder %s221, %s222
      %p236 = scmp.eq.s32.totalorder %s32, 1
      %p237 = por %p235, %p236
      %p239 = scmp.ne.s32.totalorder %s222, %s238
      %p240 = scmp.eq.s32.totalorder %s32, 0
      %p241 = por %p239, %p240
      %s242 = ssub.s32 %s26, %s33
      %p243 = scmp.eq.s32.totalorder %s242, 0
      %s245 = sadd.s32 %s244, 1
      %s246 = scalar_select %p243, %s244, %s245
      %p249 = pneg %p243
      %p250 = scmp.eq.s32.totalorder %s26, 1
      %p251 = por %p249, %p250
      %p252 = scmp.ne.s32.totalorder %s244, %s247
      %p253 = scmp.eq.s32.totalorder %s26, 0
      %p254 = por %p252, %p253
      %p255 = scmp.ne.s32.totalorder %s244, %s247
      %p256 = scmp.eq.s32.totalorder %s31, 1
      %p257 = por %p255, %p256
      %p258 = scmp.ne.s32.totalorder %s247, %s248
      %p259 = scmp.eq.s32.totalorder %s31, 0
      %p260 = por %p258, %p259
      %p261 = scmp.ne.s32.totalorder %s247, %s248
      %p262 = scmp.eq.s32.totalorder %s32, 1
      %p263 = por %p261, %p262
      %p265 = scmp.ne.s32.totalorder %s248, %s264
      %p266 = scmp.eq.s32.totalorder %s32, 0
      %p267 = por %p265, %p266
      %s268 = ssub.s32 %s26, %s33
      %p269 = scmp.eq.s32.totalorder %s268, 0
      %s271 = sadd.s32 %s270, 1
      %s272 = scalar_select %p269, %s270, %s271
      %p275 = pneg %p269
      %p276 = scmp.eq.s32.totalorder %s26, 1
      %p277 = por %p275, %p276
      %p278 = scmp.ne.s32.totalorder %s270, %s273
      %p279 = scmp.eq.s32.totalorder %s26, 0
      %p280 = por %p278, %p279
      %p281 = scmp.ne.s32.totalorder %s270, %s273
      %p282 = scmp.eq.s32.totalorder %s31, 1
      %p283 = por %p281, %p282
      %p284 = scmp.ne.s32.totalorder %s273, %s274
      %p285 = scmp.eq.s32.totalorder %s31, 0
      %p286 = por %p284, %p285
      %p287 = scmp.ne.s32.totalorder %s273, %s274
      %p288 = scmp.eq.s32.totalorder %s32, 1
      %p289 = por %p287, %p288
      %p291 = scmp.ne.s32.totalorder %s274, %s290
      %p292 = scmp.eq.s32.totalorder %s32, 0
      %p293 = por %p291, %p292
      %s294 = ssub.s32 %s26, %s33
      %p295 = scmp.eq.s32.totalorder %s294, 0
      %s297 = sadd.s32 %s296, 1
      %s298 = scalar_select %p295, %s296, %s297
      %p301 = pneg %p295
      %p302 = scmp.eq.s32.totalorder %s26, 1
      %p303 = por %p301, %p302
      %p304 = scmp.ne.s32.totalorder %s296, %s299
      %p305 = scmp.eq.s32.totalorder %s26, 0
      %p306 = por %p304, %p305
      %p307 = scmp.ne.s32.totalorder %s296, %s299
      %p308 = scmp.eq.s32.totalorder %s31, 1
      %p309 = por %p307, %p308
      %p310 = scmp.ne.s32.totalorder %s299, %s300
      %p311 = scmp.eq.s32.totalorder %s31, 0
      %p312 = por %p310, %p311
      %p313 = scmp.ne.s32.totalorder %s299, %s300
      %p314 = scmp.eq.s32.totalorder %s32, 1
      %p315 = por %p313, %p314
      %p317 = scmp.ne.s32.totalorder %s300, %s316
      %p318 = scmp.eq.s32.totalorder %s32, 0
      %p319 = por %p317, %p318
      %s320 = ssub.s32 %s26, %s33
      %p321 = scmp.eq.s32.totalorder %s320, 0
      %s323 = sadd.s32 %s322, 1
      %s324 = scalar_select %p321, %s322, %s323
      %p327 = pneg %p321
      %p328 = scmp.eq.s32.totalorder %s26, 1
      %p329 = por %p327, %p328
      %p330 = scmp.ne.s32.totalorder %s322, %s325
      %p331 = scmp.eq.s32.totalorder %s26, 0
      %p332 = por %p330, %p331
      %p333 = scmp.ne.s32.totalorder %s322, %s325
      %p334 = scmp.eq.s32.totalorder %s31, 1
      %p335 = por %p333, %p334
      %p336 = scmp.ne.s32.totalorder %s325, %s326
      %p337 = scmp.eq.s32.totalorder %s31, 0
      %p338 = por %p336, %p337
      %p339 = scmp.ne.s32.totalorder %s325, %s326
      %p340 = scmp.eq.s32.totalorder %s32, 1
      %p341 = por %p339, %p340
      %p343 = scmp.ne.s32.totalorder %s326, %s342
      %p344 = scmp.eq.s32.totalorder %s32, 0
      %p345 = por %p343, %p344
      %s346 = ssub.s32 %s26, %s33
      %p347 = scmp.eq.s32.totalorder %s346, 0
      %s349 = sadd.s32 %s348, 1
      %s350 = scalar_select %p347, %s348, %s349
      %p353 = pneg %p347
      %p354 = scmp.eq.s32.totalorder %s26, 1
      %p355 = por %p353, %p354
      %p356 = scmp.ne.s32.totalorder %s348, %s351
      %p357 = scmp.eq.s32.totalorder %s26, 0
      %p358 = por %p356, %p357
      %p359 = scmp.ne.s32.totalorder %s348, %s351
      %p360 = scmp.eq.s32.totalorder %s31, 1
      %p361 = por %p359, %p360
      %p362 = scmp.ne.s32.totalorder %s351, %s352
      %p363 = scmp.eq.s32.totalorder %s31, 0
      %p364 = por %p362, %p363
      %p365 = scmp.ne.s32.totalorder %s351, %s352
      %p366 = scmp.eq.s32.totalorder %s32, 1
      %p367 = por %p365, %p366
      %p369 = scmp.ne.s32.totalorder %s352, %s368
      %p370 = scmp.eq.s32.totalorder %s32, 0
      %p371 = por %p369, %p370
      %s372 = ssub.s32 %s26, %s33
      %p373 = scmp.eq.s32.totalorder %s372, 0
      %s375 = sadd.s32 %s374, 1
      %s376 = scalar_select %p373, %s374, %s375
      %p379 = pneg %p373
      %p380 = scmp.eq.s32.totalorder %s26, 1
      %p381 = por %p379, %p380
      %p382 = scmp.ne.s32.totalorder %s374, %s377
      %p383 = scmp.eq.s32.totalorder %s26, 0
      %p384 = por %p382, %p383
      %p385 = scmp.ne.s32.totalorder %s374, %s377
      %p386 = scmp.eq.s32.totalorder %s31, 1
      %p387 = por %p385, %p386
      %p388 = scmp.ne.s32.totalorder %s377, %s378
      %p389 = scmp.eq.s32.totalorder %s31, 0
      %p390 = por %p388, %p389
      %p391 = scmp.ne.s32.totalorder %s377, %s378
      %p392 = scmp.eq.s32.totalorder %s32, 1
      %p393 = por %p391, %p392
      %p395 = scmp.ne.s32.totalorder %s378, %s394
      %p396 = scmp.eq.s32.totalorder %s32, 0
      %p397 = por %p395, %p396
      %p398 = scmp.le.s32.totalorder 1, %s26
      %p399 = scmp.lt.s32.totalorder %s26, 3
      %p400 = pnand %p398, %p399
      %p401 = pneg %p400
      // Predicated region
      $region9: #{tpu_custom_call.1} parent=5 // pred_check
        _
      $region10: #{tpu_custom_call.1} parent=5 // pred_check_branch
        %403 = sbr.rel (%p400) target = $region12
      $region11: #{tpu_custom_call.1} parent=5 // pred_region
        %s404 = ssub.s32 %s26, 1
      $region12: #{tpu_custom_call.1} parent=5 // pred_fallthru
        _
      %p405 = scmp.lt.s32.totalorder %s26, 2
      // Predicated region
      $region13: #{tpu_custom_call.1} parent=5 // pred_check
        %p406 = pneg %p405
      $region14: #{tpu_custom_call.1} parent=5 // pred_check_branch
        %408 = sbr.rel (%p406) target = $region16
      $region15: #{tpu_custom_call.1} parent=5 // pred_region
        // Predicated region
        $region17: #{tpu_custom_call.1} parent=15 // pred_check
          %p409 = pneg %p46
        $region18: #{tpu_custom_call.1} parent=15 // pred_check_branch
          %411 = sbr.rel (%p409) target = $region20
        $region19: #{tpu_custom_call.1} parent=15 // pred_region
          %p412 = scmp.lt.s32.totalorder %s26, 1
          %s413 = scalar_select %p412, %s26, 1
          %s414 = smul.addr %s413, 8
          %s415 = scalar_lea.vmem %s0, %s414
        $region20: #{tpu_custom_call.1} parent=15 // pred_fallthru
          _
        // Predicated region
        $region21: #{tpu_custom_call.1} parent=15 // pred_check
          %p416 = pneg %p72
        $region22: #{tpu_custom_call.1} parent=15 // pred_check_branch
          %418 = sbr.rel (%p416) target = $region24
        $region23: #{tpu_custom_call.1} parent=15 // pred_region
          %p419 = scmp.lt.s32.totalorder %s26, 1
          %s420 = scalar_select %p419, %s26, 1
          %s421 = smul.addr %s420, 8
          %s422 = scalar_lea.vmem %s1, %s421
        $region24: #{tpu_custom_call.1} parent=15 // pred_fallthru
          _
        // Predicated region
        $region25: #{tpu_custom_call.1} parent=15 // pred_check
          %p423 = pneg %p98
        $region26: #{tpu_custom_call.1} parent=15 // pred_check_branch
          %425 = sbr.rel (%p423) target = $region28
        $region27: #{tpu_custom_call.1} parent=15 // pred_region
          %p426 = scmp.lt.s32.totalorder %s26, 1
          %s427 = scalar_select %p426, %s26, 1
          %s428 = smul.addr %s427, 8
          %s429 = scalar_lea.vmem %s2, %s428
        $region28: #{tpu_custom_call.1} parent=15 // pred_fallthru
          _
        // Predicated region
        $region29: #{tpu_custom_call.1} parent=15 // pred_check
          %p430 = pneg %p124
        $region30: #{tpu_custom_call.1} parent=15 // pred_check_branch
          %432 = sbr.rel (%p430) target = $region32
        $region31: #{tpu_custom_call.1} parent=15 // pred_region
          %p433 = scmp.lt.s32.totalorder %s26, 1
          %s434 = scalar_select %p433, %s26, 1
          %s435 = smul.addr %s434, 8
          %s436 = scalar_lea.vmem %s3, %s435
        $region32: #{tpu_custom_call.1} parent=15 // pred_fallthru
          _
        // Predicated region
        $region33: #{tpu_custom_call.1} parent=15 // pred_check
          %p437 = pneg %p150
        $region34: #{tpu_custom_call.1} parent=15 // pred_check_branch
          %439 = sbr.rel (%p437) target = $region36
        $region35: #{tpu_custom_call.1} parent=15 // pred_region
          %p440 = scmp.lt.s32.totalorder %s26, 1
          %s441 = scalar_select %p440, %s26, 1
          %s442 = smul.addr %s441, 8
          %s443 = scalar_lea.vmem %s4, %s442
        $region36: #{tpu_custom_call.1} parent=15 // pred_fallthru
          _
        // Predicated region
        $region37: #{tpu_custom_call.1} parent=15 // pred_check
          %p444 = pneg %p176
        $region38: #{tpu_custom_call.1} parent=15 // pred_check_branch
          %446 = sbr.rel (%p444) target = $region40
        $region39: #{tpu_custom_call.1} parent=15 // pred_region
          %p447 = scmp.lt.s32.totalorder %s26, 1
          %s448 = scalar_select %p447, %s26, 1
          %s449 = smul.addr %s448, 8
          %s450 = scalar_lea.vmem %s5, %s449
        $region40: #{tpu_custom_call.1} parent=15 // pred_fallthru
          _
        // Predicated region
        $region41: #{tpu_custom_call.1} parent=15 // pred_check
          %p451 = pneg %p202
        $region42: #{tpu_custom_call.1} parent=15 // pred_check_branch
          %453 = sbr.rel (%p451) target = $region44
        $region43: #{tpu_custom_call.1} parent=15 // pred_region
          %p454 = scmp.lt.s32.totalorder %s26, 1
          %s455 = scalar_select %p454, %s26, 1
          %s456 = smul.addr %s455, 4
          %s457 = smul.addr %s456, 4
          %s458 = scalar_lea.vmem %s6, %s457
        $region44: #{tpu_custom_call.1} parent=15 // pred_fallthru
          _
        // Predicated region
        $region45: #{tpu_custom_call.1} parent=15 // pred_check
          %p459 = pneg %p228
        $region46: #{tpu_custom_call.1} parent=15 // pred_check_branch
          %461 = sbr.rel (%p459) target = $region48
        $region47: #{tpu_custom_call.1} parent=15 // pred_region
          %p462 = scmp.lt.s32.totalorder %s26, 1
          %s463 = scalar_select %p462, %s26, 1
          %s464 = smul.addr %s463, 4
          %s465 = smul.addr %s464, 4
          %s466 = scalar_lea.vmem %s7, %s465
        $region48: #{tpu_custom_call.1} parent=15 // pred_fallthru
          _
        // Predicated region
        $region49: #{tpu_custom_call.1} parent=15 // pred_check
          %p467 = pneg %p254
        $region50: #{tpu_custom_call.1} parent=15 // pred_check_branch
          %469 = sbr.rel (%p467) target = $region52
        $region51: #{tpu_custom_call.1} parent=15 // pred_region
          %p470 = scmp.lt.s32.totalorder %s26, 1
          %s471 = scalar_select %p470, %s26, 1
          %s472 = smul.addr %s471, 4
          %s473 = smul.addr %s472, 4
          %s474 = scalar_lea.vmem %s8, %s473
        $region52: #{tpu_custom_call.1} parent=15 // pred_fallthru
          _
        // Predicated region
        $region53: #{tpu_custom_call.1} parent=15 // pred_check
          %p475 = pneg %p280
        $region54: #{tpu_custom_call.1} parent=15 // pred_check_branch
          %477 = sbr.rel (%p475) target = $region56
        $region55: #{tpu_custom_call.1} parent=15 // pred_region
          %p478 = scmp.lt.s32.totalorder %s26, 1
          %s479 = scalar_select %p478, %s26, 1
          %s480 = smul.addr %s479, 8
          %s481 = scalar_lea.vmem %s9, %s480
        $region56: #{tpu_custom_call.1} parent=15 // pred_fallthru
          _
        // Predicated region
        $region57: #{tpu_custom_call.1} parent=15 // pred_check
          %p482 = pneg %p306
        $region58: #{tpu_custom_call.1} parent=15 // pred_check_branch
          %484 = sbr.rel (%p482) target = $region60
        $region59: #{tpu_custom_call.1} parent=15 // pred_region
          %p485 = scmp.lt.s32.totalorder %s26, 1
          %s486 = scalar_select %p485, %s26, 1
          %s487 = smul.addr %s486, 4
          %s488 = scalar_lea.vmem %s10, %s487
        $region60: #{tpu_custom_call.1} parent=15 // pred_fallthru
          _
      $region16: #{tpu_custom_call.1} parent=5 // pred_fallthru
        _
      %p489 = scmp.le.s32.totalorder 1, %s26
      %p490 = scmp.lt.s32.totalorder %s26, 3
      %p491 = pnand %p489, %p490
      %p492 = pneg %p491
      // Predicated region
      $region61: #{tpu_custom_call.1} parent=5 // pred_check
        _
      $region62: #{tpu_custom_call.1} parent=5 // pred_check_branch
        %494 = sbr.rel (%p491) target = $region64
      $region63: #{tpu_custom_call.1} parent=5 // pred_region
        %s495 = ssub.s32 %s26, 1
        %p496 = scmp.lt.s32.totalorder %s31, 1
        %s497 = scalar_select %p496, %s31, 1
        %s498 = smul.addr %s497, 8
        %s499 = scalar_lea.vmem %s0, %s498
        %p500 = pneg %p52
        %p501 = pneg %p49
        %p502 = scmp.lt.s32.totalorder %s31, 1
        %s503 = scalar_select %p502, %s31, 1
        %s504 = smul.addr %s503, 8
        %s505 = scalar_lea.vmem %s1, %s504
        %p506 = pneg %p78
        %p507 = pneg %p75
        %p508 = scmp.lt.s32.totalorder %s31, 1
        %s509 = scalar_select %p508, %s31, 1
        %s510 = smul.addr %s509, 8
        %s511 = scalar_lea.vmem %s2, %s510
        %p512 = pneg %p104
        %p513 = pneg %p101
        %p514 = scmp.lt.s32.totalorder %s31, 1
        %s515 = scalar_select %p514, %s31, 1
        %s516 = smul.addr %s515, 8
        %s517 = scalar_lea.vmem %s3, %s516
        %p518 = pneg %p130
        %p519 = pneg %p127
        %p520 = scmp.lt.s32.totalorder %s31, 1
        %s521 = scalar_select %p520, %s31, 1
        %s522 = smul.addr %s521, 8
        %s523 = scalar_lea.vmem %s4, %s522
        %p524 = pneg %p156
        %p525 = pneg %p153
        %p526 = scmp.lt.s32.totalorder %s31, 1
        %s527 = scalar_select %p526, %s31, 1
        %s528 = smul.addr %s527, 8
        %s529 = scalar_lea.vmem %s5, %s528
        %p530 = pneg %p182
        %p531 = pneg %p179
        %p532 = scmp.lt.s32.totalorder %s31, 1
        %s533 = scalar_select %p532, %s31, 1
        %s534 = smul.addr %s533, 4
        %s535 = smul.addr %s534, 4
        %s536 = scalar_lea.vmem %s6, %s535
        %p537 = pneg %p208
        %p538 = pneg %p205
        %p539 = scmp.lt.s32.totalorder %s31, 1
        %s540 = scalar_select %p539, %s31, 1
        %s541 = smul.addr %s540, 4
        %s542 = smul.addr %s541, 4
        %s543 = scalar_lea.vmem %s7, %s542
        %p544 = pneg %p234
        %p545 = pneg %p231
        %p546 = scmp.lt.s32.totalorder %s31, 1
        %s547 = scalar_select %p546, %s31, 1
        %s548 = smul.addr %s547, 4
        %s549 = smul.addr %s548, 4
        %s550 = scalar_lea.vmem %s8, %s549
        %p551 = pneg %p260
        %p552 = pneg %p257
        %p553 = scmp.lt.s32.totalorder %s31, 1
        %s554 = scalar_select %p553, %s31, 1
        %s555 = smul.addr %s554, 8
        %s556 = scalar_lea.vmem %s9, %s555
        %p557 = pneg %p286
        %p558 = pneg %p283
        %p559 = scmp.lt.s32.totalorder %s31, 1
        %s560 = scalar_select %p559, %s31, 1
        %s561 = smul.addr %s560, 4
        %s562 = scalar_lea.vmem %s10, %s561
        %p563 = pneg %p312
        %p564 = pneg %p309
        %p565 = pneg %p338
        %p566 = pneg %p335
        %s567 = sand.u32 %s325, 1
        %s568 = scalar_lea.sflag [#allocation3], %s567
        %s569 = sand.u32 %s325, 1
        %s570 = smul.addr %s569, 8
        %s571 = scalar_lea.vmem [#allocation2], %s570
        %p572 = pneg %p364
        %p573 = pneg %p361
        %s574 = sand.u32 %s31, 1
        %s575 = scalar_lea.sflag [#allocation5], %s574
        %s576 = sand.u32 %s351, 1
        %s577 = smul.addr %s576, 8
        %s578 = scalar_lea.vmem [#allocation4], %s577
        %p579 = pneg %p390
        %p580 = pneg %p387
        %s581 = sand.u32 %s31, 1
        %s582 = scalar_lea.sflag [#allocation5], %s581
        %s583 = sand.u32 %s377, 1
        %s584 = smul.addr %s583, 32
        %s585 = scalar_lea.vmem [#allocation6], %s584
        %p586 = scmp.lt.s32.totalorder %s31, 1
        %s587 = scalar_select %p586, %s31, 1
        %s588 = smul.addr %s587, 8
        %s589 = scalar_lea.vmem %s0, %s588
        %p590 = scmp.lt.s32.totalorder %s31, 1
        %s591 = scalar_select %p590, %s31, 1
        %s592 = smul.addr %s591, 8
        %s593 = scalar_lea.vmem %s1, %s592
        %p594 = scmp.lt.s32.totalorder %s31, 1
        %s595 = scalar_select %p594, %s31, 1
        %s596 = smul.addr %s595, 8
        %s597 = scalar_lea.vmem %s2, %s596
        %p598 = scmp.lt.s32.totalorder %s31, 1
        %s599 = scalar_select %p598, %s31, 1
        %s600 = smul.addr %s599, 8
        %s601 = scalar_lea.vmem %s3, %s600
        %p602 = scmp.lt.s32.totalorder %s31, 1
        %s603 = scalar_select %p602, %s31, 1
        %s604 = smul.addr %s603, 8
        %s605 = scalar_lea.vmem %s4, %s604
        %p606 = scmp.lt.s32.totalorder %s31, 1
        %s607 = scalar_select %p606, %s31, 1
        %s608 = smul.addr %s607, 8
        %s609 = scalar_lea.vmem %s5, %s608
        %p610 = scmp.lt.s32.totalorder %s31, 1
        %s611 = scalar_select %p610, %s31, 1
        %s612 = smul.addr %s611, 4
        %s613 = smul.addr %s612, 4
        %s614 = scalar_lea.vmem %s6, %s613
        %p615 = scmp.lt.s32.totalorder %s31, 1
        %s616 = scalar_select %p615, %s31, 1
        %s617 = smul.addr %s616, 4
        %s618 = smul.addr %s617, 4
        %s619 = scalar_lea.vmem %s7, %s618
        %p620 = scmp.lt.s32.totalorder %s31, 1
        %s621 = scalar_select %p620, %s31, 1
        %s622 = smul.addr %s621, 4
        %s623 = smul.addr %s622, 4
        %s624 = scalar_lea.vmem %s8, %s623
        %p625 = scmp.lt.s32.totalorder %s31, 1
        %s626 = scalar_select %p625, %s31, 1
        %s627 = smul.addr %s626, 8
        %s628 = scalar_lea.vmem %s9, %s627
        %p629 = scmp.lt.s32.totalorder %s31, 1
        %s630 = scalar_select %p629, %s31, 1
        %s631 = smul.addr %s630, 4
        %s632 = scalar_lea.vmem %s10, %s631
        %v633 = vld [vmem:[%s628] sm:$0xff]
        %v634 = vld [vmem:[%s632] sm:$0x7]
        %v635 = vld [vmem:[%s589] sm:$0xff]
        %v636 = vld [vmem:[%s593] sm:$0xff]
        %v637 = vld [vmem:[%s597] sm:$0xff]
        %v638 = vld [vmem:[%s601] sm:$0xff]
        %v639 = vld [vmem:[%s605] sm:$0xff]
        %v640 = vld [vmem:[%s609] sm:$0xff]
        %v641 = vld [vmem:[%s614] sm:$0x7]
        %v642 = vld [vmem:[%s614 + $0x4] sm:$0x7]
        %v643 = vld [vmem:[%s614 + $0x8] sm:$0x7]
        %v644 = vld [vmem:[%s614 + $0xc] sm:$0x7]
        %v645 = vld [vmem:[%s619] sm:$0x7]
        %v646 = vld [vmem:[%s619 + $0x4] sm:$0x7]
        %v647 = vld [vmem:[%s619 + $0x8] sm:$0x7]
        %v648 = vld [vmem:[%s619 + $0xc] sm:$0x7]
        %v649 = vld [vmem:[%s624] sm:$0x7]
        %v650 = vld [vmem:[%s624 + $0x4] sm:$0x7]
        %v651 = vld [vmem:[%s624 + $0x8] sm:$0x7]
        %v652 = vld [vmem:[%s624 + $0xc] sm:$0x7]
        %654 = vset.pattern.permute.xlu0 0
        %655 = vperm.xlu0 %654, %v633
        %v656 = vpop.permute.xlu0 %655
        %v658 = vperm.slane %v641, 0
        %v659 = vmul.f32 %v656, %v658
        %660 = vset.pattern.permute.xlu0 1
        %661 = vperm.xlu0 %660, %v633
        %v662 = vpop.permute.xlu0 %661
        %v664 = vperm.slane %v641, 1
        %v665 = vmul.f32 %v662, %v664
        %v666 = vadd.f32 %v659, %v665
        %667 = vset.pattern.permute.xlu0 2
        %668 = vperm.xlu0 %667, %v633
        %v669 = vpop.permute.xlu0 %668
        %v671 = vperm.slane %v641, 2
        %v672 = vmul.f32 %v669, %v671
        %v673 = vadd.f32 %v666, %v672
        %v674 = vperm.slane %v645, 0
        %v675 = vmul.f32 %v656, %v674
        %v676 = vperm.slane %v645, 1
        %v677 = vmul.f32 %v662, %v676
        %v678 = vadd.f32 %v675, %v677
        %v679 = vperm.slane %v645, 2
        %v680 = vmul.f32 %v669, %v679
        %v681 = vadd.f32 %v678, %v680
        %v682 = vperm.slane %v649, 0
        %v683 = vmul.f32 %v656, %v682
        %v684 = vperm.slane %v649, 1
        %v685 = vmul.f32 %v662, %v684
        %v686 = vadd.f32 %v683, %v685
        %v687 = vperm.slane %v649, 2
        %v688 = vmul.f32 %v669, %v687
        %v689 = vadd.f32 %v686, %v688
        %v690 = vmul.f32 %v636, %v636
        %vm691 = vcmask 64512
        %v692 = vsel %vm691, %v690, 0.0
        %693 = vadd.xlane.f32.xlu0 %v692
        %v694 = vpop.xlane.xlu0 %693
        %v695 = vmul.f32 %v636, -2.0
        %v696 = vsel %vm691, %v695, %v694
        %v697 = vadd.f32 %v638, %v689
        %v698 = vmax.f32 %v697, 1e-24
        %v699 = vrsqrt.pop %v698
        %v700 = vmul.f32 %v699, %v698
        %v701 = vmul.f32 %v700, %v699
        %v702 = vmul.f32 0.5, %v701
        %v703 = vsub.f32 1.5, %v702
        %v704 = vmul.f32 %v699, %v703
        %v705 = vmul.f32 %v698, %v704
        %vm706 = vcmp.eq.f32.partialorder %v698, inf
        %v707 = vsel %vm706, %v698, %v705
        %vm708 = vcmp.eq.f32.partialorder %v698, 0.0
        %v709 = vand.u32 %v698, 2147483648
        %v710 = vsel %vm708, %v709, %v707
        %v711 = vsel %vm691, %v697, 0.0
        %712 = vadd.xlane.f32.xlu0 %v711
        %v713 = vpop.xlane.xlu0 %712
        %v714 = vmul.f32 %v710, -2.0
        %v715 = vsel %vm691, %v714, %v713
        %717 = vrot.lane.b32.xlu0 %v689, 120
        %v718 = vpop.permute.xlu0 %717
        %v720 = vadd.f32 %v638, %v718
        %v721 = vmax.f32 %v720, 1e-24
        %v722 = vrsqrt.pop %v721
        %v723 = vmul.f32 %v722, %v721
        %v724 = vmul.f32 %v723, %v722
        %v725 = vmul.f32 0.5, %v724
        %v726 = vsub.f32 1.5, %v725
        %v727 = vmul.f32 %v722, %v726
        %v728 = vmul.f32 %v721, %v727
        %vm729 = vcmp.eq.f32.partialorder %v721, inf
        %v730 = vsel %vm729, %v721, %v728
        %vm731 = vcmp.eq.f32.partialorder %v721, 0.0
        %v732 = vand.u32 %v721, 2147483648
        %v733 = vsel %vm731, %v732, %v730
        %v734 = vsel %vm691, %v720, 0.0
        %735 = vadd.xlane.f32.xlu0 %v734
        %v736 = vpop.xlane.xlu0 %735
        %v737 = vmul.f32 %v733, -2.0
        %v738 = vsel %vm691, %v737, %v736
        %739 = vrot.lane.b32.xlu0 %v689, 112
        %v740 = vpop.permute.xlu0 %739
        %v742 = vadd.f32 %v638, %v740
        %v743 = vmax.f32 %v742, 1e-24
        %v744 = vrsqrt.pop %v743
        %v745 = vmul.f32 %v744, %v743
        %v746 = vmul.f32 %v745, %v744
        %v747 = vmul.f32 0.5, %v746
        %v748 = vsub.f32 1.5, %v747
        %v749 = vmul.f32 %v744, %v748
        %v750 = vmul.f32 %v743, %v749
        %vm751 = vcmp.eq.f32.partialorder %v743, inf
        %v752 = vsel %vm751, %v743, %v750
        %vm753 = vcmp.eq.f32.partialorder %v743, 0.0
        %v754 = vand.u32 %v743, 2147483648
        %v755 = vsel %vm753, %v754, %v752
        %v756 = vsel %vm691, %v742, 0.0
        %757 = vadd.xlane.f32.xlu0 %v756
        %v758 = vpop.xlane.xlu0 %757
        %v759 = vmul.f32 %v755, -2.0
        %v760 = vsel %vm691, %v759, %v758
        %v761 = vadd.f32 %v635, %v673
        %v762 = vadd.f32 %v637, %v681
        %v763 = vmax.f32 %v762, 1e-24
        %v764 = vrsqrt.pop %v763
        %v765 = vmul.f32 %v764, %v763
        %v766 = vmul.f32 %v765, %v764
        %v767 = vmul.f32 0.5, %v766
        %v768 = vsub.f32 1.5, %v767
        %v769 = vmul.f32 %v764, %v768
        %v770 = vmul.f32 %v763, %v769
        %vm771 = vcmp.eq.f32.partialorder %v763, inf
        %v772 = vsel %vm771, %v763, %v770
        %vm773 = vcmp.eq.f32.partialorder %v763, 0.0
        %v774 = vand.u32 %v763, 2147483648
        %v775 = vsel %vm773, %v774, %v772
        %v776 = vmul.f32 %v761, %v761
        %v777 = vadd.f32 %v776, %v762
        %v778 = vsel %vm691, %v777, 0.0
        %779 = vadd.xlane.f32.xlu0 %v778
        %v780 = vpop.xlane.xlu0 %779
        %v781 = vsel %vm691, %v761, 1.0
        %v782 = vsel %vm691, %v775, 1.0
        %vm783 = vcmask 72704
        %v785 = vsel %vm783, %v781, 0
        %v788 = vsel %vm783, %v696, 0
        %790 = vmatpush.xpose.msra.mxu0 0.0
        %791 = vmatpush.xpose.msra.mxu0 0.0
        %792 = vmatpush.xpose.msra.mxu0 0.0
        %793 = vmatpush.xpose.msra.mxu0 0.0
        %794 = vmatpush.xpose.msra.mxu0 0.0
        %795 = vmatpush.xpose.msra.mxu0 0.0
        %796 = vmatpush.xpose.msra.mxu0 0.0
        %797 = vmatpush.xpose.msra.mxu0 0.0
        %798 = vmatpush.xpose.msra.mxu0 0.0
        %799 = vmatpush.xpose.msra.mxu0 0.0
        %800 = vmatpush.xpose.msra.mxu0 0.0
        %801 = vmatpush.xpose.msra.mxu0 0.0
        %802 = vmatpush.xpose.msra.mxu0 0.0
        %803 = vmatpush.xpose.msra.mxu0 0.0
        %804 = vmatpush.xpose.msra.mxu0 0.0
        %805 = vmatpush.xpose.msra.mxu0 %v788
        %806 = vmatmul.f32.gmra.mxu0 %v785
        %v807 = vpop.f32.mrf.mxu0
        %v808 = vadd.f32 0.0, %v807
        %809 = vdwg.mxu0
        %v810 = vadd.f32 %v780, %v808
        %v812 = vsel %vm783, %v782, 0
        %v815 = vsel %vm783, %v715, 0
        %817 = vmatpush.xpose.msra.mxu0 0.0
        %818 = vmatpush.xpose.msra.mxu0 0.0
        %819 = vmatpush.xpose.msra.mxu0 0.0
        %820 = vmatpush.xpose.msra.mxu0 0.0
        %821 = vmatpush.xpose.msra.mxu0 0.0
        %822 = vmatpush.xpose.msra.mxu0 0.0
        %823 = vmatpush.xpose.msra.mxu0 0.0
        %824 = vmatpush.xpose.msra.mxu0 0.0
        %825 = vmatpush.xpose.msra.mxu0 0.0
        %826 = vmatpush.xpose.msra.mxu0 0.0
        %827 = vmatpush.xpose.msra.mxu0 0.0
        %828 = vmatpush.xpose.msra.mxu0 0.0
        %829 = vmatpush.xpose.msra.mxu0 0.0
        %830 = vmatpush.xpose.msra.mxu0 0.0
        %831 = vmatpush.xpose.msra.mxu0 0.0
        %832 = vmatpush.xpose.msra.mxu0 %v815
        %833 = vmatmul.f32.gmra.mxu0 %v812
        %v834 = vpop.f32.mrf.mxu0
        %v835 = vadd.f32 0.0, %v834
        %836 = vdwg.mxu0
        %v837 = vmul.f32 %v656, %v835
        %v838 = vadd.f32 %v810, %v837
        %v840 = vsel %vm783, %v738, 0
        %842 = vmatpush.xpose.msra.mxu0 0.0
        %843 = vmatpush.xpose.msra.mxu0 0.0
        %844 = vmatpush.xpose.msra.mxu0 0.0
        %845 = vmatpush.xpose.msra.mxu0 0.0
        %846 = vmatpush.xpose.msra.mxu0 0.0
        %847 = vmatpush.xpose.msra.mxu0 0.0
        %848 = vmatpush.xpose.msra.mxu0 0.0
        %849 = vmatpush.xpose.msra.mxu0 0.0
        %850 = vmatpush.xpose.msra.mxu0 0.0
        %851 = vmatpush.xpose.msra.mxu0 0.0
        %852 = vmatpush.xpose.msra.mxu0 0.0
        %853 = vmatpush.xpose.msra.mxu0 0.0
        %854 = vmatpush.xpose.msra.mxu0 0.0
        %855 = vmatpush.xpose.msra.mxu0 0.0
        %856 = vmatpush.xpose.msra.mxu0 0.0
        %857 = vmatpush.xpose.msra.mxu0 %v840
        %858 = vmatmul.f32.gmra.mxu0 %v812
        %v859 = vpop.f32.mrf.mxu0
        %v860 = vadd.f32 0.0, %v859
        %861 = vdwg.mxu0
        %v862 = vmul.f32 %v662, %v860
        %v863 = vadd.f32 %v838, %v862
        %v865 = vsel %vm783, %v760, 0
        %867 = vmatpush.xpose.msra.mxu0 0.0
        %868 = vmatpush.xpose.msra.mxu0 0.0
        %869 = vmatpush.xpose.msra.mxu0 0.0
        %870 = vmatpush.xpose.msra.mxu0 0.0
        %871 = vmatpush.xpose.msra.mxu0 0.0
        %872 = vmatpush.xpose.msra.mxu0 0.0
        %873 = vmatpush.xpose.msra.mxu0 0.0
        %874 = vmatpush.xpose.msra.mxu0 0.0
        %875 = vmatpush.xpose.msra.mxu0 0.0
        %876 = vmatpush.xpose.msra.mxu0 0.0
        %877 = vmatpush.xpose.msra.mxu0 0.0
        %878 = vmatpush.xpose.msra.mxu0 0.0
        %879 = vmatpush.xpose.msra.mxu0 0.0
        %880 = vmatpush.xpose.msra.mxu0 0.0
        %881 = vmatpush.xpose.msra.mxu0 0.0
        %882 = vmatpush.xpose.msra.mxu0 %v865
        %883 = vmatmul.f32.gmra.mxu0 %v812
        %v884 = vpop.f32.mrf.mxu0
        %v885 = vadd.f32 0.0, %v884
        %886 = vdwg.mxu0
        %v887 = vmul.f32 %v669, %v885
        %v888 = vadd.f32 %v863, %v887
        %v889 = vperm.slane %v634, 0
        %v890 = vmul.f32 %v889, %v888
        %v891 = vadd.f32 %v890, 0.0
        %893 = vrot.lane.b32.xlu0 %v673, 120
        %v894 = vpop.permute.xlu0 %893
        %v896 = vadd.f32 %v635, %v894
        %898 = vrot.lane.b32.xlu0 %v681, 120
        %v899 = vpop.permute.xlu0 %898
        %v901 = vadd.f32 %v637, %v899
        %v902 = vmax.f32 %v901, 1e-24
        %v903 = vrsqrt.pop %v902
        %v904 = vmul.f32 %v903, %v902
        %v905 = vmul.f32 %v904, %v903
        %v906 = vmul.f32 0.5, %v905
        %v907 = vsub.f32 1.5, %v906
        %v908 = vmul.f32 %v903, %v907
        %v909 = vmul.f32 %v902, %v908
        %vm910 = vcmp.eq.f32.partialorder %v902, inf
        %v911 = vsel %vm910, %v902, %v909
        %vm912 = vcmp.eq.f32.partialorder %v902, 0.0
        %v913 = vand.u32 %v902, 2147483648
        %v914 = vsel %vm912, %v913, %v911
        %v915 = vmul.f32 %v896, %v896
        %v916 = vadd.f32 %v915, %v901
        %v917 = vsel %vm691, %v916, 0.0
        %918 = vadd.xlane.f32.xlu0 %v917
        %v919 = vpop.xlane.xlu0 %918
        %v920 = vsel %vm691, %v896, 1.0
        %v921 = vsel %vm691, %v914, 1.0
        %v923 = vsel %vm783, %v920, 0
        %925 = vmatpush.xpose.msra.mxu0 0.0
        %926 = vmatpush.xpose.msra.mxu0 0.0
        %927 = vmatpush.xpose.msra.mxu0 0.0
        %928 = vmatpush.xpose.msra.mxu0 0.0
        %929 = vmatpush.xpose.msra.mxu0 0.0
        %930 = vmatpush.xpose.msra.mxu0 0.0
        %931 = vmatpush.xpose.msra.mxu0 0.0
        %932 = vmatpush.xpose.msra.mxu0 0.0
        %933 = vmatpush.xpose.msra.mxu0 0.0
        %934 = vmatpush.xpose.msra.mxu0 0.0
        %935 = vmatpush.xpose.msra.mxu0 0.0
        %936 = vmatpush.xpose.msra.mxu0 0.0
        %937 = vmatpush.xpose.msra.mxu0 0.0
        %938 = vmatpush.xpose.msra.mxu0 0.0
        %939 = vmatpush.xpose.msra.mxu0 0.0
        %940 = vmatpush.xpose.msra.mxu0 %v788
        %941 = vmatmul.f32.gmra.mxu0 %v923
        %v942 = vpop.f32.mrf.mxu0
        %v943 = vadd.f32 0.0, %v942
        %944 = vdwg.mxu0
        %v945 = vadd.f32 %v919, %v943
        %v947 = vsel %vm783, %v921, 0
        %949 = vmatpush.xpose.msra.mxu0 0.0
        %950 = vmatpush.xpose.msra.mxu0 0.0
        %951 = vmatpush.xpose.msra.mxu0 0.0
        %952 = vmatpush.xpose.msra.mxu0 0.0
        %953 = vmatpush.xpose.msra.mxu0 0.0
        %954 = vmatpush.xpose.msra.mxu0 0.0
        %955 = vmatpush.xpose.msra.mxu0 0.0
        %956 = vmatpush.xpose.msra.mxu0 0.0
        %957 = vmatpush.xpose.msra.mxu0 0.0
        %958 = vmatpush.xpose.msra.mxu0 0.0
        %959 = vmatpush.xpose.msra.mxu0 0.0
        %960 = vmatpush.xpose.msra.mxu0 0.0
        %961 = vmatpush.xpose.msra.mxu0 0.0
        %962 = vmatpush.xpose.msra.mxu0 0.0
        %963 = vmatpush.xpose.msra.mxu0 0.0
        %964 = vmatpush.xpose.msra.mxu0 %v815
        %965 = vmatmul.f32.gmra.mxu0 %v947
        %v966 = vpop.f32.mrf.mxu0
        %v967 = vadd.f32 0.0, %v966
        %968 = vdwg.mxu0
        %v969 = vmul.f32 %v656, %v967
        %v970 = vadd.f32 %v945, %v969
        %971 = vmatpush.xpose.msra.mxu0 0.0
        %972 = vmatpush.xpose.msra.mxu0 0.0
        %973 = vmatpush.xpose.msra.mxu0 0.0
        %974 = vmatpush.xpose.msra.mxu0 0.0
        %975 = vmatpush.xpose.msra.mxu0 0.0
        %976 = vmatpush.xpose.msra.mxu0 0.0
        %977 = vmatpush.xpose.msra.mxu0 0.0
        %978 = vmatpush.xpose.msra.mxu0 0.0
        %979 = vmatpush.xpose.msra.mxu0 0.0
        %980 = vmatpush.xpose.msra.mxu0 0.0
        %981 = vmatpush.xpose.msra.mxu0 0.0
        %982 = vmatpush.xpose.msra.mxu0 0.0
        %983 = vmatpush.xpose.msra.mxu0 0.0
        %984 = vmatpush.xpose.msra.mxu0 0.0
        %985 = vmatpush.xpose.msra.mxu0 0.0
        %986 = vmatpush.xpose.msra.mxu0 %v840
        %987 = vmatmul.f32.gmra.mxu0 %v947
        %v988 = vpop.f32.mrf.mxu0
        %v989 = vadd.f32 0.0, %v988
        %990 = vdwg.mxu0
        %v991 = vmul.f32 %v662, %v989
        %v992 = vadd.f32 %v970, %v991
        %993 = vmatpush.xpose.msra.mxu0 0.0
        %994 = vmatpush.xpose.msra.mxu0 0.0
        %995 = vmatpush.xpose.msra.mxu0 0.0
        %996 = vmatpush.xpose.msra.mxu0 0.0
        %997 = vmatpush.xpose.msra.mxu0 0.0
        %998 = vmatpush.xpose.msra.mxu0 0.0
        %999 = vmatpush.xpose.msra.mxu0 0.0
        %1000 = vmatpush.xpose.msra.mxu0 0.0
        %1001 = vmatpush.xpose.msra.mxu0 0.0
        %1002 = vmatpush.xpose.msra.mxu0 0.0
        %1003 = vmatpush.xpose.msra.mxu0 0.0
        %1004 = vmatpush.xpose.msra.mxu0 0.0
        %1005 = vmatpush.xpose.msra.mxu0 0.0
        %1006 = vmatpush.xpose.msra.mxu0 0.0
        %1007 = vmatpush.xpose.msra.mxu0 0.0
        %1008 = vmatpush.xpose.msra.mxu0 %v865
        %1009 = vmatmul.f32.gmra.mxu0 %v947
        %v1010 = vpop.f32.mrf.mxu0
        %v1011 = vadd.f32 0.0, %v1010
        %1012 = vdwg.mxu0
        %v1013 = vmul.f32 %v669, %v1011
        %v1014 = vadd.f32 %v992, %v1013
        %v1015 = vperm.slane %v634, 1
        %v1016 = vmul.f32 %v1015, %v1014
        %v1017 = vadd.f32 %v891, %v1016
        %1018 = vrot.lane.b32.xlu0 %v673, 112
        %v1019 = vpop.permute.xlu0 %1018
        %v1021 = vadd.f32 %v635, %v1019
        %1022 = vrot.lane.b32.xlu0 %v681, 112
        %v1023 = vpop.permute.xlu0 %1022
        %v1025 = vadd.f32 %v637, %v1023
        %v1026 = vmax.f32 %v1025, 1e-24
        %v1027 = vrsqrt.pop %v1026
        %v1028 = vmul.f32 %v1027, %v1026
        %v1029 = vmul.f32 %v1028, %v1027
        %v1030 = vmul.f32 0.5, %v1029
        %v1031 = vsub.f32 1.5, %v1030
        %v1032 = vmul.f32 %v1027, %v1031
        %v1033 = vmul.f32 %v1026, %v1032
        %vm1034 = vcmp.eq.f32.partialorder %v1026, inf
        %v1035 = vsel %vm1034, %v1026, %v1033
        %vm1036 = vcmp.eq.f32.partialorder %v1026, 0.0
        %v1037 = vand.u32 %v1026, 2147483648
        %v1038 = vsel %vm1036, %v1037, %v1035
        %v1039 = vmul.f32 %v1021, %v1021
        %v1040 = vadd.f32 %v1039, %v1025
        %v1041 = vsel %vm691, %v1040, 0.0
        %1042 = vadd.xlane.f32.xlu0 %v1041
        %v1043 = vpop.xlane.xlu0 %1042
        %v1044 = vsel %vm691, %v1021, 1.0
        %v1045 = vsel %vm691, %v1038, 1.0
        %v1047 = vsel %vm783, %v1044, 0
        %1049 = vmatpush.xpose.msra.mxu0 0.0
        %1050 = vmatpush.xpose.msra.mxu0 0.0
        %1051 = vmatpush.xpose.msra.mxu0 0.0
        %1052 = vmatpush.xpose.msra.mxu0 0.0
        %1053 = vmatpush.xpose.msra.mxu0 0.0
        %1054 = vmatpush.xpose.msra.mxu0 0.0
        %1055 = vmatpush.xpose.msra.mxu0 0.0
        %1056 = vmatpush.xpose.msra.mxu0 0.0
        %1057 = vmatpush.xpose.msra.mxu0 0.0
        %1058 = vmatpush.xpose.msra.mxu0 0.0
        %1059 = vmatpush.xpose.msra.mxu0 0.0
        %1060 = vmatpush.xpose.msra.mxu0 0.0
        %1061 = vmatpush.xpose.msra.mxu0 0.0
        %1062 = vmatpush.xpose.msra.mxu0 0.0
        %1063 = vmatpush.xpose.msra.mxu0 0.0
        %1064 = vmatpush.xpose.msra.mxu0 %v788
        %1065 = vmatmul.f32.gmra.mxu0 %v1047
        %v1066 = vpop.f32.mrf.mxu0
        %v1067 = vadd.f32 0.0, %v1066
        %1068 = vdwg.mxu0
        %v1069 = vadd.f32 %v1043, %v1067
        %v1071 = vsel %vm783, %v1045, 0
        %1073 = vmatpush.xpose.msra.mxu0 0.0
        %1074 = vmatpush.xpose.msra.mxu0 0.0
        %1075 = vmatpush.xpose.msra.mxu0 0.0
        %1076 = vmatpush.xpose.msra.mxu0 0.0
        %1077 = vmatpush.xpose.msra.mxu0 0.0
        %1078 = vmatpush.xpose.msra.mxu0 0.0
        %1079 = vmatpush.xpose.msra.mxu0 0.0
        %1080 = vmatpush.xpose.msra.mxu0 0.0
        %1081 = vmatpush.xpose.msra.mxu0 0.0
        %1082 = vmatpush.xpose.msra.mxu0 0.0
        %1083 = vmatpush.xpose.msra.mxu0 0.0
        %1084 = vmatpush.xpose.msra.mxu0 0.0
        %1085 = vmatpush.xpose.msra.mxu0 0.0
        %1086 = vmatpush.xpose.msra.mxu0 0.0
        %1087 = vmatpush.xpose.msra.mxu0 0.0
        %1088 = vmatpush.xpose.msra.mxu0 %v815
        %1089 = vmatmul.f32.gmra.mxu0 %v1071
        %v1090 = vpop.f32.mrf.mxu0
        %v1091 = vadd.f32 0.0, %v1090
        %1092 = vdwg.mxu0
        %v1093 = vmul.f32 %v656, %v1091
        %v1094 = vadd.f32 %v1069, %v1093
        %1095 = vmatpush.xpose.msra.mxu0 0.0
        %1096 = vmatpush.xpose.msra.mxu0 0.0
        %1097 = vmatpush.xpose.msra.mxu0 0.0
        %1098 = vmatpush.xpose.msra.mxu0 0.0
        %1099 = vmatpush.xpose.msra.mxu0 0.0
        %1100 = vmatpush.xpose.msra.mxu0 0.0
        %1101 = vmatpush.xpose.msra.mxu0 0.0
        %1102 = vmatpush.xpose.msra.mxu0 0.0
        %1103 = vmatpush.xpose.msra.mxu0 0.0
        %1104 = vmatpush.xpose.msra.mxu0 0.0
        %1105 = vmatpush.xpose.msra.mxu0 0.0
        %1106 = vmatpush.xpose.msra.mxu0 0.0
        %1107 = vmatpush.xpose.msra.mxu0 0.0
        %1108 = vmatpush.xpose.msra.mxu0 0.0
        %1109 = vmatpush.xpose.msra.mxu0 0.0
        %1110 = vmatpush.xpose.msra.mxu0 %v840
        %1111 = vmatmul.f32.gmra.mxu0 %v1071
        %v1112 = vpop.f32.mrf.mxu0
        %v1113 = vadd.f32 0.0, %v1112
        %1114 = vdwg.mxu0
        %v1115 = vmul.f32 %v662, %v1113
        %v1116 = vadd.f32 %v1094, %v1115
        %1117 = vmatpush.xpose.msra.mxu0 0.0
        %1118 = vmatpush.xpose.msra.mxu0 0.0
        %1119 = vmatpush.xpose.msra.mxu0 0.0
        %1120 = vmatpush.xpose.msra.mxu0 0.0
        %1121 = vmatpush.xpose.msra.mxu0 0.0
        %1122 = vmatpush.xpose.msra.mxu0 0.0
        %1123 = vmatpush.xpose.msra.mxu0 0.0
        %1124 = vmatpush.xpose.msra.mxu0 0.0
        %1125 = vmatpush.xpose.msra.mxu0 0.0
        %1126 = vmatpush.xpose.msra.mxu0 0.0
        %1127 = vmatpush.xpose.msra.mxu0 0.0
        %1128 = vmatpush.xpose.msra.mxu0 0.0
        %1129 = vmatpush.xpose.msra.mxu0 0.0
        %1130 = vmatpush.xpose.msra.mxu0 0.0
        %1131 = vmatpush.xpose.msra.mxu0 0.0
        %1132 = vmatpush.xpose.msra.mxu0 %v865
        %1133 = vmatmul.f32.gmra.mxu0 %v1071
        %v1134 = vpop.f32.mrf.mxu0
        %v1135 = vadd.f32 0.0, %v1134
        %1136 = vdwg.mxu0
        %v1137 = vmul.f32 %v669, %v1135
        %v1138 = vadd.f32 %v1116, %v1137
        %v1139 = vperm.slane %v634, 2
        %v1140 = vmul.f32 %v1139, %v1138
        %v1141 = vadd.f32 %v1017, %v1140
        %v1142 = vmul.f32 %v1141, -0.35355338
        %v1143 = vsel %vm691, %v1142, -inf
        %1144 = vmax.xlane.f32.xlu0 %v1143
        %v1145 = vpop.xlane.xlu0 %1144
        %v1146 = vsub.f32 %v1142, %v1145
        %v1147 = vmul.f32 %v1146, 1.442695
        %v1148 = vpow.pop %v1147
        %v1149 = vsel %vm691, %v1148, 0.0
        %1150 = vadd.xlane.f32.xlu0 %v1149
        %v1151 = vpop.xlane.xlu0 %1150
        %v1152 = vrcp.pop %v1151
        %v1153 = vmul.f32 %v1151, %v1152
        %v1154 = vsub.f32 2.0, %v1153
        %v1155 = vmul.f32 %v1152, %v1154
        %v1156 = vmul.f32 %v1148, %v1155
        %1157 = vst.msk [vmem:[%s585] sm:$0xff] %vm691, %v1156
        %v1159 = vsel %vm691, %v1156, 0
        %1161 = vmatpush.msra.mxu0 0.0
        %1162 = vmatpush.msra.mxu0 0.0
        %1163 = vmatpush.msra.mxu0 0.0
        %1164 = vmatpush.msra.mxu0 0.0
        %1165 = vmatpush.msra.mxu0 0.0
        %1166 = vmatpush.msra.mxu0 0.0
        %1167 = vmatpush.msra.mxu0 0.0
        %1168 = vmatpush.msra.mxu0 0.0
        %1169 = vmatpush.msra.mxu0 0.0
        %1170 = vmatpush.msra.mxu0 0.0
        %1171 = vmatpush.msra.mxu0 0.0
        %1172 = vmatpush.msra.mxu0 0.0
        %1173 = vmatpush.msra.mxu0 0.0
        %1174 = vmatpush.msra.mxu0 0.0
        %1175 = vmatpush.msra.mxu0 0.0
        %1176 = vmatpush.msra.mxu0 %v639
        %1177 = vmatmul.f32.gmra.mxu0 %v1159
        %v1178 = vpop.f32.mrf.mxu0
        %v1179 = vadd.f32 0.0, %v1178
        %1180 = vdwg.mxu0
        %v1181 = vmul.f32 %v1156, %v1156
        %v1183 = vsel %vm691, %v1181, 0
        %1185 = vmatpush.msra.mxu0 0.0
        %1186 = vmatpush.msra.mxu0 0.0
        %1187 = vmatpush.msra.mxu0 0.0
        %1188 = vmatpush.msra.mxu0 0.0
        %1189 = vmatpush.msra.mxu0 0.0
        %1190 = vmatpush.msra.mxu0 0.0
        %1191 = vmatpush.msra.mxu0 0.0
        %1192 = vmatpush.msra.mxu0 0.0
        %1193 = vmatpush.msra.mxu0 0.0
        %1194 = vmatpush.msra.mxu0 0.0
        %1195 = vmatpush.msra.mxu0 0.0
        %1196 = vmatpush.msra.mxu0 0.0
        %1197 = vmatpush.msra.mxu0 0.0
        %1198 = vmatpush.msra.mxu0 0.0
        %1199 = vmatpush.msra.mxu0 0.0
        %1200 = vmatpush.msra.mxu0 %v640
        %1201 = vmatmul.f32.gmra.mxu0 %v1183
        %v1202 = vpop.f32.mrf.mxu0
        %v1203 = vadd.f32 0.0, %v1202
        %1204 = vdwg.mxu0
        %v1205 = vperm.slane %v642, 0
        %v1206 = vmul.f32 %v656, %v1205
        %v1207 = vperm.slane %v642, 1
        %v1208 = vmul.f32 %v662, %v1207
        %v1209 = vadd.f32 %v1206, %v1208
        %v1210 = vperm.slane %v642, 2
        %v1211 = vmul.f32 %v669, %v1210
        %v1212 = vadd.f32 %v1209, %v1211
        %v1213 = vperm.slane %v646, 0
        %v1214 = vmul.f32 %v656, %v1213
        %v1215 = vperm.slane %v646, 1
        %v1216 = vmul.f32 %v662, %v1215
        %v1217 = vadd.f32 %v1214, %v1216
        %v1218 = vperm.slane %v646, 2
        %v1219 = vmul.f32 %v669, %v1218
        %v1220 = vadd.f32 %v1217, %v1219
        %v1221 = vperm.slane %v650, 0
        %v1222 = vmul.f32 %v656, %v1221
        %v1223 = vperm.slane %v650, 1
        %v1224 = vmul.f32 %v662, %v1223
        %v1225 = vadd.f32 %v1222, %v1224
        %v1226 = vperm.slane %v650, 2
        %v1227 = vmul.f32 %v669, %v1226
        %v1228 = vadd.f32 %v1225, %v1227
        %1230 = vrot.lane.b32.xlu0 %v690, 120
        %v1231 = vpop.permute.xlu0 %1230
        %v1233 = vsel %vm691, %v1231, 0.0
        %1234 = vadd.xlane.f32.xlu0 %v1233
        %v1235 = vpop.xlane.xlu0 %1234
        %1237 = vrot.lane.b32.xlu0 %v695, 120
        %v1238 = vpop.permute.xlu0 %1237
        %v1240 = vsel %vm691, %v1238, %v1235
        %1242 = vrot.lane.b32.xlu0 %v1228, 8
        %v1243 = vpop.permute.xlu0 %1242
        %v1245 = vadd.f32 %v638, %v1243
        %v1246 = vmax.f32 %v1245, 1e-24
        %v1247 = vrsqrt.pop %v1246
        %v1248 = vmul.f32 %v1247, %v1246
        %v1249 = vmul.f32 %v1248, %v1247
        %v1250 = vmul.f32 0.5, %v1249
        %v1251 = vsub.f32 1.5, %v1250
        %v1252 = vmul.f32 %v1247, %v1251
        %v1253 = vmul.f32 %v1246, %v1252
        %vm1254 = vcmp.eq.f32.partialorder %v1246, inf
        %v1255 = vsel %vm1254, %v1246, %v1253
        %vm1256 = vcmp.eq.f32.partialorder %v1246, 0.0
        %v1257 = vand.u32 %v1246, 2147483648
        %v1258 = vsel %vm1256, %v1257, %v1255
        %1260 = vrot.lane.b32.xlu0 %v1245, 120
        %v1261 = vpop.permute.xlu0 %1260
        %v1263 = vsel %vm691, %v1261, 0.0
        %1264 = vadd.xlane.f32.xlu0 %v1263
        %v1265 = vpop.xlane.xlu0 %1264
        %v1266 = vmul.f32 %v1258, -2.0
        %1268 = vrot.lane.b32.xlu0 %v1266, 120
        %v1269 = vpop.permute.xlu0 %1268
        %v1271 = vsel %vm691, %v1269, %v1265
        %v1272 = vadd.f32 %v638, %v1228
        %v1273 = vmax.f32 %v1272, 1e-24
        %v1274 = vrsqrt.pop %v1273
        %v1275 = vmul.f32 %v1274, %v1273
        %v1276 = vmul.f32 %v1275, %v1274
        %v1277 = vmul.f32 0.5, %v1276
        %v1278 = vsub.f32 1.5, %v1277
        %v1279 = vmul.f32 %v1274, %v1278
        %v1280 = vmul.f32 %v1273, %v1279
        %vm1281 = vcmp.eq.f32.partialorder %v1273, inf
        %v1282 = vsel %vm1281, %v1273, %v1280
        %vm1283 = vcmp.eq.f32.partialorder %v1273, 0.0
        %v1284 = vand.u32 %v1273, 2147483648
        %v1285 = vsel %vm1283, %v1284, %v1282
        %1287 = vrot.lane.b32.xlu0 %v1272, 120
        %v1288 = vpop.permute.xlu0 %1287
        %v1290 = vsel %vm691, %v1288, 0.0
        %1291 = vadd.xlane.f32.xlu0 %v1290
        %v1292 = vpop.xlane.xlu0 %1291
        %v1293 = vmul.f32 %v1285, -2.0
        %1295 = vrot.lane.b32.xlu0 %v1293, 120
        %v1296 = vpop.permute.xlu0 %1295
        %v1298 = vsel %vm691, %v1296, %v1292
        %1299 = vrot.lane.b32.xlu0 %v1228, 120
        %v1300 = vpop.permute.xlu0 %1299
        %v1302 = vadd.f32 %v638, %v1300
        %v1303 = vmax.f32 %v1302, 1e-24
        %v1304 = vrsqrt.pop %v1303
        %v1305 = vmul.f32 %v1304, %v1303
        %v1306 = vmul.f32 %v1305, %v1304
        %v1307 = vmul.f32 0.5, %v1306
        %v1308 = vsub.f32 1.5, %v1307
        %v1309 = vmul.f32 %v1304, %v1308
        %v1310 = vmul.f32 %v1303, %v1309
        %vm1311 = vcmp.eq.f32.partialorder %v1303, inf
        %v1312 = vsel %vm1311, %v1303, %v1310
        %vm1313 = vcmp.eq.f32.partialorder %v1303, 0.0
        %v1314 = vand.u32 %v1303, 2147483648
        %v1315 = vsel %vm1313, %v1314, %v1312
        %1317 = vrot.lane.b32.xlu0 %v1302, 120
        %v1318 = vpop.permute.xlu0 %1317
        %v1320 = vsel %vm691, %v1318, 0.0
        %1321 = vadd.xlane.f32.xlu0 %v1320
        %v1322 = vpop.xlane.xlu0 %1321
        %v1323 = vmul.f32 %v1315, -2.0
        %1325 = vrot.lane.b32.xlu0 %v1323, 120
        %v1326 = vpop.permute.xlu0 %1325
        %v1328 = vsel %vm691, %v1326, %v1322
        %1330 = vrot.lane.b32.xlu0 %v1212, 8
        %v1331 = vpop.permute.xlu0 %1330
        %v1333 = vadd.f32 %v635, %v1331
        %1335 = vrot.lane.b32.xlu0 %v1220, 8
        %v1336 = vpop.permute.xlu0 %1335
        %v1338 = vadd.f32 %v637, %v1336
        %v1339 = vmax.f32 %v1338, 1e-24
        %v1340 = vrsqrt.pop %v1339
        %v1341 = vmul.f32 %v1340, %v1339
        %v1342 = vmul.f32 %v1341, %v1340
        %v1343 = vmul.f32 0.5, %v1342
        %v1344 = vsub.f32 1.5, %v1343
        %v1345 = vmul.f32 %v1340, %v1344
        %v1346 = vmul.f32 %v1339, %v1345
        %vm1347 = vcmp.eq.f32.partialorder %v1339, inf
        %v1348 = vsel %vm1347, %v1339, %v1346
        %vm1349 = vcmp.eq.f32.partialorder %v1339, 0.0
        %v1350 = vand.u32 %v1339, 2147483648
        %v1351 = vsel %vm1349, %v1350, %v1348
        %v1352 = vmul.f32 %v1333, %v1333
        %v1353 = vadd.f32 %v1352, %v1338
        %1355 = vrot.lane.b32.xlu0 %v1353, 120
        %v1356 = vpop.permute.xlu0 %1355
        %v1358 = vsel %vm691, %v1356, 0.0
        %1359 = vadd.xlane.f32.xlu0 %v1358
        %v1360 = vpop.xlane.xlu0 %1359
        %1362 = vrot.lane.b32.xlu0 %v1333, 120
        %v1363 = vpop.permute.xlu0 %1362
        %v1365 = vsel %vm691, %v1363, 1.0
        %1367 = vrot.lane.b32.xlu0 %v1351, 120
        %v1368 = vpop.permute.xlu0 %1367
        %v1370 = vsel %vm691, %v1368, 1.0
        %v1372 = vsel %vm783, %v1365, 0
        %v1375 = vsel %vm783, %v1240, 0
        %1377 = vmatpush.xpose.msra.mxu0 0.0
        %1378 = vmatpush.xpose.msra.mxu0 0.0
        %1379 = vmatpush.xpose.msra.mxu0 0.0
        %1380 = vmatpush.xpose.msra.mxu0 0.0
        %1381 = vmatpush.xpose.msra.mxu0 0.0
        %1382 = vmatpush.xpose.msra.mxu0 0.0
        %1383 = vmatpush.xpose.msra.mxu0 0.0
        %1384 = vmatpush.xpose.msra.mxu0 0.0
        %1385 = vmatpush.xpose.msra.mxu0 0.0
        %1386 = vmatpush.xpose.msra.mxu0 0.0
        %1387 = vmatpush.xpose.msra.mxu0 0.0
        %1388 = vmatpush.xpose.msra.mxu0 0.0
        %1389 = vmatpush.xpose.msra.mxu0 0.0
        %1390 = vmatpush.xpose.msra.mxu0 0.0
        %1391 = vmatpush.xpose.msra.mxu0 0.0
        %1392 = vmatpush.xpose.msra.mxu0 %v1375
        %1393 = vmatmul.f32.gmra.mxu0 %v1372
        %v1394 = vpop.f32.mrf.mxu0
        %v1395 = vadd.f32 0.0, %v1394
        %1396 = vdwg.mxu0
        %v1397 = vadd.f32 %v1360, %v1395
        %v1399 = vsel %vm783, %v1370, 0
        %v1402 = vsel %vm783, %v1271, 0
        %1404 = vmatpush.xpose.msra.mxu0 0.0
        %1405 = vmatpush.xpose.msra.mxu0 0.0
        %1406 = vmatpush.xpose.msra.mxu0 0.0
        %1407 = vmatpush.xpose.msra.mxu0 0.0
        %1408 = vmatpush.xpose.msra.mxu0 0.0
        %1409 = vmatpush.xpose.msra.mxu0 0.0
        %1410 = vmatpush.xpose.msra.mxu0 0.0
        %1411 = vmatpush.xpose.msra.mxu0 0.0
        %1412 = vmatpush.xpose.msra.mxu0 0.0
        %1413 = vmatpush.xpose.msra.mxu0 0.0
        %1414 = vmatpush.xpose.msra.mxu0 0.0
        %1415 = vmatpush.xpose.msra.mxu0 0.0
        %1416 = vmatpush.xpose.msra.mxu0 0.0
        %1417 = vmatpush.xpose.msra.mxu0 0.0
        %1418 = vmatpush.xpose.msra.mxu0 0.0
        %1419 = vmatpush.xpose.msra.mxu0 %v1402
        %1420 = vmatmul.f32.gmra.mxu0 %v1399
        %v1421 = vpop.f32.mrf.mxu0
        %v1422 = vadd.f32 0.0, %v1421
        %1423 = vdwg.mxu0
        %v1424 = vmul.f32 %v656, %v1422
        %v1425 = vadd.f32 %v1397, %v1424
        %v1427 = vsel %vm783, %v1298, 0
        %1429 = vmatpush.xpose.msra.mxu0 0.0
        %1430 = vmatpush.xpose.msra.mxu0 0.0
        %1431 = vmatpush.xpose.msra.mxu0 0.0
        %1432 = vmatpush.xpose.msra.mxu0 0.0
        %1433 = vmatpush.xpose.msra.mxu0 0.0
        %1434 = vmatpush.xpose.msra.mxu0 0.0
        %1435 = vmatpush.xpose.msra.mxu0 0.0
        %1436 = vmatpush.xpose.msra.mxu0 0.0
        %1437 = vmatpush.xpose.msra.mxu0 0.0
        %1438 = vmatpush.xpose.msra.mxu0 0.0
        %1439 = vmatpush.xpose.msra.mxu0 0.0
        %1440 = vmatpush.xpose.msra.mxu0 0.0
        %1441 = vmatpush.xpose.msra.mxu0 0.0
        %1442 = vmatpush.xpose.msra.mxu0 0.0
        %1443 = vmatpush.xpose.msra.mxu0 0.0
        %1444 = vmatpush.xpose.msra.mxu0 %v1427
        %1445 = vmatmul.f32.gmra.mxu0 %v1399
        %v1446 = vpop.f32.mrf.mxu0
        %v1447 = vadd.f32 0.0, %v1446
        %1448 = vdwg.mxu0
        %v1449 = vmul.f32 %v662, %v1447
        %v1450 = vadd.f32 %v1425, %v1449
        %v1452 = vsel %vm783, %v1328, 0
        %1454 = vmatpush.xpose.msra.mxu0 0.0
        %1455 = vmatpush.xpose.msra.mxu0 0.0
        %1456 = vmatpush.xpose.msra.mxu0 0.0
        %1457 = vmatpush.xpose.msra.mxu0 0.0
        %1458 = vmatpush.xpose.msra.mxu0 0.0
        %1459 = vmatpush.xpose.msra.mxu0 0.0
        %1460 = vmatpush.xpose.msra.mxu0 0.0
        %1461 = vmatpush.xpose.msra.mxu0 0.0
        %1462 = vmatpush.xpose.msra.mxu0 0.0
        %1463 = vmatpush.xpose.msra.mxu0 0.0
        %1464 = vmatpush.xpose.msra.mxu0 0.0
        %1465 = vmatpush.xpose.msra.mxu0 0.0
        %1466 = vmatpush.xpose.msra.mxu0 0.0
        %1467 = vmatpush.xpose.msra.mxu0 0.0
        %1468 = vmatpush.xpose.msra.mxu0 0.0
        %1469 = vmatpush.xpose.msra.mxu0 %v1452
        %1470 = vmatmul.f32.gmra.mxu0 %v1399
        %v1471 = vpop.f32.mrf.mxu0
        %v1472 = vadd.f32 0.0, %v1471
        %1473 = vdwg.mxu0
        %v1474 = vmul.f32 %v669, %v1472
        %v1475 = vadd.f32 %v1450, %v1474
        %v1476 = vmul.f32 %v889, %v1475
        %v1477 = vadd.f32 %v1476, 0.0
        %v1478 = vadd.f32 %v635, %v1212
        %v1479 = vadd.f32 %v637, %v1220
        %v1480 = vmax.f32 %v1479, 1e-24
        %v1481 = vrsqrt.pop %v1480
        %v1482 = vmul.f32 %v1481, %v1480
        %v1483 = vmul.f32 %v1482, %v1481
        %v1484 = vmul.f32 0.5, %v1483
        %v1485 = vsub.f32 1.5, %v1484
        %v1486 = vmul.f32 %v1481, %v1485
        %v1487 = vmul.f32 %v1480, %v1486
        %vm1488 = vcmp.eq.f32.partialorder %v1480, inf
        %v1489 = vsel %vm1488, %v1480, %v1487
        %vm1490 = vcmp.eq.f32.partialorder %v1480, 0.0
        %v1491 = vand.u32 %v1480, 2147483648
        %v1492 = vsel %vm1490, %v1491, %v1489
        %v1493 = vmul.f32 %v1478, %v1478
        %v1494 = vadd.f32 %v1493, %v1479
        %1496 = vrot.lane.b32.xlu0 %v1494, 120
        %v1497 = vpop.permute.xlu0 %1496
        %v1499 = vsel %vm691, %v1497, 0.0
        %1500 = vadd.xlane.f32.xlu0 %v1499
        %v1501 = vpop.xlane.xlu0 %1500
        %1503 = vrot.lane.b32.xlu0 %v1478, 120
        %v1504 = vpop.permute.xlu0 %1503
        %v1506 = vsel %vm691, %v1504, 1.0
        %1508 = vrot.lane.b32.xlu0 %v1492, 120
        %v1509 = vpop.permute.xlu0 %1508
        %v1511 = vsel %vm691, %v1509, 1.0
        %v1513 = vsel %vm783, %v1506, 0
        %1515 = vmatpush.xpose.msra.mxu0 0.0
        %1516 = vmatpush.xpose.msra.mxu0 0.0
        %1517 = vmatpush.xpose.msra.mxu0 0.0
        %1518 = vmatpush.xpose.msra.mxu0 0.0
        %1519 = vmatpush.xpose.msra.mxu0 0.0
        %1520 = vmatpush.xpose.msra.mxu0 0.0
        %1521 = vmatpush.xpose.msra.mxu0 0.0
        %1522 = vmatpush.xpose.msra.mxu0 0.0
        %1523 = vmatpush.xpose.msra.mxu0 0.0
        %1524 = vmatpush.xpose.msra.mxu0 0.0
        %1525 = vmatpush.xpose.msra.mxu0 0.0
        %1526 = vmatpush.xpose.msra.mxu0 0.0
        %1527 = vmatpush.xpose.msra.mxu0 0.0
        %1528 = vmatpush.xpose.msra.mxu0 0.0
        %1529 = vmatpush.xpose.msra.mxu0 0.0
        %1530 = vmatpush.xpose.msra.mxu0 %v1375
        %1531 = vmatmul.f32.gmra.mxu0 %v1513
        %v1532 = vpop.f32.mrf.mxu0
        %v1533 = vadd.f32 0.0, %v1532
        %1534 = vdwg.mxu0
        %v1535 = vadd.f32 %v1501, %v1533
        %v1537 = vsel %vm783, %v1511, 0
        %1539 = vmatpush.xpose.msra.mxu0 0.0
        %1540 = vmatpush.xpose.msra.mxu0 0.0
        %1541 = vmatpush.xpose.msra.mxu0 0.0
        %1542 = vmatpush.xpose.msra.mxu0 0.0
        %1543 = vmatpush.xpose.msra.mxu0 0.0
        %1544 = vmatpush.xpose.msra.mxu0 0.0
        %1545 = vmatpush.xpose.msra.mxu0 0.0
        %1546 = vmatpush.xpose.msra.mxu0 0.0
        %1547 = vmatpush.xpose.msra.mxu0 0.0
        %1548 = vmatpush.xpose.msra.mxu0 0.0
        %1549 = vmatpush.xpose.msra.mxu0 0.0
        %1550 = vmatpush.xpose.msra.mxu0 0.0
        %1551 = vmatpush.xpose.msra.mxu0 0.0
        %1552 = vmatpush.xpose.msra.mxu0 0.0
        %1553 = vmatpush.xpose.msra.mxu0 0.0
        %1554 = vmatpush.xpose.msra.mxu0 %v1402
        %1555 = vmatmul.f32.gmra.mxu0 %v1537
        %v1556 = vpop.f32.mrf.mxu0
        %v1557 = vadd.f32 0.0, %v1556
        %1558 = vdwg.mxu0
        %v1559 = vmul.f32 %v656, %v1557
        %v1560 = vadd.f32 %v1535, %v1559
        %1561 = vmatpush.xpose.msra.mxu0 0.0
        %1562 = vmatpush.xpose.msra.mxu0 0.0
        %1563 = vmatpush.xpose.msra.mxu0 0.0
        %1564 = vmatpush.xpose.msra.mxu0 0.0
        %1565 = vmatpush.xpose.msra.mxu0 0.0
        %1566 = vmatpush.xpose.msra.mxu0 0.0
        %1567 = vmatpush.xpose.msra.mxu0 0.0
        %1568 = vmatpush.xpose.msra.mxu0 0.0
        %1569 = vmatpush.xpose.msra.mxu0 0.0
        %1570 = vmatpush.xpose.msra.mxu0 0.0
        %1571 = vmatpush.xpose.msra.mxu0 0.0
        %1572 = vmatpush.xpose.msra.mxu0 0.0
        %1573 = vmatpush.xpose.msra.mxu0 0.0
        %1574 = vmatpush.xpose.msra.mxu0 0.0
        %1575 = vmatpush.xpose.msra.mxu0 0.0
        %1576 = vmatpush.xpose.msra.mxu0 %v1427
        %1577 = vmatmul.f32.gmra.mxu0 %v1537
        %v1578 = vpop.f32.mrf.mxu0
        %v1579 = vadd.f32 0.0, %v1578
        %1580 = vdwg.mxu0
        %v1581 = vmul.f32 %v662, %v1579
        %v1582 = vadd.f32 %v1560, %v1581
        %1583 = vmatpush.xpose.msra.mxu0 0.0
        %1584 = vmatpush.xpose.msra.mxu0 0.0
        %1585 = vmatpush.xpose.msra.mxu0 0.0
        %1586 = vmatpush.xpose.msra.mxu0 0.0
        %1587 = vmatpush.xpose.msra.mxu0 0.0
        %1588 = vmatpush.xpose.msra.mxu0 0.0
        %1589 = vmatpush.xpose.msra.mxu0 0.0
        %1590 = vmatpush.xpose.msra.mxu0 0.0
        %1591 = vmatpush.xpose.msra.mxu0 0.0
        %1592 = vmatpush.xpose.msra.mxu0 0.0
        %1593 = vmatpush.xpose.msra.mxu0 0.0
        %1594 = vmatpush.xpose.msra.mxu0 0.0
        %1595 = vmatpush.xpose.msra.mxu0 0.0
        %1596 = vmatpush.xpose.msra.mxu0 0.0
        %1597 = vmatpush.xpose.msra.mxu0 0.0
        %1598 = vmatpush.xpose.msra.mxu0 %v1452
        %1599 = vmatmul.f32.gmra.mxu0 %v1537
        %v1600 = vpop.f32.mrf.mxu0
        %v1601 = vadd.f32 0.0, %v1600
        %1602 = vdwg.mxu0
        %v1603 = vmul.f32 %v669, %v1601
        %v1604 = vadd.f32 %v1582, %v1603
        %v1605 = vmul.f32 %v1015, %v1604
        %v1606 = vadd.f32 %v1477, %v1605
        %1607 = vrot.lane.b32.xlu0 %v1212, 120
        %v1608 = vpop.permute.xlu0 %1607
        %v1610 = vadd.f32 %v635, %v1608
        %1611 = vrot.lane.b32.xlu0 %v1220, 120
        %v1612 = vpop.permute.xlu0 %1611
        %v1614 = vadd.f32 %v637, %v1612
        %v1615 = vmax.f32 %v1614, 1e-24
        %v1616 = vrsqrt.pop %v1615
        %v1617 = vmul.f32 %v1616, %v1615
        %v1618 = vmul.f32 %v1617, %v1616
        %v1619 = vmul.f32 0.5, %v1618
        %v1620 = vsub.f32 1.5, %v1619
        %v1621 = vmul.f32 %v1616, %v1620
        %v1622 = vmul.f32 %v1615, %v1621
        %vm1623 = vcmp.eq.f32.partialorder %v1615, inf
        %v1624 = vsel %vm1623, %v1615, %v1622
        %vm1625 = vcmp.eq.f32.partialorder %v1615, 0.0
        %v1626 = vand.u32 %v1615, 2147483648
        %v1627 = vsel %vm1625, %v1626, %v1624
        %v1628 = vmul.f32 %v1610, %v1610
        %v1629 = vadd.f32 %v1628, %v1614
        %1631 = vrot.lane.b32.xlu0 %v1629, 120
        %v1632 = vpop.permute.xlu0 %1631
        %v1634 = vsel %vm691, %v1632, 0.0
        %1635 = vadd.xlane.f32.xlu0 %v1634
        %v1636 = vpop.xlane.xlu0 %1635
        %1638 = vrot.lane.b32.xlu0 %v1610, 120
        %v1639 = vpop.permute.xlu0 %1638
        %v1641 = vsel %vm691, %v1639, 1.0
        %1643 = vrot.lane.b32.xlu0 %v1627, 120
        %v1644 = vpop.permute.xlu0 %1643
        %v1646 = vsel %vm691, %v1644, 1.0
        %v1648 = vsel %vm783, %v1641, 0
        %1650 = vmatpush.xpose.msra.mxu0 0.0
        %1651 = vmatpush.xpose.msra.mxu0 0.0
        %1652 = vmatpush.xpose.msra.mxu0 0.0
        %1653 = vmatpush.xpose.msra.mxu0 0.0
        %1654 = vmatpush.xpose.msra.mxu0 0.0
        %1655 = vmatpush.xpose.msra.mxu0 0.0
        %1656 = vmatpush.xpose.msra.mxu0 0.0
        %1657 = vmatpush.xpose.msra.mxu0 0.0
        %1658 = vmatpush.xpose.msra.mxu0 0.0
        %1659 = vmatpush.xpose.msra.mxu0 0.0
        %1660 = vmatpush.xpose.msra.mxu0 0.0
        %1661 = vmatpush.xpose.msra.mxu0 0.0
        %1662 = vmatpush.xpose.msra.mxu0 0.0
        %1663 = vmatpush.xpose.msra.mxu0 0.0
        %1664 = vmatpush.xpose.msra.mxu0 0.0
        %1665 = vmatpush.xpose.msra.mxu0 %v1375
        %1666 = vmatmul.f32.gmra.mxu0 %v1648
        %v1667 = vpop.f32.mrf.mxu0
        %v1668 = vadd.f32 0.0, %v1667
        %1669 = vdwg.mxu0
        %v1670 = vadd.f32 %v1636, %v1668
        %v1672 = vsel %vm783, %v1646, 0
        %1674 = vmatpush.xpose.msra.mxu0 0.0
        %1675 = vmatpush.xpose.msra.mxu0 0.0
        %1676 = vmatpush.xpose.msra.mxu0 0.0
        %1677 = vmatpush.xpose.msra.mxu0 0.0
        %1678 = vmatpush.xpose.msra.mxu0 0.0
        %1679 = vmatpush.xpose.msra.mxu0 0.0
        %1680 = vmatpush.xpose.msra.mxu0 0.0
        %1681 = vmatpush.xpose.msra.mxu0 0.0
        %1682 = vmatpush.xpose.msra.mxu0 0.0
        %1683 = vmatpush.xpose.msra.mxu0 0.0
        %1684 = vmatpush.xpose.msra.mxu0 0.0
        %1685 = vmatpush.xpose.msra.mxu0 0.0
        %1686 = vmatpush.xpose.msra.mxu0 0.0
        %1687 = vmatpush.xpose.msra.mxu0 0.0
        %1688 = vmatpush.xpose.msra.mxu0 0.0
        %1689 = vmatpush.xpose.msra.mxu0 %v1402
        %1690 = vmatmul.f32.gmra.mxu0 %v1672
        %v1691 = vpop.f32.mrf.mxu0
        %v1692 = vadd.f32 0.0, %v1691
        %1693 = vdwg.mxu0
        %v1694 = vmul.f32 %v656, %v1692
        %v1695 = vadd.f32 %v1670, %v1694
        %1696 = vmatpush.xpose.msra.mxu0 0.0
        %1697 = vmatpush.xpose.msra.mxu0 0.0
        %1698 = vmatpush.xpose.msra.mxu0 0.0
        %1699 = vmatpush.xpose.msra.mxu0 0.0
        %1700 = vmatpush.xpose.msra.mxu0 0.0
        %1701 = vmatpush.xpose.msra.mxu0 0.0
        %1702 = vmatpush.xpose.msra.mxu0 0.0
        %1703 = vmatpush.xpose.msra.mxu0 0.0
        %1704 = vmatpush.xpose.msra.mxu0 0.0
        %1705 = vmatpush.xpose.msra.mxu0 0.0
        %1706 = vmatpush.xpose.msra.mxu0 0.0
        %1707 = vmatpush.xpose.msra.mxu0 0.0
        %1708 = vmatpush.xpose.msra.mxu0 0.0
        %1709 = vmatpush.xpose.msra.mxu0 0.0
        %1710 = vmatpush.xpose.msra.mxu0 0.0
        %1711 = vmatpush.xpose.msra.mxu0 %v1427
        %1712 = vmatmul.f32.gmra.mxu0 %v1672
        %v1713 = vpop.f32.mrf.mxu0
        %v1714 = vadd.f32 0.0, %v1713
        %1715 = vdwg.mxu0
        %v1716 = vmul.f32 %v662, %v1714
        %v1717 = vadd.f32 %v1695, %v1716
        %1718 = vmatpush.xpose.msra.mxu0 0.0
        %1719 = vmatpush.xpose.msra.mxu0 0.0
        %1720 = vmatpush.xpose.msra.mxu0 0.0
        %1721 = vmatpush.xpose.msra.mxu0 0.0
        %1722 = vmatpush.xpose.msra.mxu0 0.0
        %1723 = vmatpush.xpose.msra.mxu0 0.0
        %1724 = vmatpush.xpose.msra.mxu0 0.0
        %1725 = vmatpush.xpose.msra.mxu0 0.0
        %1726 = vmatpush.xpose.msra.mxu0 0.0
        %1727 = vmatpush.xpose.msra.mxu0 0.0
        %1728 = vmatpush.xpose.msra.mxu0 0.0
        %1729 = vmatpush.xpose.msra.mxu0 0.0
        %1730 = vmatpush.xpose.msra.mxu0 0.0
        %1731 = vmatpush.xpose.msra.mxu0 0.0
        %1732 = vmatpush.xpose.msra.mxu0 0.0
        %1733 = vmatpush.xpose.msra.mxu0 %v1452
        %1734 = vmatmul.f32.gmra.mxu0 %v1672
        %v1735 = vpop.f32.mrf.mxu0
        %v1736 = vadd.f32 0.0, %v1735
        %1737 = vdwg.mxu0
        %v1738 = vmul.f32 %v669, %v1736
        %v1739 = vadd.f32 %v1717, %v1738
        %v1740 = vmul.f32 %v1139, %v1739
        %v1741 = vadd.f32 %v1606, %v1740
        %v1742 = vmul.f32 %v1741, -0.35355338
        %v1743 = vsel %vm691, %v1742, -inf
        %1744 = vmax.xlane.f32.xlu0 %v1743
        %v1745 = vpop.xlane.xlu0 %1744
        %v1746 = vsub.f32 %v1742, %v1745
        %v1747 = vmul.f32 %v1746, 1.442695
        %v1748 = vpow.pop %v1747
        %v1749 = vsel %vm691, %v1748, 0.0
        %1750 = vadd.xlane.f32.xlu0 %v1749
        %v1751 = vpop.xlane.xlu0 %1750
        %v1752 = vrcp.pop %v1751
        %v1753 = vmul.f32 %v1751, %v1752
        %v1754 = vsub.f32 2.0, %v1753
        %v1755 = vmul.f32 %v1752, %v1754
        %v1756 = vmul.f32 %v1748, %v1755
        %s1757 = scalar_lea.vmem %s585, 8 [#allocation6]
        %1758 = vst.msk [vmem:[%s1757] sm:$0xff] %vm691, %v1756
        %1760 = vrot.lane.b32.xlu0 %v639, 120
        %v1761 = vpop.permute.xlu0 %1760
        %v1764 = vsel %vm691, %v1756, 0
        %1766 = vmatpush.msra.mxu0 0.0
        %1767 = vmatpush.msra.mxu0 0.0
        %1768 = vmatpush.msra.mxu0 0.0
        %1769 = vmatpush.msra.mxu0 0.0
        %1770 = vmatpush.msra.mxu0 0.0
        %1771 = vmatpush.msra.mxu0 0.0
        %1772 = vmatpush.msra.mxu0 0.0
        %1773 = vmatpush.msra.mxu0 0.0
        %1774 = vmatpush.msra.mxu0 0.0
        %1775 = vmatpush.msra.mxu0 0.0
        %1776 = vmatpush.msra.mxu0 0.0
        %1777 = vmatpush.msra.mxu0 0.0
        %1778 = vmatpush.msra.mxu0 0.0
        %1779 = vmatpush.msra.mxu0 0.0
        %1780 = vmatpush.msra.mxu0 0.0
        %1781 = vmatpush.msra.mxu0 %v1761
        %1782 = vmatmul.f32.gmra.mxu0 %v1764
        %v1783 = vpop.f32.mrf.mxu0
        %v1784 = vadd.f32 0.0, %v1783
        %1785 = vdwg.mxu0
        %v1786 = vmul.f32 %v1756, %v1756
        %1788 = vrot.lane.b32.xlu0 %v640, 120
        %v1789 = vpop.permute.xlu0 %1788
        %v1792 = vsel %vm691, %v1786, 0
        %1794 = vmatpush.msra.mxu0 0.0
        %1795 = vmatpush.msra.mxu0 0.0
        %1796 = vmatpush.msra.mxu0 0.0
        %1797 = vmatpush.msra.mxu0 0.0
        %1798 = vmatpush.msra.mxu0 0.0
        %1799 = vmatpush.msra.mxu0 0.0
        %1800 = vmatpush.msra.mxu0 0.0
        %1801 = vmatpush.msra.mxu0 0.0
        %1802 = vmatpush.msra.mxu0 0.0
        %1803 = vmatpush.msra.mxu0 0.0
        %1804 = vmatpush.msra.mxu0 0.0
        %1805 = vmatpush.msra.mxu0 0.0
        %1806 = vmatpush.msra.mxu0 0.0
        %1807 = vmatpush.msra.mxu0 0.0
        %1808 = vmatpush.msra.mxu0 0.0
        %1809 = vmatpush.msra.mxu0 %v1789
        %1810 = vmatmul.f32.gmra.mxu0 %v1792
        %v1811 = vpop.f32.mrf.mxu0
        %v1812 = vadd.f32 0.0, %v1811
        %1813 = vdwg.mxu0
        %v1814 = vperm.slane %v643, 0
        %v1815 = vmul.f32 %v656, %v1814
        %v1816 = vperm.slane %v643, 1
        %v1817 = vmul.f32 %v662, %v1816
        %v1818 = vadd.f32 %v1815, %v1817
        %v1819 = vperm.slane %v643, 2
        %v1820 = vmul.f32 %v669, %v1819
        %v1821 = vadd.f32 %v1818, %v1820
        %v1822 = vperm.slane %v647, 0
        %v1823 = vmul.f32 %v656, %v1822
        %v1824 = vperm.slane %v647, 1
        %v1825 = vmul.f32 %v662, %v1824
        %v1826 = vadd.f32 %v1823, %v1825
        %v1827 = vperm.slane %v647, 2
        %v1828 = vmul.f32 %v669, %v1827
        %v1829 = vadd.f32 %v1826, %v1828
        %v1830 = vperm.slane %v651, 0
        %v1831 = vmul.f32 %v656, %v1830
        %v1832 = vperm.slane %v651, 1
        %v1833 = vmul.f32 %v662, %v1832
        %v1834 = vadd.f32 %v1831, %v1833
        %v1835 = vperm.slane %v651, 2
        %v1836 = vmul.f32 %v669, %v1835
        %v1837 = vadd.f32 %v1834, %v1836
        %1838 = vrot.lane.b32.xlu0 %v690, 112
        %v1839 = vpop.permute.xlu0 %1838
        %v1841 = vsel %vm691, %v1839, 0.0
        %1842 = vadd.xlane.f32.xlu0 %v1841
        %v1843 = vpop.xlane.xlu0 %1842
        %1844 = vrot.lane.b32.xlu0 %v695, 112
        %v1845 = vpop.permute.xlu0 %1844
        %v1847 = vsel %vm691, %v1845, %v1843
        %1849 = vrot.lane.b32.xlu0 %v1837, 16
        %v1850 = vpop.permute.xlu0 %1849
        %v1852 = vadd.f32 %v638, %v1850
        %v1853 = vmax.f32 %v1852, 1e-24
        %v1854 = vrsqrt.pop %v1853
        %v1855 = vmul.f32 %v1854, %v1853
        %v1856 = vmul.f32 %v1855, %v1854
        %v1857 = vmul.f32 0.5, %v1856
        %v1858 = vsub.f32 1.5, %v1857
        %v1859 = vmul.f32 %v1854, %v1858
        %v1860 = vmul.f32 %v1853, %v1859
        %vm1861 = vcmp.eq.f32.partialorder %v1853, inf
        %v1862 = vsel %vm1861, %v1853, %v1860
        %vm1863 = vcmp.eq.f32.partialorder %v1853, 0.0
        %v1864 = vand.u32 %v1853, 2147483648
        %v1865 = vsel %vm1863, %v1864, %v1862
        %1867 = vrot.lane.b32.xlu0 %v1852, 112
        %v1868 = vpop.permute.xlu0 %1867
        %v1870 = vsel %vm691, %v1868, 0.0
        %1871 = vadd.xlane.f32.xlu0 %v1870
        %v1872 = vpop.xlane.xlu0 %1871
        %v1873 = vmul.f32 %v1865, -2.0
        %1875 = vrot.lane.b32.xlu0 %v1873, 112
        %v1876 = vpop.permute.xlu0 %1875
        %v1878 = vsel %vm691, %v1876, %v1872
        %1879 = vrot.lane.b32.xlu0 %v1837, 8
        %v1880 = vpop.permute.xlu0 %1879
        %v1882 = vadd.f32 %v638, %v1880
        %v1883 = vmax.f32 %v1882, 1e-24
        %v1884 = vrsqrt.pop %v1883
        %v1885 = vmul.f32 %v1884, %v1883
        %v1886 = vmul.f32 %v1885, %v1884
        %v1887 = vmul.f32 0.5, %v1886
        %v1888 = vsub.f32 1.5, %v1887
        %v1889 = vmul.f32 %v1884, %v1888
        %v1890 = vmul.f32 %v1883, %v1889
        %vm1891 = vcmp.eq.f32.partialorder %v1883, inf
        %v1892 = vsel %vm1891, %v1883, %v1890
        %vm1893 = vcmp.eq.f32.partialorder %v1883, 0.0
        %v1894 = vand.u32 %v1883, 2147483648
        %v1895 = vsel %vm1893, %v1894, %v1892
        %1897 = vrot.lane.b32.xlu0 %v1882, 112
        %v1898 = vpop.permute.xlu0 %1897
        %v1900 = vsel %vm691, %v1898, 0.0
        %1901 = vadd.xlane.f32.xlu0 %v1900
        %v1902 = vpop.xlane.xlu0 %1901
        %v1903 = vmul.f32 %v1895, -2.0
        %1905 = vrot.lane.b32.xlu0 %v1903, 112
        %v1906 = vpop.permute.xlu0 %1905
        %v1908 = vsel %vm691, %v1906, %v1902
        %v1909 = vadd.f32 %v638, %v1837
        %v1910 = vmax.f32 %v1909, 1e-24
        %v1911 = vrsqrt.pop %v1910
        %v1912 = vmul.f32 %v1911, %v1910
        %v1913 = vmul.f32 %v1912, %v1911
        %v1914 = vmul.f32 0.5, %v1913
        %v1915 = vsub.f32 1.5, %v1914
        %v1916 = vmul.f32 %v1911, %v1915
        %v1917 = vmul.f32 %v1910, %v1916
        %vm1918 = vcmp.eq.f32.partialorder %v1910, inf
        %v1919 = vsel %vm1918, %v1910, %v1917
        %vm1920 = vcmp.eq.f32.partialorder %v1910, 0.0
        %v1921 = vand.u32 %v1910, 2147483648
        %v1922 = vsel %vm1920, %v1921, %v1919
        %1924 = vrot.lane.b32.xlu0 %v1909, 112
        %v1925 = vpop.permute.xlu0 %1924
        %v1927 = vsel %vm691, %v1925, 0.0
        %1928 = vadd.xlane.f32.xlu0 %v1927
        %v1929 = vpop.xlane.xlu0 %1928
        %v1930 = vmul.f32 %v1922, -2.0
        %1932 = vrot.lane.b32.xlu0 %v1930, 112
        %v1933 = vpop.permute.xlu0 %1932
        %v1935 = vsel %vm691, %v1933, %v1929
        %1937 = vrot.lane.b32.xlu0 %v1821, 16
        %v1938 = vpop.permute.xlu0 %1937
        %v1940 = vadd.f32 %v635, %v1938
        %1942 = vrot.lane.b32.xlu0 %v1829, 16
        %v1943 = vpop.permute.xlu0 %1942
        %v1945 = vadd.f32 %v637, %v1943
        %v1946 = vmax.f32 %v1945, 1e-24
        %v1947 = vrsqrt.pop %v1946
        %v1948 = vmul.f32 %v1947, %v1946
        %v1949 = vmul.f32 %v1948, %v1947
        %v1950 = vmul.f32 0.5, %v1949
        %v1951 = vsub.f32 1.5, %v1950
        %v1952 = vmul.f32 %v1947, %v1951
        %v1953 = vmul.f32 %v1946, %v1952
        %vm1954 = vcmp.eq.f32.partialorder %v1946, inf
        %v1955 = vsel %vm1954, %v1946, %v1953
        %vm1956 = vcmp.eq.f32.partialorder %v1946, 0.0
        %v1957 = vand.u32 %v1946, 2147483648
        %v1958 = vsel %vm1956, %v1957, %v1955
        %v1959 = vmul.f32 %v1940, %v1940
        %v1960 = vadd.f32 %v1959, %v1945
        %1962 = vrot.lane.b32.xlu0 %v1960, 112
        %v1963 = vpop.permute.xlu0 %1962
        %v1965 = vsel %vm691, %v1963, 0.0
        %1966 = vadd.xlane.f32.xlu0 %v1965
        %v1967 = vpop.xlane.xlu0 %1966
        %1969 = vrot.lane.b32.xlu0 %v1940, 112
        %v1970 = vpop.permute.xlu0 %1969
        %v1972 = vsel %vm691, %v1970, 1.0
        %1974 = vrot.lane.b32.xlu0 %v1958, 112
        %v1975 = vpop.permute.xlu0 %1974
        %v1977 = vsel %vm691, %v1975, 1.0
        %v1979 = vsel %vm783, %v1972, 0
        %v1982 = vsel %vm783, %v1847, 0
        %1984 = vmatpush.xpose.msra.mxu0 0.0
        %1985 = vmatpush.xpose.msra.mxu0 0.0
        %1986 = vmatpush.xpose.msra.mxu0 0.0
        %1987 = vmatpush.xpose.msra.mxu0 0.0
        %1988 = vmatpush.xpose.msra.mxu0 0.0
        %1989 = vmatpush.xpose.msra.mxu0 0.0
        %1990 = vmatpush.xpose.msra.mxu0 0.0
        %1991 = vmatpush.xpose.msra.mxu0 0.0
        %1992 = vmatpush.xpose.msra.mxu0 0.0
        %1993 = vmatpush.xpose.msra.mxu0 0.0
        %1994 = vmatpush.xpose.msra.mxu0 0.0
        %1995 = vmatpush.xpose.msra.mxu0 0.0
        %1996 = vmatpush.xpose.msra.mxu0 0.0
        %1997 = vmatpush.xpose.msra.mxu0 0.0
        %1998 = vmatpush.xpose.msra.mxu0 0.0
        %1999 = vmatpush.xpose.msra.mxu0 %v1982
        %2000 = vmatmul.f32.gmra.mxu0 %v1979
        %v2001 = vpop.f32.mrf.mxu0
        %v2002 = vadd.f32 0.0, %v2001
        %2003 = vdwg.mxu0
        %v2004 = vadd.f32 %v1967, %v2002
        %v2006 = vsel %vm783, %v1977, 0
        %v2009 = vsel %vm783, %v1878, 0
        %2011 = vmatpush.xpose.msra.mxu0 0.0
        %2012 = vmatpush.xpose.msra.mxu0 0.0
        %2013 = vmatpush.xpose.msra.mxu0 0.0
        %2014 = vmatpush.xpose.msra.mxu0 0.0
        %2015 = vmatpush.xpose.msra.mxu0 0.0
        %2016 = vmatpush.xpose.msra.mxu0 0.0
        %2017 = vmatpush.xpose.msra.mxu0 0.0
        %2018 = vmatpush.xpose.msra.mxu0 0.0
        %2019 = vmatpush.xpose.msra.mxu0 0.0
        %2020 = vmatpush.xpose.msra.mxu0 0.0
        %2021 = vmatpush.xpose.msra.mxu0 0.0
        %2022 = vmatpush.xpose.msra.mxu0 0.0
        %2023 = vmatpush.xpose.msra.mxu0 0.0
        %2024 = vmatpush.xpose.msra.mxu0 0.0
        %2025 = vmatpush.xpose.msra.mxu0 0.0
        %2026 = vmatpush.xpose.msra.mxu0 %v2009
        %2027 = vmatmul.f32.gmra.mxu0 %v2006
        %v2028 = vpop.f32.mrf.mxu0
        %v2029 = vadd.f32 0.0, %v2028
        %2030 = vdwg.mxu0
        %v2031 = vmul.f32 %v656, %v2029
        %v2032 = vadd.f32 %v2004, %v2031
        %v2034 = vsel %vm783, %v1908, 0
        %2036 = vmatpush.xpose.msra.mxu0 0.0
        %2037 = vmatpush.xpose.msra.mxu0 0.0
        %2038 = vmatpush.xpose.msra.mxu0 0.0
        %2039 = vmatpush.xpose.msra.mxu0 0.0
        %2040 = vmatpush.xpose.msra.mxu0 0.0
        %2041 = vmatpush.xpose.msra.mxu0 0.0
        %2042 = vmatpush.xpose.msra.mxu0 0.0
        %2043 = vmatpush.xpose.msra.mxu0 0.0
        %2044 = vmatpush.xpose.msra.mxu0 0.0
        %2045 = vmatpush.xpose.msra.mxu0 0.0
        %2046 = vmatpush.xpose.msra.mxu0 0.0
        %2047 = vmatpush.xpose.msra.mxu0 0.0
        %2048 = vmatpush.xpose.msra.mxu0 0.0
        %2049 = vmatpush.xpose.msra.mxu0 0.0
        %2050 = vmatpush.xpose.msra.mxu0 0.0
        %2051 = vmatpush.xpose.msra.mxu0 %v2034
        %2052 = vmatmul.f32.gmra.mxu0 %v2006
        %v2053 = vpop.f32.mrf.mxu0
        %v2054 = vadd.f32 0.0, %v2053
        %2055 = vdwg.mxu0
        %v2056 = vmul.f32 %v662, %v2054
        %v2057 = vadd.f32 %v2032, %v2056
        %v2059 = vsel %vm783, %v1935, 0
        %2061 = vmatpush.xpose.msra.mxu0 0.0
        %2062 = vmatpush.xpose.msra.mxu0 0.0
        %2063 = vmatpush.xpose.msra.mxu0 0.0
        %2064 = vmatpush.xpose.msra.mxu0 0.0
        %2065 = vmatpush.xpose.msra.mxu0 0.0
        %2066 = vmatpush.xpose.msra.mxu0 0.0
        %2067 = vmatpush.xpose.msra.mxu0 0.0
        %2068 = vmatpush.xpose.msra.mxu0 0.0
        %2069 = vmatpush.xpose.msra.mxu0 0.0
        %2070 = vmatpush.xpose.msra.mxu0 0.0
        %2071 = vmatpush.xpose.msra.mxu0 0.0
        %2072 = vmatpush.xpose.msra.mxu0 0.0
        %2073 = vmatpush.xpose.msra.mxu0 0.0
        %2074 = vmatpush.xpose.msra.mxu0 0.0
        %2075 = vmatpush.xpose.msra.mxu0 0.0
        %2076 = vmatpush.xpose.msra.mxu0 %v2059
        %2077 = vmatmul.f32.gmra.mxu0 %v2006
        %v2078 = vpop.f32.mrf.mxu0
        %v2079 = vadd.f32 0.0, %v2078
        %2080 = vdwg.mxu0
        %v2081 = vmul.f32 %v669, %v2079
        %v2082 = vadd.f32 %v2057, %v2081
        %v2083 = vmul.f32 %v889, %v2082
        %v2084 = vadd.f32 %v2083, 0.0
        %2085 = vrot.lane.b32.xlu0 %v1821, 8
        %v2086 = vpop.permute.xlu0 %2085
        %v2088 = vadd.f32 %v635, %v2086
        %2089 = vrot.lane.b32.xlu0 %v1829, 8
        %v2090 = vpop.permute.xlu0 %2089
        %v2092 = vadd.f32 %v637, %v2090
        %v2093 = vmax.f32 %v2092, 1e-24
        %v2094 = vrsqrt.pop %v2093
        %v2095 = vmul.f32 %v2094, %v2093
        %v2096 = vmul.f32 %v2095, %v2094
        %v2097 = vmul.f32 0.5, %v2096
        %v2098 = vsub.f32 1.5, %v2097
        %v2099 = vmul.f32 %v2094, %v2098
        %v2100 = vmul.f32 %v2093, %v2099
        %vm2101 = vcmp.eq.f32.partialorder %v2093, inf
        %v2102 = vsel %vm2101, %v2093, %v2100
        %vm2103 = vcmp.eq.f32.partialorder %v2093, 0.0
        %v2104 = vand.u32 %v2093, 2147483648
        %v2105 = vsel %vm2103, %v2104, %v2102
        %v2106 = vmul.f32 %v2088, %v2088
        %v2107 = vadd.f32 %v2106, %v2092
        %2109 = vrot.lane.b32.xlu0 %v2107, 112
        %v2110 = vpop.permute.xlu0 %2109
        %v2112 = vsel %vm691, %v2110, 0.0
        %2113 = vadd.xlane.f32.xlu0 %v2112
        %v2114 = vpop.xlane.xlu0 %2113
        %2116 = vrot.lane.b32.xlu0 %v2088, 112
        %v2117 = vpop.permute.xlu0 %2116
        %v2119 = vsel %vm691, %v2117, 1.0
        %2121 = vrot.lane.b32.xlu0 %v2105, 112
        %v2122 = vpop.permute.xlu0 %2121
        %v2124 = vsel %vm691, %v2122, 1.0
        %v2126 = vsel %vm783, %v2119, 0
        %2128 = vmatpush.xpose.msra.mxu0 0.0
        %2129 = vmatpush.xpose.msra.mxu0 0.0
        %2130 = vmatpush.xpose.msra.mxu0 0.0
        %2131 = vmatpush.xpose.msra.mxu0 0.0
        %2132 = vmatpush.xpose.msra.mxu0 0.0
        %2133 = vmatpush.xpose.msra.mxu0 0.0
        %2134 = vmatpush.xpose.msra.mxu0 0.0
        %2135 = vmatpush.xpose.msra.mxu0 0.0
        %2136 = vmatpush.xpose.msra.mxu0 0.0
        %2137 = vmatpush.xpose.msra.mxu0 0.0
        %2138 = vmatpush.xpose.msra.mxu0 0.0
        %2139 = vmatpush.xpose.msra.mxu0 0.0
        %2140 = vmatpush.xpose.msra.mxu0 0.0
        %2141 = vmatpush.xpose.msra.mxu0 0.0
        %2142 = vmatpush.xpose.msra.mxu0 0.0
        %2143 = vmatpush.xpose.msra.mxu0 %v1982
        %2144 = vmatmul.f32.gmra.mxu0 %v2126
        %v2145 = vpop.f32.mrf.mxu0
        %v2146 = vadd.f32 0.0, %v2145
        %2147 = vdwg.mxu0
        %v2148 = vadd.f32 %v2114, %v2146
        %v2150 = vsel %vm783, %v2124, 0
        %2152 = vmatpush.xpose.msra.mxu0 0.0
        %2153 = vmatpush.xpose.msra.mxu0 0.0
        %2154 = vmatpush.xpose.msra.mxu0 0.0
        %2155 = vmatpush.xpose.msra.mxu0 0.0
        %2156 = vmatpush.xpose.msra.mxu0 0.0
        %2157 = vmatpush.xpose.msra.mxu0 0.0
        %2158 = vmatpush.xpose.msra.mxu0 0.0
        %2159 = vmatpush.xpose.msra.mxu0 0.0
        %2160 = vmatpush.xpose.msra.mxu0 0.0
        %2161 = vmatpush.xpose.msra.mxu0 0.0
        %2162 = vmatpush.xpose.msra.mxu0 0.0
        %2163 = vmatpush.xpose.msra.mxu0 0.0
        %2164 = vmatpush.xpose.msra.mxu0 0.0
        %2165 = vmatpush.xpose.msra.mxu0 0.0
        %2166 = vmatpush.xpose.msra.mxu0 0.0
        %2167 = vmatpush.xpose.msra.mxu0 %v2009
        %2168 = vmatmul.f32.gmra.mxu0 %v2150
        %v2169 = vpop.f32.mrf.mxu0
        %v2170 = vadd.f32 0.0, %v2169
        %2171 = vdwg.mxu0
        %v2172 = vmul.f32 %v656, %v2170
        %v2173 = vadd.f32 %v2148, %v2172
        %2174 = vmatpush.xpose.msra.mxu0 0.0
        %2175 = vmatpush.xpose.msra.mxu0 0.0
        %2176 = vmatpush.xpose.msra.mxu0 0.0
        %2177 = vmatpush.xpose.msra.mxu0 0.0
        %2178 = vmatpush.xpose.msra.mxu0 0.0
        %2179 = vmatpush.xpose.msra.mxu0 0.0
        %2180 = vmatpush.xpose.msra.mxu0 0.0
        %2181 = vmatpush.xpose.msra.mxu0 0.0
        %2182 = vmatpush.xpose.msra.mxu0 0.0
        %2183 = vmatpush.xpose.msra.mxu0 0.0
        %2184 = vmatpush.xpose.msra.mxu0 0.0
        %2185 = vmatpush.xpose.msra.mxu0 0.0
        %2186 = vmatpush.xpose.msra.mxu0 0.0
        %2187 = vmatpush.xpose.msra.mxu0 0.0
        %2188 = vmatpush.xpose.msra.mxu0 0.0
        %2189 = vmatpush.xpose.msra.mxu0 %v2034
        %2190 = vmatmul.f32.gmra.mxu0 %v2150
        %v2191 = vpop.f32.mrf.mxu0
        %v2192 = vadd.f32 0.0, %v2191
        %2193 = vdwg.mxu0
        %v2194 = vmul.f32 %v662, %v2192
        %v2195 = vadd.f32 %v2173, %v2194
        %2196 = vmatpush.xpose.msra.mxu0 0.0
        %2197 = vmatpush.xpose.msra.mxu0 0.0
        %2198 = vmatpush.xpose.msra.mxu0 0.0
        %2199 = vmatpush.xpose.msra.mxu0 0.0
        %2200 = vmatpush.xpose.msra.mxu0 0.0
        %2201 = vmatpush.xpose.msra.mxu0 0.0
        %2202 = vmatpush.xpose.msra.mxu0 0.0
        %2203 = vmatpush.xpose.msra.mxu0 0.0
        %2204 = vmatpush.xpose.msra.mxu0 0.0
        %2205 = vmatpush.xpose.msra.mxu0 0.0
        %2206 = vmatpush.xpose.msra.mxu0 0.0
        %2207 = vmatpush.xpose.msra.mxu0 0.0
        %2208 = vmatpush.xpose.msra.mxu0 0.0
        %2209 = vmatpush.xpose.msra.mxu0 0.0
        %2210 = vmatpush.xpose.msra.mxu0 0.0
        %2211 = vmatpush.xpose.msra.mxu0 %v2059
        %2212 = vmatmul.f32.gmra.mxu0 %v2150
        %v2213 = vpop.f32.mrf.mxu0
        %v2214 = vadd.f32 0.0, %v2213
        %2215 = vdwg.mxu0
        %v2216 = vmul.f32 %v669, %v2214
        %v2217 = vadd.f32 %v2195, %v2216
        %v2218 = vmul.f32 %v1015, %v2217
        %v2219 = vadd.f32 %v2084, %v2218
        %v2220 = vadd.f32 %v635, %v1821
        %v2221 = vadd.f32 %v637, %v1829
        %v2222 = vmax.f32 %v2221, 1e-24
        %v2223 = vrsqrt.pop %v2222
        %v2224 = vmul.f32 %v2223, %v2222
        %v2225 = vmul.f32 %v2224, %v2223
        %v2226 = vmul.f32 0.5, %v2225
        %v2227 = vsub.f32 1.5, %v2226
        %v2228 = vmul.f32 %v2223, %v2227
        %v2229 = vmul.f32 %v2222, %v2228
        %vm2230 = vcmp.eq.f32.partialorder %v2222, inf
        %v2231 = vsel %vm2230, %v2222, %v2229
        %vm2232 = vcmp.eq.f32.partialorder %v2222, 0.0
        %v2233 = vand.u32 %v2222, 2147483648
        %v2234 = vsel %vm2232, %v2233, %v2231
        %v2235 = vmul.f32 %v2220, %v2220
        %v2236 = vadd.f32 %v2235, %v2221
        %2238 = vrot.lane.b32.xlu0 %v2236, 112
        %v2239 = vpop.permute.xlu0 %2238
        %v2241 = vsel %vm691, %v2239, 0.0
        %2242 = vadd.xlane.f32.xlu0 %v2241
        %v2243 = vpop.xlane.xlu0 %2242
        %2245 = vrot.lane.b32.xlu0 %v2220, 112
        %v2246 = vpop.permute.xlu0 %2245
        %v2248 = vsel %vm691, %v2246, 1.0
        %2250 = vrot.lane.b32.xlu0 %v2234, 112
        %v2251 = vpop.permute.xlu0 %2250
        %v2253 = vsel %vm691, %v2251, 1.0
        %v2255 = vsel %vm783, %v2248, 0
        %2257 = vmatpush.xpose.msra.mxu0 0.0
        %2258 = vmatpush.xpose.msra.mxu0 0.0
        %2259 = vmatpush.xpose.msra.mxu0 0.0
        %2260 = vmatpush.xpose.msra.mxu0 0.0
        %2261 = vmatpush.xpose.msra.mxu0 0.0
        %2262 = vmatpush.xpose.msra.mxu0 0.0
        %2263 = vmatpush.xpose.msra.mxu0 0.0
        %2264 = vmatpush.xpose.msra.mxu0 0.0
        %2265 = vmatpush.xpose.msra.mxu0 0.0
        %2266 = vmatpush.xpose.msra.mxu0 0.0
        %2267 = vmatpush.xpose.msra.mxu0 0.0
        %2268 = vmatpush.xpose.msra.mxu0 0.0
        %2269 = vmatpush.xpose.msra.mxu0 0.0
        %2270 = vmatpush.xpose.msra.mxu0 0.0
        %2271 = vmatpush.xpose.msra.mxu0 0.0
        %2272 = vmatpush.xpose.msra.mxu0 %v1982
        %2273 = vmatmul.f32.gmra.mxu0 %v2255
        %v2274 = vpop.f32.mrf.mxu0
        %v2275 = vadd.f32 0.0, %v2274
        %2276 = vdwg.mxu0
        %v2277 = vadd.f32 %v2243, %v2275
        %v2279 = vsel %vm783, %v2253, 0
        %2281 = vmatpush.xpose.msra.mxu0 0.0
        %2282 = vmatpush.xpose.msra.mxu0 0.0
        %2283 = vmatpush.xpose.msra.mxu0 0.0
        %2284 = vmatpush.xpose.msra.mxu0 0.0
        %2285 = vmatpush.xpose.msra.mxu0 0.0
        %2286 = vmatpush.xpose.msra.mxu0 0.0
        %2287 = vmatpush.xpose.msra.mxu0 0.0
        %2288 = vmatpush.xpose.msra.mxu0 0.0
        %2289 = vmatpush.xpose.msra.mxu0 0.0
        %2290 = vmatpush.xpose.msra.mxu0 0.0
        %2291 = vmatpush.xpose.msra.mxu0 0.0
        %2292 = vmatpush.xpose.msra.mxu0 0.0
        %2293 = vmatpush.xpose.msra.mxu0 0.0
        %2294 = vmatpush.xpose.msra.mxu0 0.0
        %2295 = vmatpush.xpose.msra.mxu0 0.0
        %2296 = vmatpush.xpose.msra.mxu0 %v2009
        %2297 = vmatmul.f32.gmra.mxu0 %v2279
        %v2298 = vpop.f32.mrf.mxu0
        %v2299 = vadd.f32 0.0, %v2298
        %2300 = vdwg.mxu0
        %v2301 = vmul.f32 %v656, %v2299
        %v2302 = vadd.f32 %v2277, %v2301
        %2303 = vmatpush.xpose.msra.mxu0 0.0
        %2304 = vmatpush.xpose.msra.mxu0 0.0
        %2305 = vmatpush.xpose.msra.mxu0 0.0
        %2306 = vmatpush.xpose.msra.mxu0 0.0
        %2307 = vmatpush.xpose.msra.mxu0 0.0
        %2308 = vmatpush.xpose.msra.mxu0 0.0
        %2309 = vmatpush.xpose.msra.mxu0 0.0
        %2310 = vmatpush.xpose.msra.mxu0 0.0
        %2311 = vmatpush.xpose.msra.mxu0 0.0
        %2312 = vmatpush.xpose.msra.mxu0 0.0
        %2313 = vmatpush.xpose.msra.mxu0 0.0
        %2314 = vmatpush.xpose.msra.mxu0 0.0
        %2315 = vmatpush.xpose.msra.mxu0 0.0
        %2316 = vmatpush.xpose.msra.mxu0 0.0
        %2317 = vmatpush.xpose.msra.mxu0 0.0
        %2318 = vmatpush.xpose.msra.mxu0 %v2034
        %2319 = vmatmul.f32.gmra.mxu0 %v2279
        %v2320 = vpop.f32.mrf.mxu0
        %v2321 = vadd.f32 0.0, %v2320
        %2322 = vdwg.mxu0
        %v2323 = vmul.f32 %v662, %v2321
        %v2324 = vadd.f32 %v2302, %v2323
        %2325 = vmatpush.xpose.msra.mxu0 0.0
        %2326 = vmatpush.xpose.msra.mxu0 0.0
        %2327 = vmatpush.xpose.msra.mxu0 0.0
        %2328 = vmatpush.xpose.msra.mxu0 0.0
        %2329 = vmatpush.xpose.msra.mxu0 0.0
        %2330 = vmatpush.xpose.msra.mxu0 0.0
        %2331 = vmatpush.xpose.msra.mxu0 0.0
        %2332 = vmatpush.xpose.msra.mxu0 0.0
        %2333 = vmatpush.xpose.msra.mxu0 0.0
        %2334 = vmatpush.xpose.msra.mxu0 0.0
        %2335 = vmatpush.xpose.msra.mxu0 0.0
        %2336 = vmatpush.xpose.msra.mxu0 0.0
        %2337 = vmatpush.xpose.msra.mxu0 0.0
        %2338 = vmatpush.xpose.msra.mxu0 0.0
        %2339 = vmatpush.xpose.msra.mxu0 0.0
        %2340 = vmatpush.xpose.msra.mxu0 %v2059
        %2341 = vmatmul.f32.gmra.mxu0 %v2279
        %v2342 = vpop.f32.mrf.mxu0
        %v2343 = vadd.f32 0.0, %v2342
        %2344 = vdwg.mxu0
        %v2345 = vmul.f32 %v669, %v2343
        %v2346 = vadd.f32 %v2324, %v2345
        %v2347 = vmul.f32 %v1139, %v2346
        %v2348 = vadd.f32 %v2219, %v2347
        %v2349 = vmul.f32 %v2348, -0.35355338
        %v2350 = vsel %vm691, %v2349, -inf
        %2351 = vmax.xlane.f32.xlu0 %v2350
        %v2352 = vpop.xlane.xlu0 %2351
        %v2353 = vsub.f32 %v2349, %v2352
        %v2354 = vmul.f32 %v2353, 1.442695
        %v2355 = vpow.pop %v2354
        %v2356 = vsel %vm691, %v2355, 0.0
        %2357 = vadd.xlane.f32.xlu0 %v2356
        %v2358 = vpop.xlane.xlu0 %2357
        %v2359 = vrcp.pop %v2358
        %v2360 = vmul.f32 %v2358, %v2359
        %v2361 = vsub.f32 2.0, %v2360
        %v2362 = vmul.f32 %v2359, %v2361
        %v2363 = vmul.f32 %v2355, %v2362
        %s2364 = scalar_lea.vmem %s585, 16 [#allocation6]
        %2365 = vst.msk [vmem:[%s2364] sm:$0xff] %vm691, %v2363
        %2366 = vrot.lane.b32.xlu0 %v639, 112
        %v2367 = vpop.permute.xlu0 %2366
        %v2370 = vsel %vm691, %v2363, 0
        %2372 = vmatpush.msra.mxu0 0.0
        %2373 = vmatpush.msra.mxu0 0.0
        %2374 = vmatpush.msra.mxu0 0.0
        %2375 = vmatpush.msra.mxu0 0.0
        %2376 = vmatpush.msra.mxu0 0.0
        %2377 = vmatpush.msra.mxu0 0.0
        %2378 = vmatpush.msra.mxu0 0.0
        %2379 = vmatpush.msra.mxu0 0.0
        %2380 = vmatpush.msra.mxu0 0.0
        %2381 = vmatpush.msra.mxu0 0.0
        %2382 = vmatpush.msra.mxu0 0.0
        %2383 = vmatpush.msra.mxu0 0.0
        %2384 = vmatpush.msra.mxu0 0.0
        %2385 = vmatpush.msra.mxu0 0.0
        %2386 = vmatpush.msra.mxu0 0.0
        %2387 = vmatpush.msra.mxu0 %v2367
        %2388 = vmatmul.f32.gmra.mxu0 %v2370
        %v2389 = vpop.f32.mrf.mxu0
        %v2390 = vadd.f32 0.0, %v2389
        %2391 = vdwg.mxu0
        %v2392 = vmul.f32 %v2363, %v2363
        %2393 = vrot.lane.b32.xlu0 %v640, 112
        %v2394 = vpop.permute.xlu0 %2393
        %v2397 = vsel %vm691, %v2392, 0
        %2399 = vmatpush.msra.mxu0 0.0
        %2400 = vmatpush.msra.mxu0 0.0
        %2401 = vmatpush.msra.mxu0 0.0
        %2402 = vmatpush.msra.mxu0 0.0
        %2403 = vmatpush.msra.mxu0 0.0
        %2404 = vmatpush.msra.mxu0 0.0
        %2405 = vmatpush.msra.mxu0 0.0
        %2406 = vmatpush.msra.mxu0 0.0
        %2407 = vmatpush.msra.mxu0 0.0
        %2408 = vmatpush.msra.mxu0 0.0
        %2409 = vmatpush.msra.mxu0 0.0
        %2410 = vmatpush.msra.mxu0 0.0
        %2411 = vmatpush.msra.mxu0 0.0
        %2412 = vmatpush.msra.mxu0 0.0
        %2413 = vmatpush.msra.mxu0 0.0
        %2414 = vmatpush.msra.mxu0 %v2394
        %2415 = vmatmul.f32.gmra.mxu0 %v2397
        %v2416 = vpop.f32.mrf.mxu0
        %v2417 = vadd.f32 0.0, %v2416
        %2418 = vdwg.mxu0
        %v2419 = vperm.slane %v644, 0
        %v2420 = vmul.f32 %v656, %v2419
        %v2421 = vperm.slane %v644, 1
        %v2422 = vmul.f32 %v662, %v2421
        %v2423 = vadd.f32 %v2420, %v2422
        %v2424 = vperm.slane %v644, 2
        %v2425 = vmul.f32 %v669, %v2424
        %v2426 = vadd.f32 %v2423, %v2425
        %v2427 = vperm.slane %v648, 0
        %v2428 = vmul.f32 %v656, %v2427
        %v2429 = vperm.slane %v648, 1
        %v2430 = vmul.f32 %v662, %v2429
        %v2431 = vadd.f32 %v2428, %v2430
        %v2432 = vperm.slane %v648, 2
        %v2433 = vmul.f32 %v669, %v2432
        %v2434 = vadd.f32 %v2431, %v2433
        %v2435 = vperm.slane %v652, 0
        %v2436 = vmul.f32 %v656, %v2435
        %v2437 = vperm.slane %v652, 1
        %v2438 = vmul.f32 %v662, %v2437
        %v2439 = vadd.f32 %v2436, %v2438
        %v2440 = vperm.slane %v652, 2
        %v2441 = vmul.f32 %v669, %v2440
        %v2442 = vadd.f32 %v2439, %v2441
        %2443 = vrot.lane.b32.xlu0 %v690, 104
        %v2444 = vpop.permute.xlu0 %2443
        %v2446 = vsel %vm691, %v2444, 0.0
        %2447 = vadd.xlane.f32.xlu0 %v2446
        %v2448 = vpop.xlane.xlu0 %2447
        %2449 = vrot.lane.b32.xlu0 %v695, 104
        %v2450 = vpop.permute.xlu0 %2449
        %v2452 = vsel %vm691, %v2450, %v2448
        %2454 = vrot.lane.b32.xlu0 %v2442, 24
        %v2455 = vpop.permute.xlu0 %2454
        %v2457 = vadd.f32 %v638, %v2455
        %v2458 = vmax.f32 %v2457, 1e-24
        %v2459 = vrsqrt.pop %v2458
        %v2460 = vmul.f32 %v2459, %v2458
        %v2461 = vmul.f32 %v2460, %v2459
        %v2462 = vmul.f32 0.5, %v2461
        %v2463 = vsub.f32 1.5, %v2462
        %v2464 = vmul.f32 %v2459, %v2463
        %v2465 = vmul.f32 %v2458, %v2464
        %vm2466 = vcmp.eq.f32.partialorder %v2458, inf
        %v2467 = vsel %vm2466, %v2458, %v2465
        %vm2468 = vcmp.eq.f32.partialorder %v2458, 0.0
        %v2469 = vand.u32 %v2458, 2147483648
        %v2470 = vsel %vm2468, %v2469, %v2467
        %2472 = vrot.lane.b32.xlu0 %v2457, 104
        %v2473 = vpop.permute.xlu0 %2472
        %v2475 = vsel %vm691, %v2473, 0.0
        %2476 = vadd.xlane.f32.xlu0 %v2475
        %v2477 = vpop.xlane.xlu0 %2476
        %v2478 = vmul.f32 %v2470, -2.0
        %2480 = vrot.lane.b32.xlu0 %v2478, 104
        %v2481 = vpop.permute.xlu0 %2480
        %v2483 = vsel %vm691, %v2481, %v2477
        %2484 = vrot.lane.b32.xlu0 %v2442, 16
        %v2485 = vpop.permute.xlu0 %2484
        %v2487 = vadd.f32 %v638, %v2485
        %v2488 = vmax.f32 %v2487, 1e-24
        %v2489 = vrsqrt.pop %v2488
        %v2490 = vmul.f32 %v2489, %v2488
        %v2491 = vmul.f32 %v2490, %v2489
        %v2492 = vmul.f32 0.5, %v2491
        %v2493 = vsub.f32 1.5, %v2492
        %v2494 = vmul.f32 %v2489, %v2493
        %v2495 = vmul.f32 %v2488, %v2494
        %vm2496 = vcmp.eq.f32.partialorder %v2488, inf
        %v2497 = vsel %vm2496, %v2488, %v2495
        %vm2498 = vcmp.eq.f32.partialorder %v2488, 0.0
        %v2499 = vand.u32 %v2488, 2147483648
        %v2500 = vsel %vm2498, %v2499, %v2497
        %2502 = vrot.lane.b32.xlu0 %v2487, 104
        %v2503 = vpop.permute.xlu0 %2502
        %v2505 = vsel %vm691, %v2503, 0.0
        %2506 = vadd.xlane.f32.xlu0 %v2505
        %v2507 = vpop.xlane.xlu0 %2506
        %v2508 = vmul.f32 %v2500, -2.0
        %2510 = vrot.lane.b32.xlu0 %v2508, 104
        %v2511 = vpop.permute.xlu0 %2510
        %v2513 = vsel %vm691, %v2511, %v2507
        %2514 = vrot.lane.b32.xlu0 %v2442, 8
        %v2515 = vpop.permute.xlu0 %2514
        %v2517 = vadd.f32 %v638, %v2515
        %v2518 = vmax.f32 %v2517, 1e-24
        %v2519 = vrsqrt.pop %v2518
        %v2520 = vmul.f32 %v2519, %v2518
        %v2521 = vmul.f32 %v2520, %v2519
        %v2522 = vmul.f32 0.5, %v2521
        %v2523 = vsub.f32 1.5, %v2522
        %v2524 = vmul.f32 %v2519, %v2523
        %v2525 = vmul.f32 %v2518, %v2524
        %vm2526 = vcmp.eq.f32.partialorder %v2518, inf
        %v2527 = vsel %vm2526, %v2518, %v2525
        %vm2528 = vcmp.eq.f32.partialorder %v2518, 0.0
        %v2529 = vand.u32 %v2518, 2147483648
        %v2530 = vsel %vm2528, %v2529, %v2527
        %2532 = vrot.lane.b32.xlu0 %v2517, 104
        %v2533 = vpop.permute.xlu0 %2532
        %v2535 = vsel %vm691, %v2533, 0.0
        %2536 = vadd.xlane.f32.xlu0 %v2535
        %v2537 = vpop.xlane.xlu0 %2536
        %v2538 = vmul.f32 %v2530, -2.0
        %2540 = vrot.lane.b32.xlu0 %v2538, 104
        %v2541 = vpop.permute.xlu0 %2540
        %v2543 = vsel %vm691, %v2541, %v2537
        %2545 = vrot.lane.b32.xlu0 %v2426, 24
        %v2546 = vpop.permute.xlu0 %2545
        %v2548 = vadd.f32 %v635, %v2546
        %2550 = vrot.lane.b32.xlu0 %v2434, 24
        %v2551 = vpop.permute.xlu0 %2550
        %v2553 = vadd.f32 %v637, %v2551
        %v2554 = vmax.f32 %v2553, 1e-24
        %v2555 = vrsqrt.pop %v2554
        %v2556 = vmul.f32 %v2555, %v2554
        %v2557 = vmul.f32 %v2556, %v2555
        %v2558 = vmul.f32 0.5, %v2557
        %v2559 = vsub.f32 1.5, %v2558
        %v2560 = vmul.f32 %v2555, %v2559
        %v2561 = vmul.f32 %v2554, %v2560
        %vm2562 = vcmp.eq.f32.partialorder %v2554, inf
        %v2563 = vsel %vm2562, %v2554, %v2561
        %vm2564 = vcmp.eq.f32.partialorder %v2554, 0.0
        %v2565 = vand.u32 %v2554, 2147483648
        %v2566 = vsel %vm2564, %v2565, %v2563
        %v2567 = vmul.f32 %v2548, %v2548
        %v2568 = vadd.f32 %v2567, %v2553
        %2570 = vrot.lane.b32.xlu0 %v2568, 104
        %v2571 = vpop.permute.xlu0 %2570
        %v2573 = vsel %vm691, %v2571, 0.0
        %2574 = vadd.xlane.f32.xlu0 %v2573
        %v2575 = vpop.xlane.xlu0 %2574
        %2577 = vrot.lane.b32.xlu0 %v2548, 104
        %v2578 = vpop.permute.xlu0 %2577
        %v2580 = vsel %vm691, %v2578, 1.0
        %2582 = vrot.lane.b32.xlu0 %v2566, 104
        %v2583 = vpop.permute.xlu0 %2582
        %v2585 = vsel %vm691, %v2583, 1.0
        %v2587 = vsel %vm783, %v2580, 0
        %v2590 = vsel %vm783, %v2452, 0
        %2592 = vmatpush.xpose.msra.mxu0 0.0
        %2593 = vmatpush.xpose.msra.mxu0 0.0
        %2594 = vmatpush.xpose.msra.mxu0 0.0
        %2595 = vmatpush.xpose.msra.mxu0 0.0
        %2596 = vmatpush.xpose.msra.mxu0 0.0
        %2597 = vmatpush.xpose.msra.mxu0 0.0
        %2598 = vmatpush.xpose.msra.mxu0 0.0
        %2599 = vmatpush.xpose.msra.mxu0 0.0
        %2600 = vmatpush.xpose.msra.mxu0 0.0
        %2601 = vmatpush.xpose.msra.mxu0 0.0
        %2602 = vmatpush.xpose.msra.mxu0 0.0
        %2603 = vmatpush.xpose.msra.mxu0 0.0
        %2604 = vmatpush.xpose.msra.mxu0 0.0
        %2605 = vmatpush.xpose.msra.mxu0 0.0
        %2606 = vmatpush.xpose.msra.mxu0 0.0
        %2607 = vmatpush.xpose.msra.mxu0 %v2590
        %2608 = vmatmul.f32.gmra.mxu0 %v2587
        %v2609 = vpop.f32.mrf.mxu0
        %v2610 = vadd.f32 0.0, %v2609
        %2611 = vdwg.mxu0
        %v2612 = vadd.f32 %v2575, %v2610
        %v2614 = vsel %vm783, %v2585, 0
        %v2617 = vsel %vm783, %v2483, 0
        %2619 = vmatpush.xpose.msra.mxu0 0.0
        %2620 = vmatpush.xpose.msra.mxu0 0.0
        %2621 = vmatpush.xpose.msra.mxu0 0.0
        %2622 = vmatpush.xpose.msra.mxu0 0.0
        %2623 = vmatpush.xpose.msra.mxu0 0.0
        %2624 = vmatpush.xpose.msra.mxu0 0.0
        %2625 = vmatpush.xpose.msra.mxu0 0.0
        %2626 = vmatpush.xpose.msra.mxu0 0.0
        %2627 = vmatpush.xpose.msra.mxu0 0.0
        %2628 = vmatpush.xpose.msra.mxu0 0.0
        %2629 = vmatpush.xpose.msra.mxu0 0.0
        %2630 = vmatpush.xpose.msra.mxu0 0.0
        %2631 = vmatpush.xpose.msra.mxu0 0.0
        %2632 = vmatpush.xpose.msra.mxu0 0.0
        %2633 = vmatpush.xpose.msra.mxu0 0.0
        %2634 = vmatpush.xpose.msra.mxu0 %v2617
        %2635 = vmatmul.f32.gmra.mxu0 %v2614
        %v2636 = vpop.f32.mrf.mxu0
        %v2637 = vadd.f32 0.0, %v2636
        %2638 = vdwg.mxu0
        %v2639 = vmul.f32 %v656, %v2637
        %v2640 = vadd.f32 %v2612, %v2639
        %v2642 = vsel %vm783, %v2513, 0
        %2644 = vmatpush.xpose.msra.mxu0 0.0
        %2645 = vmatpush.xpose.msra.mxu0 0.0
        %2646 = vmatpush.xpose.msra.mxu0 0.0
        %2647 = vmatpush.xpose.msra.mxu0 0.0
        %2648 = vmatpush.xpose.msra.mxu0 0.0
        %2649 = vmatpush.xpose.msra.mxu0 0.0
        %2650 = vmatpush.xpose.msra.mxu0 0.0
        %2651 = vmatpush.xpose.msra.mxu0 0.0
        %2652 = vmatpush.xpose.msra.mxu0 0.0
        %2653 = vmatpush.xpose.msra.mxu0 0.0
        %2654 = vmatpush.xpose.msra.mxu0 0.0
        %2655 = vmatpush.xpose.msra.mxu0 0.0
        %2656 = vmatpush.xpose.msra.mxu0 0.0
        %2657 = vmatpush.xpose.msra.mxu0 0.0
        %2658 = vmatpush.xpose.msra.mxu0 0.0
        %2659 = vmatpush.xpose.msra.mxu0 %v2642
        %2660 = vmatmul.f32.gmra.mxu0 %v2614
        %v2661 = vpop.f32.mrf.mxu0
        %v2662 = vadd.f32 0.0, %v2661
        %2663 = vdwg.mxu0
        %v2664 = vmul.f32 %v662, %v2662
        %v2665 = vadd.f32 %v2640, %v2664
        %v2667 = vsel %vm783, %v2543, 0
        %2669 = vmatpush.xpose.msra.mxu0 0.0
        %2670 = vmatpush.xpose.msra.mxu0 0.0
        %2671 = vmatpush.xpose.msra.mxu0 0.0
        %2672 = vmatpush.xpose.msra.mxu0 0.0
        %2673 = vmatpush.xpose.msra.mxu0 0.0
        %2674 = vmatpush.xpose.msra.mxu0 0.0
        %2675 = vmatpush.xpose.msra.mxu0 0.0
        %2676 = vmatpush.xpose.msra.mxu0 0.0
        %2677 = vmatpush.xpose.msra.mxu0 0.0
        %2678 = vmatpush.xpose.msra.mxu0 0.0
        %2679 = vmatpush.xpose.msra.mxu0 0.0
        %2680 = vmatpush.xpose.msra.mxu0 0.0
        %2681 = vmatpush.xpose.msra.mxu0 0.0
        %2682 = vmatpush.xpose.msra.mxu0 0.0
        %2683 = vmatpush.xpose.msra.mxu0 0.0
        %2684 = vmatpush.xpose.msra.mxu0 %v2667
        %2685 = vmatmul.f32.gmra.mxu0 %v2614
        %v2686 = vpop.f32.mrf.mxu0
        %v2687 = vadd.f32 0.0, %v2686
        %2688 = vdwg.mxu0
        %v2689 = vmul.f32 %v669, %v2687
        %v2690 = vadd.f32 %v2665, %v2689
        %v2691 = vmul.f32 %v889, %v2690
        %v2692 = vadd.f32 %v2691, 0.0
        %2693 = vrot.lane.b32.xlu0 %v2426, 16
        %v2694 = vpop.permute.xlu0 %2693
        %v2696 = vadd.f32 %v635, %v2694
        %2697 = vrot.lane.b32.xlu0 %v2434, 16
        %v2698 = vpop.permute.xlu0 %2697
        %v2700 = vadd.f32 %v637, %v2698
        %v2701 = vmax.f32 %v2700, 1e-24
        %v2702 = vrsqrt.pop %v2701
        %v2703 = vmul.f32 %v2702, %v2701
        %v2704 = vmul.f32 %v2703, %v2702
        %v2705 = vmul.f32 0.5, %v2704
        %v2706 = vsub.f32 1.5, %v2705
        %v2707 = vmul.f32 %v2702, %v2706
        %v2708 = vmul.f32 %v2701, %v2707
        %vm2709 = vcmp.eq.f32.partialorder %v2701, inf
        %v2710 = vsel %vm2709, %v2701, %v2708
        %vm2711 = vcmp.eq.f32.partialorder %v2701, 0.0
        %v2712 = vand.u32 %v2701, 2147483648
        %v2713 = vsel %vm2711, %v2712, %v2710
        %v2714 = vmul.f32 %v2696, %v2696
        %v2715 = vadd.f32 %v2714, %v2700
        %2717 = vrot.lane.b32.xlu0 %v2715, 104
        %v2718 = vpop.permute.xlu0 %2717
        %v2720 = vsel %vm691, %v2718, 0.0
        %2721 = vadd.xlane.f32.xlu0 %v2720
        %v2722 = vpop.xlane.xlu0 %2721
        %2724 = vrot.lane.b32.xlu0 %v2696, 104
        %v2725 = vpop.permute.xlu0 %2724
        %v2727 = vsel %vm691, %v2725, 1.0
        %2729 = vrot.lane.b32.xlu0 %v2713, 104
        %v2730 = vpop.permute.xlu0 %2729
        %v2732 = vsel %vm691, %v2730, 1.0
        %v2734 = vsel %vm783, %v2727, 0
        %2736 = vmatpush.xpose.msra.mxu0 0.0
        %2737 = vmatpush.xpose.msra.mxu0 0.0
        %2738 = vmatpush.xpose.msra.mxu0 0.0
        %2739 = vmatpush.xpose.msra.mxu0 0.0
        %2740 = vmatpush.xpose.msra.mxu0 0.0
        %2741 = vmatpush.xpose.msra.mxu0 0.0
        %2742 = vmatpush.xpose.msra.mxu0 0.0
        %2743 = vmatpush.xpose.msra.mxu0 0.0
        %2744 = vmatpush.xpose.msra.mxu0 0.0
        %2745 = vmatpush.xpose.msra.mxu0 0.0
        %2746 = vmatpush.xpose.msra.mxu0 0.0
        %2747 = vmatpush.xpose.msra.mxu0 0.0
        %2748 = vmatpush.xpose.msra.mxu0 0.0
        %2749 = vmatpush.xpose.msra.mxu0 0.0
        %2750 = vmatpush.xpose.msra.mxu0 0.0
        %2751 = vmatpush.xpose.msra.mxu0 %v2590
        %2752 = vmatmul.f32.gmra.mxu0 %v2734
        %v2753 = vpop.f32.mrf.mxu0
        %v2754 = vadd.f32 0.0, %v2753
        %2755 = vdwg.mxu0
        %v2756 = vadd.f32 %v2722, %v2754
        %v2758 = vsel %vm783, %v2732, 0
        %2760 = vmatpush.xpose.msra.mxu0 0.0
        %2761 = vmatpush.xpose.msra.mxu0 0.0
        %2762 = vmatpush.xpose.msra.mxu0 0.0
        %2763 = vmatpush.xpose.msra.mxu0 0.0
        %2764 = vmatpush.xpose.msra.mxu0 0.0
        %2765 = vmatpush.xpose.msra.mxu0 0.0
        %2766 = vmatpush.xpose.msra.mxu0 0.0
        %2767 = vmatpush.xpose.msra.mxu0 0.0
        %2768 = vmatpush.xpose.msra.mxu0 0.0
        %2769 = vmatpush.xpose.msra.mxu0 0.0
        %2770 = vmatpush.xpose.msra.mxu0 0.0
        %2771 = vmatpush.xpose.msra.mxu0 0.0
        %2772 = vmatpush.xpose.msra.mxu0 0.0
        %2773 = vmatpush.xpose.msra.mxu0 0.0
        %2774 = vmatpush.xpose.msra.mxu0 0.0
        %2775 = vmatpush.xpose.msra.mxu0 %v2617
        %2776 = vmatmul.f32.gmra.mxu0 %v2758
        %v2777 = vpop.f32.mrf.mxu0
        %v2778 = vadd.f32 0.0, %v2777
        %2779 = vdwg.mxu0
        %v2780 = vmul.f32 %v656, %v2778
        %v2781 = vadd.f32 %v2756, %v2780
        %2782 = vmatpush.xpose.msra.mxu0 0.0
        %2783 = vmatpush.xpose.msra.mxu0 0.0
        %2784 = vmatpush.xpose.msra.mxu0 0.0
        %2785 = vmatpush.xpose.msra.mxu0 0.0
        %2786 = vmatpush.xpose.msra.mxu0 0.0
        %2787 = vmatpush.xpose.msra.mxu0 0.0
        %2788 = vmatpush.xpose.msra.mxu0 0.0
        %2789 = vmatpush.xpose.msra.mxu0 0.0
        %2790 = vmatpush.xpose.msra.mxu0 0.0
        %2791 = vmatpush.xpose.msra.mxu0 0.0
        %2792 = vmatpush.xpose.msra.mxu0 0.0
        %2793 = vmatpush.xpose.msra.mxu0 0.0
        %2794 = vmatpush.xpose.msra.mxu0 0.0
        %2795 = vmatpush.xpose.msra.mxu0 0.0
        %2796 = vmatpush.xpose.msra.mxu0 0.0
        %2797 = vmatpush.xpose.msra.mxu0 %v2642
        %2798 = vmatmul.f32.gmra.mxu0 %v2758
        %v2799 = vpop.f32.mrf.mxu0
        %v2800 = vadd.f32 0.0, %v2799
        %2801 = vdwg.mxu0
        %v2802 = vmul.f32 %v662, %v2800
        %v2803 = vadd.f32 %v2781, %v2802
        %2804 = vmatpush.xpose.msra.mxu0 0.0
        %2805 = vmatpush.xpose.msra.mxu0 0.0
        %2806 = vmatpush.xpose.msra.mxu0 0.0
        %2807 = vmatpush.xpose.msra.mxu0 0.0
        %2808 = vmatpush.xpose.msra.mxu0 0.0
        %2809 = vmatpush.xpose.msra.mxu0 0.0
        %2810 = vmatpush.xpose.msra.mxu0 0.0
        %2811 = vmatpush.xpose.msra.mxu0 0.0
        %2812 = vmatpush.xpose.msra.mxu0 0.0
        %2813 = vmatpush.xpose.msra.mxu0 0.0
        %2814 = vmatpush.xpose.msra.mxu0 0.0
        %2815 = vmatpush.xpose.msra.mxu0 0.0
        %2816 = vmatpush.xpose.msra.mxu0 0.0
        %2817 = vmatpush.xpose.msra.mxu0 0.0
        %2818 = vmatpush.xpose.msra.mxu0 0.0
        %2819 = vmatpush.xpose.msra.mxu0 %v2667
        %2820 = vmatmul.f32.gmra.mxu0 %v2758
        %v2821 = vpop.f32.mrf.mxu0
        %v2822 = vadd.f32 0.0, %v2821
        %2823 = vdwg.mxu0
        %v2824 = vmul.f32 %v669, %v2822
        %v2825 = vadd.f32 %v2803, %v2824
        %v2826 = vmul.f32 %v1015, %v2825
        %v2827 = vadd.f32 %v2692, %v2826
        %2828 = vrot.lane.b32.xlu0 %v2426, 8
        %v2829 = vpop.permute.xlu0 %2828
        %v2831 = vadd.f32 %v635, %v2829
        %2832 = vrot.lane.b32.xlu0 %v2434, 8
        %v2833 = vpop.permute.xlu0 %2832
        %v2835 = vadd.f32 %v637, %v2833
        %v2836 = vmax.f32 %v2835, 1e-24
        %v2837 = vrsqrt.pop %v2836
        %v2838 = vmul.f32 %v2837, %v2836
        %v2839 = vmul.f32 %v2838, %v2837
        %v2840 = vmul.f32 0.5, %v2839
        %v2841 = vsub.f32 1.5, %v2840
        %v2842 = vmul.f32 %v2837, %v2841
        %v2843 = vmul.f32 %v2836, %v2842
        %vm2844 = vcmp.eq.f32.partialorder %v2836, inf
        %v2845 = vsel %vm2844, %v2836, %v2843
        %vm2846 = vcmp.eq.f32.partialorder %v2836, 0.0
        %v2847 = vand.u32 %v2836, 2147483648
        %v2848 = vsel %vm2846, %v2847, %v2845
        %v2849 = vmul.f32 %v2831, %v2831
        %v2850 = vadd.f32 %v2849, %v2835
        %2852 = vrot.lane.b32.xlu0 %v2850, 104
        %v2853 = vpop.permute.xlu0 %2852
        %v2855 = vsel %vm691, %v2853, 0.0
        %2856 = vadd.xlane.f32.xlu0 %v2855
        %v2857 = vpop.xlane.xlu0 %2856
        %2859 = vrot.lane.b32.xlu0 %v2831, 104
        %v2860 = vpop.permute.xlu0 %2859
        %v2862 = vsel %vm691, %v2860, 1.0
        %2864 = vrot.lane.b32.xlu0 %v2848, 104
        %v2865 = vpop.permute.xlu0 %2864
        %v2867 = vsel %vm691, %v2865, 1.0
        %v2869 = vsel %vm783, %v2862, 0
        %2871 = vmatpush.xpose.msra.mxu0 0.0
        %2872 = vmatpush.xpose.msra.mxu0 0.0
        %2873 = vmatpush.xpose.msra.mxu0 0.0
        %2874 = vmatpush.xpose.msra.mxu0 0.0
        %2875 = vmatpush.xpose.msra.mxu0 0.0
        %2876 = vmatpush.xpose.msra.mxu0 0.0
        %2877 = vmatpush.xpose.msra.mxu0 0.0
        %2878 = vmatpush.xpose.msra.mxu0 0.0
        %2879 = vmatpush.xpose.msra.mxu0 0.0
        %2880 = vmatpush.xpose.msra.mxu0 0.0
        %2881 = vmatpush.xpose.msra.mxu0 0.0
        %2882 = vmatpush.xpose.msra.mxu0 0.0
        %2883 = vmatpush.xpose.msra.mxu0 0.0
        %2884 = vmatpush.xpose.msra.mxu0 0.0
        %2885 = vmatpush.xpose.msra.mxu0 0.0
        %2886 = vmatpush.xpose.msra.mxu0 %v2590
        %2887 = vmatmul.f32.gmra.mxu0 %v2869
        %v2888 = vpop.f32.mrf.mxu0
        %v2889 = vadd.f32 0.0, %v2888
        %2890 = vdwg.mxu0
        %v2891 = vadd.f32 %v2857, %v2889
        %v2893 = vsel %vm783, %v2867, 0
        %2895 = vmatpush.xpose.msra.mxu0 0.0
        %2896 = vmatpush.xpose.msra.mxu0 0.0
        %2897 = vmatpush.xpose.msra.mxu0 0.0
        %2898 = vmatpush.xpose.msra.mxu0 0.0
        %2899 = vmatpush.xpose.msra.mxu0 0.0
        %2900 = vmatpush.xpose.msra.mxu0 0.0
        %2901 = vmatpush.xpose.msra.mxu0 0.0
        %2902 = vmatpush.xpose.msra.mxu0 0.0
        %2903 = vmatpush.xpose.msra.mxu0 0.0
        %2904 = vmatpush.xpose.msra.mxu0 0.0
        %2905 = vmatpush.xpose.msra.mxu0 0.0
        %2906 = vmatpush.xpose.msra.mxu0 0.0
        %2907 = vmatpush.xpose.msra.mxu0 0.0
        %2908 = vmatpush.xpose.msra.mxu0 0.0
        %2909 = vmatpush.xpose.msra.mxu0 0.0
        %2910 = vmatpush.xpose.msra.mxu0 %v2617
        %2911 = vmatmul.f32.gmra.mxu0 %v2893
        %v2912 = vpop.f32.mrf.mxu0
        %v2913 = vadd.f32 0.0, %v2912
        %2914 = vdwg.mxu0
        %v2915 = vmul.f32 %v656, %v2913
        %v2916 = vadd.f32 %v2891, %v2915
        %2917 = vmatpush.xpose.msra.mxu0 0.0
        %2918 = vmatpush.xpose.msra.mxu0 0.0
        %2919 = vmatpush.xpose.msra.mxu0 0.0
        %2920 = vmatpush.xpose.msra.mxu0 0.0
        %2921 = vmatpush.xpose.msra.mxu0 0.0
        %2922 = vmatpush.xpose.msra.mxu0 0.0
        %2923 = vmatpush.xpose.msra.mxu0 0.0
        %2924 = vmatpush.xpose.msra.mxu0 0.0
        %2925 = vmatpush.xpose.msra.mxu0 0.0
        %2926 = vmatpush.xpose.msra.mxu0 0.0
        %2927 = vmatpush.xpose.msra.mxu0 0.0
        %2928 = vmatpush.xpose.msra.mxu0 0.0
        %2929 = vmatpush.xpose.msra.mxu0 0.0
        %2930 = vmatpush.xpose.msra.mxu0 0.0
        %2931 = vmatpush.xpose.msra.mxu0 0.0
        %2932 = vmatpush.xpose.msra.mxu0 %v2642
        %2933 = vmatmul.f32.gmra.mxu0 %v2893
        %v2934 = vpop.f32.mrf.mxu0
        %v2935 = vadd.f32 0.0, %v2934
        %2936 = vdwg.mxu0
        %v2937 = vmul.f32 %v662, %v2935
        %v2938 = vadd.f32 %v2916, %v2937
        %2939 = vmatpush.xpose.msra.mxu0 0.0
        %2940 = vmatpush.xpose.msra.mxu0 0.0
        %2941 = vmatpush.xpose.msra.mxu0 0.0
        %2942 = vmatpush.xpose.msra.mxu0 0.0
        %2943 = vmatpush.xpose.msra.mxu0 0.0
        %2944 = vmatpush.xpose.msra.mxu0 0.0
        %2945 = vmatpush.xpose.msra.mxu0 0.0
        %2946 = vmatpush.xpose.msra.mxu0 0.0
        %2947 = vmatpush.xpose.msra.mxu0 0.0
        %2948 = vmatpush.xpose.msra.mxu0 0.0
        %2949 = vmatpush.xpose.msra.mxu0 0.0
        %2950 = vmatpush.xpose.msra.mxu0 0.0
        %2951 = vmatpush.xpose.msra.mxu0 0.0
        %2952 = vmatpush.xpose.msra.mxu0 0.0
        %2953 = vmatpush.xpose.msra.mxu0 0.0
        %2954 = vmatpush.xpose.msra.mxu0 %v2667
        %2955 = vmatmul.f32.gmra.mxu0 %v2893
        %v2956 = vpop.f32.mrf.mxu0
        %v2957 = vadd.f32 0.0, %v2956
        %2958 = vdwg.mxu0
        %v2959 = vmul.f32 %v669, %v2957
        %v2960 = vadd.f32 %v2938, %v2959
        %v2961 = vmul.f32 %v1139, %v2960
        %v2962 = vadd.f32 %v2827, %v2961
        %v2963 = vmul.f32 %v2962, -0.35355338
        %v2964 = vsel %vm691, %v2963, -inf
        %2965 = vmax.xlane.f32.xlu0 %v2964
        %v2966 = vpop.xlane.xlu0 %2965
        %v2967 = vsub.f32 %v2963, %v2966
        %v2968 = vmul.f32 %v2967, 1.442695
        %v2969 = vpow.pop %v2968
        %v2970 = vsel %vm691, %v2969, 0.0
        %2971 = vadd.xlane.f32.xlu0 %v2970
        %v2972 = vpop.xlane.xlu0 %2971
        %v2973 = vrcp.pop %v2972
        %v2974 = vmul.f32 %v2972, %v2973
        %v2975 = vsub.f32 2.0, %v2974
        %v2976 = vmul.f32 %v2973, %v2975
        %v2977 = vmul.f32 %v2969, %v2976
        %s2978 = scalar_lea.vmem %s585, 24 [#allocation6]
        %2979 = vst.msk [vmem:[%s2978] sm:$0xff] %vm691, %v2977
        %2980 = vrot.lane.b32.xlu0 %v639, 104
        %v2981 = vpop.permute.xlu0 %2980
        %v2984 = vsel %vm691, %v2977, 0
        %2986 = vmatpush.msra.mxu0 0.0
        %2987 = vmatpush.msra.mxu0 0.0
        %2988 = vmatpush.msra.mxu0 0.0
        %2989 = vmatpush.msra.mxu0 0.0
        %2990 = vmatpush.msra.mxu0 0.0
        %2991 = vmatpush.msra.mxu0 0.0
        %2992 = vmatpush.msra.mxu0 0.0
        %2993 = vmatpush.msra.mxu0 0.0
        %2994 = vmatpush.msra.mxu0 0.0
        %2995 = vmatpush.msra.mxu0 0.0
        %2996 = vmatpush.msra.mxu0 0.0
        %2997 = vmatpush.msra.mxu0 0.0
        %2998 = vmatpush.msra.mxu0 0.0
        %2999 = vmatpush.msra.mxu0 0.0
        %3000 = vmatpush.msra.mxu0 0.0
        %3001 = vmatpush.msra.mxu0 %v2981
        %3002 = vmatmul.f32.gmra.mxu0 %v2984
        %v3003 = vpop.f32.mrf.mxu0
        %v3004 = vadd.f32 0.0, %v3003
        %3005 = vdwg.mxu0
        %v3006 = vmul.f32 %v2977, %v2977
        %3007 = vrot.lane.b32.xlu0 %v640, 104
        %v3008 = vpop.permute.xlu0 %3007
        %v3011 = vsel %vm691, %v3006, 0
        %3013 = vmatpush.msra.mxu0 0.0
        %3014 = vmatpush.msra.mxu0 0.0
        %3015 = vmatpush.msra.mxu0 0.0
        %3016 = vmatpush.msra.mxu0 0.0
        %3017 = vmatpush.msra.mxu0 0.0
        %3018 = vmatpush.msra.mxu0 0.0
        %3019 = vmatpush.msra.mxu0 0.0
        %3020 = vmatpush.msra.mxu0 0.0
        %3021 = vmatpush.msra.mxu0 0.0
        %3022 = vmatpush.msra.mxu0 0.0
        %3023 = vmatpush.msra.mxu0 0.0
        %3024 = vmatpush.msra.mxu0 0.0
        %3025 = vmatpush.msra.mxu0 0.0
        %3026 = vmatpush.msra.mxu0 0.0
        %3027 = vmatpush.msra.mxu0 0.0
        %3028 = vmatpush.msra.mxu0 %v3008
        %3029 = vmatmul.f32.gmra.mxu0 %v3011
        %v3030 = vpop.f32.mrf.mxu0
        %v3031 = vadd.f32 0.0, %v3030
        %3032 = vdwg.mxu0
        %3034 = vrot.lane.b32.xlu0 %v1784, 8
        %v3035 = vpop.permute.xlu0 %3034
        %3038 = vrot.lane.b32.xlu0 %v2390, 16
        %v3039 = vpop.permute.xlu0 %3038
        %3042 = vrot.lane.b32.xlu0 %v3004, 24
        %v3043 = vpop.permute.xlu0 %3042
        %v3045 = vsel %vm691, %v1179, %v3035
        %vm3046 = vcmask 130048
        %v3047 = vsel %vm3046, %v3045, %v3039
        %vm3048 = vcmask 195584
        %v3049 = vsel %vm3048, %v3047, %v3043
        %vm3050 = vcmask 261120
        %3051 = vst.msk [vmem:[%s571] sm:$0xff] %vm3050, %v3049
        %3053 = vrot.lane.b32.xlu0 %v1812, 8
        %v3054 = vpop.permute.xlu0 %3053
        %3057 = vrot.lane.b32.xlu0 %v2417, 16
        %v3058 = vpop.permute.xlu0 %3057
        %3061 = vrot.lane.b32.xlu0 %v3031, 24
        %v3062 = vpop.permute.xlu0 %3061
        %v3064 = vsel %vm691, %v1203, %v3054
        %v3065 = vsel %vm3046, %v3064, %v3058
        %v3066 = vsel %vm3048, %v3065, %v3062
        %3067 = vst.msk [vmem:[%s578] sm:$0xff] %vm3050, %v3066
        %s3068 = sand.u32 %s325, 1
        %s3069 = scalar_lea.sflag [#allocation3], %s3068
        %s3070 = sand.u32 %s325, 1
        %s3071 = smul.addr %s3070, 8
        %s3072 = scalar_lea.vmem [#allocation2], %s3071
        %s3073 = sand.u32 %s31, 1
        %s3074 = scalar_lea.sflag [#allocation5], %s3073
        %s3075 = sand.u32 %s351, 1
        %s3076 = smul.addr %s3075, 8
        %s3077 = scalar_lea.vmem [#allocation4], %s3076
        %s3078 = sand.u32 %s31, 1
        %s3079 = scalar_lea.sflag [#allocation5], %s3078
        %s3080 = sand.u32 %s377, 1
        %s3081 = smul.addr %s3080, 32
        %s3082 = scalar_lea.vmem [#allocation6], %s3081
        // Predicated region
        $region65: #{tpu_custom_call.1} parent=63 // pred_check
          %p3083 = pneg %p335
        $region66: #{tpu_custom_call.1} parent=63 // pred_check_branch
          %3085 = sbr.rel (%p3083) target = $region68
        $region67: #{tpu_custom_call.1} parent=63 // pred_region
          %3087 = vsyncadd %s3069, 0
          %s3088 = smul.addr %s31, 8
          %s3089 = scalar_lea.hbm %s11, %s3088
          %s3091 = sshll.u32 %s3072, 4
          %s3092 = int_to_ptr.vmem [resolvable:$true] %s3091
          %s3093 = sshll.u32 %s3089, 4
          %s3094 = int_to_ptr.hbm [resolvable:$true] %s3093
          %3096 = dma.vmem_to_hbm [thread:$0]  %s3092, 128, %s3094, %s3069
        $region68: #{tpu_custom_call.1} parent=63 // pred_fallthru
          _
        // Predicated region
        $region69: #{tpu_custom_call.1} parent=63 // pred_check
          %p3097 = pneg %p361
        $region70: #{tpu_custom_call.1} parent=63 // pred_check_branch
          %3099 = sbr.rel (%p3097) target = $region72
        $region71: #{tpu_custom_call.1} parent=63 // pred_region
          %3101 = vsyncadd %s3074, 0
          %s3102 = smul.addr %s31, 8
          %s3103 = scalar_lea.hbm %s12, %s3102
          %s3105 = sshll.u32 %s3077, 4
          %s3106 = int_to_ptr.vmem [resolvable:$true] %s3105
          %s3107 = sshll.u32 %s3103, 4
          %s3108 = int_to_ptr.hbm [resolvable:$true] %s3107
          %3110 = dma.vmem_to_hbm [thread:$0]  %s3106, 128, %s3108, %s3074
        $region72: #{tpu_custom_call.1} parent=63 // pred_fallthru
          _
        // Predicated region
        $region73: #{tpu_custom_call.1} parent=63 // pred_check
          %p3111 = pneg %p387
        $region74: #{tpu_custom_call.1} parent=63 // pred_check_branch
          %3113 = sbr.rel (%p3111) target = $region76
        $region75: #{tpu_custom_call.1} parent=63 // pred_region
          %3115 = vsyncadd %s3079, 0
          %s3116 = smul.addr %s31, 4
          %s3117 = smul.addr %s3116, 8
          %s3118 = scalar_lea.hbm %s13, %s3117
          %s3119 = sshll.u32 %s3082, 4
          %s3120 = int_to_ptr.vmem [resolvable:$true] %s3119
          %s3121 = sshll.u32 %s3118, 4
          %s3122 = int_to_ptr.hbm [resolvable:$true] %s3121
          %3127 = dma.vmem_to_hbm [thread:$0]  %s3120, 512, %s3122, %s3079, 128, 128, 8
        $region76: #{tpu_custom_call.1} parent=63 // pred_fallthru
          _
      $region64: #{tpu_custom_call.1} parent=5 // pred_fallthru
        _
      %p3128 = scmp.le.s32.totalorder 2, %s26
      // Predicated region
      $region77: #{tpu_custom_call.1} parent=5 // pred_check
        %p3129 = pneg %p3128
      $region78: #{tpu_custom_call.1} parent=5 // pred_check_branch
        %3131 = sbr.rel (%p3129) target = $region80
      $region79: #{tpu_custom_call.1} parent=5 // pred_region
        %s3132 = ssub.s32 %s26, 2
        // Predicated region
        $region81: #{tpu_custom_call.1} parent=79 // pred_check
          %p3133 = pneg %p341
        $region82: #{tpu_custom_call.1} parent=79 // pred_check_branch
          %3135 = sbr.rel (%p3133) target = $region84
        $region83: #{tpu_custom_call.1} parent=79 // pred_region
          %s3136 = sand.u32 %s326, 1
          %s3137 = scalar_lea.sflag [#allocation3], %s3136
          %s3138 = sand.u32 %s326, 1
          %s3139 = smul.addr %s3138, 8
          %s3140 = scalar_lea.vmem [#allocation2], %s3139
          %3142 = dma.done %s3137, 128
        $region84: #{tpu_custom_call.1} parent=79 // pred_fallthru
          _
        // Predicated region
        $region85: #{tpu_custom_call.1} parent=79 // pred_check
          %p3143 = pneg %p367
        $region86: #{tpu_custom_call.1} parent=79 // pred_check_branch
          %3145 = sbr.rel (%p3143) target = $region88
        $region87: #{tpu_custom_call.1} parent=79 // pred_region
          %s3146 = sand.u32 %s32, 1
          %s3147 = scalar_lea.sflag [#allocation5], %s3146
          %s3148 = sand.u32 %s352, 1
          %s3149 = smul.addr %s3148, 8
          %s3150 = scalar_lea.vmem [#allocation4], %s3149
          %3152 = dma.done %s3147, 128
        $region88: #{tpu_custom_call.1} parent=79 // pred_fallthru
          _
        // Predicated region
        $region89: #{tpu_custom_call.1} parent=79 // pred_check
          %p3153 = pneg %p393
        $region90: #{tpu_custom_call.1} parent=79 // pred_check_branch
          %3155 = sbr.rel (%p3153) target = $region92
        $region91: #{tpu_custom_call.1} parent=79 // pred_region
          %s3156 = sand.u32 %s32, 1
          %s3157 = scalar_lea.sflag [#allocation5], %s3156
          %s3158 = sand.u32 %s378, 1
          %s3159 = smul.addr %s3158, 32
          %s3160 = scalar_lea.vmem [#allocation6], %s3159
          %3162 = dma.done %s3157, 512
        $region92: #{tpu_custom_call.1} parent=79 // pred_fallthru
          _
      $region80: #{tpu_custom_call.1} parent=5 // pred_fallthru
        _
    $region6: #{tpu_custom_call.1} parent=1 // loop_footer
      %s30 = sadd.s32 1, %s26
    $region7: #{tpu_custom_call.1} parent=1 // loop_footer_branch
      %25 = sbr.rel target = $region3
    $region8: #{tpu_custom_call.1} parent=1 // loop_exit
      _
    %3163 = vsyncpa [#allocation3], 1
    %s3164 = scalar_lea.sflag [#allocation3], 1
    %3165 = vsyncpa %s3164, 1
    %3166 = vsyncpa [#allocation5], 1
    %s3167 = scalar_lea.sflag [#allocation5], 1
    %3168 = vsyncpa %s3167, 1

</llo_original>
